<compile_context>
chip_gen: v5e
topology: v5e:2x2
jax: 0.10.0
libtpu: 0.0.40
codegen_flags: <defaults>
</compile_context>

<pallas_src>
import functools

import jax
import jax.numpy as jnp
from jax import lax
from jax.experimental import pallas as pl
from jax.experimental.pallas import tpu as pltpu

BN_EPS = 1e-5

# (in_features, out_features) for each of the 6 Linear layers.
LAYER_DIMS = [(8, 128), (128, 1024), (1024, 512), (512, 128), (128, 64), (64, 1)]
OUT_PAD = 128  # final layer output padded to full lane width inside the kernel


@functools.lru_cache(maxsize=1)
def _vmem_limit_bytes():
    """Generation-aware scoped-VMEM limit (leave headroom for in/out copies)."""
    try:
        phys = int(pltpu.get_tpu_info().vmem_capacity_bytes)
    except Exception:
        return 32 << 20  # conservative fallback
    if phys <= (64 << 20):     # v7x-class: 64 MiB physical per TensorCore
        return 44 << 20
    return 100 << 20           # v5e / v6e: 128 MiB physical


def _matmul_bf16(h_f32, w_ref):
    """bf16 x bf16 matmul on the MXU with f32 accumulation."""
    return jnp.dot(h_f32.astype(jnp.bfloat16), w_ref[...],
                   preferred_element_type=jnp.float32)


def _bn_relu(h, gamma_ref, beta_ref):
    """Training-mode BatchNorm1d + ReLU fused to one FMA + max on the big tensor.

    Stats in f32; biased variance via E[h^2] - E[h]^2 (never materializes the
    centered tensor), clamped at 0 before rsqrt.
    """
    inv_n = jnp.float32(1.0 / h.shape[0])
    mean = jnp.sum(h, axis=0, keepdims=True) * inv_n             # (1, F)
    mean_sq = jnp.sum(h * h, axis=0, keepdims=True) * inv_n      # (1, F)
    var = jnp.maximum(mean_sq - mean * mean, 0.0)                # biased, clamped
    scale = gamma_ref[...] * lax.rsqrt(var + BN_EPS)             # (1, F)
    shift = beta_ref[...] - mean * scale                         # (1, F)
    return jnp.maximum(h * scale + shift, 0.0)


def mlp_kernel(
    x_ref,
    w1_ref, g1_ref, be1_ref,
    w2_ref, g2_ref, be2_ref,
    w3_ref, g3_ref, be3_ref,
    w4_ref, g4_ref, be4_ref,
    w5_ref, g5_ref, be5_ref,
    w6_ref, b6_ref,
    o_ref,
):
    # Layer 1: f32 matmul (K=8 — negligible FLOPs, free accuracy on raw inputs).
    h = jnp.dot(x_ref[...], w1_ref[...], preferred_element_type=jnp.float32)
    h = _bn_relu(h, g1_ref, be1_ref)
    # Layers 2-5: bf16 Linear (bias cancelled exactly by train-mode BN) + BN + ReLU.
    h = _bn_relu(_matmul_bf16(h, w2_ref), g2_ref, be2_ref)
    h = _bn_relu(_matmul_bf16(h, w3_ref), g3_ref, be3_ref)
    h = _bn_relu(_matmul_bf16(h, w4_ref), g4_ref, be4_ref)
    h = _bn_relu(_matmul_bf16(h, w5_ref), g5_ref, be5_ref)
    # Final Linear, padded to 128 output lanes (lane-dense unmasked store).
    o_ref[...] = (_matmul_bf16(h, w6_ref) + b6_ref[...]).astype(o_ref.dtype)


def init_params(key):
    """Deterministic, PyTorch-like init (f32 reference parameters).

    Linear: weight/bias ~ U(-1/sqrt(fan_in), 1/sqrt(fan_in)).
    BatchNorm1d: gamma = 1, beta = 0.  Weights stored (in, out); vectors (1, out).
    """
    params = []
    for li, (fan_in, fan_out) in enumerate(LAYER_DIMS):
        kw, kb = jax.random.split(jax.random.fold_in(key, li))
        bound = 1.0 / jnp.sqrt(jnp.float32(fan_in))
        layer = {
            "w": jax.random.uniform(kw, (fan_in, fan_out), jnp.float32, -bound, bound),
            "b": jax.random.uniform(kb, (1, fan_out), jnp.float32, -bound, bound),
        }
        if li < len(LAYER_DIMS) - 1:  # every layer except the last has a BN
            layer["gamma"] = jnp.ones((1, fan_out), jnp.float32)
            layer["beta"] = jnp.zeros((1, fan_out), jnp.float32)
        params.append(layer)
    return params


def prepare_params(params):
    """One-time conversion to kernel-ready dtypes/layouts (hoisted out of forward).

    Layer 1 weight stays f32 (f32 matmul in-kernel); layers 2-5 weights become
    bf16; the final (64,1) layer is zero-padded to (64,128) and cast to bf16.
    Linear biases of layers 1-5 are intentionally not carried (train-mode BN
    makes them an exact no-op).
    """
    kparams = []
    n = len(params)
    for li, p in enumerate(params):
        if li == 0:
            kparams.append({"w": p["w"], "gamma": p["gamma"], "beta": p["beta"]})
        elif li < n - 1:
            kparams.append({"w": p["w"].astype(jnp.bfloat16),
                            "gamma": p["gamma"], "beta": p["beta"]})
        else:
            fan_in, fan_out = p["w"].shape
            w_pad = jnp.zeros((fan_in, OUT_PAD), jnp.float32).at[:, :fan_out].set(p["w"])
            b_pad = jnp.zeros((1, OUT_PAD), jnp.float32).at[:, :fan_out].set(p["b"])
            kparams.append({"w": w_pad.astype(jnp.bfloat16), "b": b_pad})
    return jax.tree_util.tree_map(jnp.asarray, kparams)


@jax.jit
def model_forward(x, kparams):
    batch = x.shape[0]

    args = [x]
    n = len(kparams)
    for li, p in enumerate(kparams):
        if li < n - 1:
            args.extend([p["w"], p["gamma"], p["beta"]])
        else:
            args.extend([p["w"], p["b"]])

    vmem_spec = pl.BlockSpec(memory_space=pltpu.MemorySpace.VMEM)
    out_pad = pl.pallas_call(
        mlp_kernel,
        out_shape=jax.ShapeDtypeStruct((batch, OUT_PAD), jnp.bfloat16),
        in_specs=[vmem_spec] * len(args),
        out_specs=vmem_spec,
        compiler_params=pltpu.CompilerParams(vmem_limit_bytes=_vmem_limit_bytes()),
    )(*args)
    # Slice off the padding lanes inside the same jit (fuses, no extra dispatch).
    return out_pad[:, :1].astype(jnp.float32)


def model_forward_ref(x, params):
    """Pure-JAX f32 reference, faithful to the PyTorch module (biases included)."""
    h = x
    for li, p in enumerate(params):
        h = h @ p["w"] + p["b"]
        if li < len(params) - 1:
            mean = jnp.mean(h, axis=0, keepdims=True)
            var = jnp.mean((h - mean) ** 2, axis=0, keepdims=True)
            h = (h - mean) * lax.rsqrt(var + BN_EPS) * p["gamma"] + p["beta"]
            h = jnp.maximum(h, 0.0)
    return h


if __name__ == "__main__":
    key = jax.random.PRNGKey(0)
    k_x, k_p = jax.random.split(key)

    params = init_params(k_p)
    kparams = prepare_params(params)

    # Small primary check plus a moderately larger batch (BN stats quality check).
    for batch in (8, 256):
        x = jax.random.normal(jax.random.fold_in(k_x, batch), (batch, 8), jnp.float32)
        out = jax.block_until_ready(model_forward(x, kparams))
        ref = jax.block_until_ready(model_forward_ref(x, params))
        assert out.shape == (batch, 1)
        # bf16 matmuls / bf16 output store -> loosened tolerance vs f32 reference.
        assert jnp.allclose(out, ref, atol=5e-2, rtol=5e-2), (
            f"mismatch vs JAX reference at batch={batch}")

    print("KERNEL_OK")
</pallas_src>

<mosaic_0001>
module attributes {stable_mosaic.version = 11 : i64} {
  func.func @mlp_kernel(%arg0: memref<8x8xf32, #tpu.memory_space<vmem>>, %arg1: memref<8x128xf32, #tpu.memory_space<vmem>>, %arg2: memref<1x128xf32, #tpu.memory_space<vmem>>, %arg3: memref<1x128xf32, #tpu.memory_space<vmem>>, %arg4: memref<128x1024xbf16, #tpu.memory_space<vmem>>, %arg5: memref<1x1024xf32, #tpu.memory_space<vmem>>, %arg6: memref<1x1024xf32, #tpu.memory_space<vmem>>, %arg7: memref<1024x512xbf16, #tpu.memory_space<vmem>>, %arg8: memref<1x512xf32, #tpu.memory_space<vmem>>, %arg9: memref<1x512xf32, #tpu.memory_space<vmem>>, %arg10: memref<512x128xbf16, #tpu.memory_space<vmem>>, %arg11: memref<1x128xf32, #tpu.memory_space<vmem>>, %arg12: memref<1x128xf32, #tpu.memory_space<vmem>>, %arg13: memref<128x64xbf16, #tpu.memory_space<vmem>>, %arg14: memref<1x64xf32, #tpu.memory_space<vmem>>, %arg15: memref<1x64xf32, #tpu.memory_space<vmem>>, %arg16: memref<64x128xbf16, #tpu.memory_space<vmem>>, %arg17: memref<1x128xf32, #tpu.memory_space<vmem>>, %arg18: memref<8x128xbf16, #tpu.memory_space<vmem>>) attributes {dimension_semantics = [], scalar_prefetch = 0 : i64, scratch_operands = 0 : i64, tpu.core_type = #tpu.core_type<tc>} {
    %c0 = arith.constant 0 : index
    %c0_0 = arith.constant 0 : index
    %0 = vector.load %arg0[%c0, %c0_0] : memref<8x8xf32, #tpu.memory_space<vmem>>, vector<8x8xf32>
    %c0_1 = arith.constant 0 : index
    %c0_2 = arith.constant 0 : index
    %1 = vector.load %arg1[%c0_1, %c0_2] : memref<8x128xf32, #tpu.memory_space<vmem>>, vector<8x128xf32>
    %cst = arith.constant dense<0.000000e+00> : vector<8x128xf32>
    %2 = tpu.matmul %0, %1, %cst {dimension_numbers = #tpu.dot_dimension_numbers<[1], [0], [0], [1], [0, 0, 1, 1], [], []>} : vector<8x8xf32>, vector<8x128xf32>, vector<8x128xf32> -> vector<8x128xf32>
    %cst_3 = arith.constant dense<0.000000e+00> : vector<128xf32>
    %3 = vector.multi_reduction <add>, %2, %cst_3 [0] : vector<8x128xf32> to vector<128xf32>
    %4 = vector.shape_cast %3 : vector<128xf32> to vector<1x128xf32>
    %cst_4 = arith.constant 1.250000e-01 : f32
    %5 = vector.broadcast %cst_4 : f32 to vector<1x128xf32>
    %6 = arith.mulf %4, %5 : vector<1x128xf32>
    %7 = arith.mulf %2, %2 : vector<8x128xf32>
    %cst_5 = arith.constant dense<0.000000e+00> : vector<128xf32>
    %8 = vector.multi_reduction <add>, %7, %cst_5 [0] : vector<8x128xf32> to vector<128xf32>
    %9 = vector.shape_cast %8 : vector<128xf32> to vector<1x128xf32>
    %cst_6 = arith.constant 1.250000e-01 : f32
    %10 = vector.broadcast %cst_6 : f32 to vector<1x128xf32>
    %11 = arith.mulf %9, %10 : vector<1x128xf32>
    %12 = arith.mulf %6, %6 : vector<1x128xf32>
    %13 = arith.subf %11, %12 : vector<1x128xf32>
    %cst_7 = arith.constant 0.000000e+00 : f32
    %14 = vector.broadcast %cst_7 : f32 to vector<1x128xf32>
    %15 = arith.maximumf %13, %14 : vector<1x128xf32>
    %c0_8 = arith.constant 0 : index
    %c0_9 = arith.constant 0 : index
    %16 = vector.load %arg2[%c0_8, %c0_9] : memref<1x128xf32, #tpu.memory_space<vmem>>, vector<1x128xf32>
    %cst_10 = arith.constant 9.99999974E-6 : f32
    %17 = vector.broadcast %cst_10 : f32 to vector<1x128xf32>
    %18 = arith.addf %15, %17 : vector<1x128xf32>
    %19 = math.rsqrt %18 : vector<1x128xf32>
    %20 = arith.mulf %16, %19 : vector<1x128xf32>
    %c0_11 = arith.constant 0 : index
    %c0_12 = arith.constant 0 : index
    %21 = vector.load %arg3[%c0_11, %c0_12] : memref<1x128xf32, #tpu.memory_space<vmem>>, vector<1x128xf32>
    %22 = arith.mulf %6, %20 : vector<1x128xf32>
    %23 = arith.subf %21, %22 : vector<1x128xf32>
    %24 = vector.broadcast %20 : vector<1x128xf32> to vector<8x128xf32>
    %25 = arith.mulf %2, %24 : vector<8x128xf32>
    %26 = vector.broadcast %23 : vector<1x128xf32> to vector<8x128xf32>
    %27 = arith.addf %25, %26 : vector<8x128xf32>
    %cst_13 = arith.constant 0.000000e+00 : f32
    %28 = vector.broadcast %cst_13 : f32 to vector<8x128xf32>
    %29 = arith.maximumf %27, %28 : vector<8x128xf32>
    %30 = arith.truncf %29 : vector<8x128xf32> to vector<8x128xbf16>
    %c0_14 = arith.constant 0 : index
    %c0_15 = arith.constant 0 : index
    %31 = vector.load %arg4[%c0_14, %c0_15] : memref<128x1024xbf16, #tpu.memory_space<vmem>>, vector<128x1024xbf16>
    %cst_16 = arith.constant dense<0.000000e+00> : vector<8x1024xf32>
    %32 = tpu.matmul %30, %31, %cst_16 {dimension_numbers = #tpu.dot_dimension_numbers<[1], [0], [0], [1], [0, 0, 1, 1], [], []>} : vector<8x128xbf16>, vector<128x1024xbf16>, vector<8x1024xf32> -> vector<8x1024xf32>
    %cst_17 = arith.constant dense<0.000000e+00> : vector<1024xf32>
    %33 = vector.multi_reduction <add>, %32, %cst_17 [0] : vector<8x1024xf32> to vector<1024xf32>
    %34 = vector.shape_cast %33 : vector<1024xf32> to vector<1x1024xf32>
    %cst_18 = arith.constant 1.250000e-01 : f32
    %35 = vector.broadcast %cst_18 : f32 to vector<1x1024xf32>
    %36 = arith.mulf %34, %35 : vector<1x1024xf32>
    %37 = arith.mulf %32, %32 : vector<8x1024xf32>
    %cst_19 = arith.constant dense<0.000000e+00> : vector<1024xf32>
    %38 = vector.multi_reduction <add>, %37, %cst_19 [0] : vector<8x1024xf32> to vector<1024xf32>
    %39 = vector.shape_cast %38 : vector<1024xf32> to vector<1x1024xf32>
    %cst_20 = arith.constant 1.250000e-01 : f32
    %40 = vector.broadcast %cst_20 : f32 to vector<1x1024xf32>
    %41 = arith.mulf %39, %40 : vector<1x1024xf32>
    %42 = arith.mulf %36, %36 : vector<1x1024xf32>
    %43 = arith.subf %41, %42 : vector<1x1024xf32>
    %cst_21 = arith.constant 0.000000e+00 : f32
    %44 = vector.broadcast %cst_21 : f32 to vector<1x1024xf32>
    %45 = arith.maximumf %43, %44 : vector<1x1024xf32>
    %c0_22 = arith.constant 0 : index
    %c0_23 = arith.constant 0 : index
    %46 = vector.load %arg5[%c0_22, %c0_23] : memref<1x1024xf32, #tpu.memory_space<vmem>>, vector<1x1024xf32>
    %cst_24 = arith.constant 9.99999974E-6 : f32
    %47 = vector.broadcast %cst_24 : f32 to vector<1x1024xf32>
    %48 = arith.addf %45, %47 : vector<1x1024xf32>
    %49 = math.rsqrt %48 : vector<1x1024xf32>
    %50 = arith.mulf %46, %49 : vector<1x1024xf32>
    %c0_25 = arith.constant 0 : index
    %c0_26 = arith.constant 0 : index
    %51 = vector.load %arg6[%c0_25, %c0_26] : memref<1x1024xf32, #tpu.memory_space<vmem>>, vector<1x1024xf32>
    %52 = arith.mulf %36, %50 : vector<1x1024xf32>
    %53 = arith.subf %51, %52 : vector<1x1024xf32>
    %54 = vector.broadcast %50 : vector<1x1024xf32> to vector<8x1024xf32>
    %55 = arith.mulf %32, %54 : vector<8x1024xf32>
    %56 = vector.broadcast %53 : vector<1x1024xf32> to vector<8x1024xf32>
    %57 = arith.addf %55, %56 : vector<8x1024xf32>
    %cst_27 = arith.constant 0.000000e+00 : f32
    %58 = vector.broadcast %cst_27 : f32 to vector<8x1024xf32>
    %59 = arith.maximumf %57, %58 : vector<8x1024xf32>
    %60 = arith.truncf %59 : vector<8x1024xf32> to vector<8x1024xbf16>
    %c0_28 = arith.constant 0 : index
    %c0_29 = arith.constant 0 : index
    %61 = vector.load %arg7[%c0_28, %c0_29] : memref<1024x512xbf16, #tpu.memory_space<vmem>>, vector<1024x512xbf16>
    %cst_30 = arith.constant dense<0.000000e+00> : vector<8x512xf32>
    %62 = tpu.matmul %60, %61, %cst_30 {dimension_numbers = #tpu.dot_dimension_numbers<[1], [0], [0], [1], [0, 0, 1, 1], [], []>} : vector<8x1024xbf16>, vector<1024x512xbf16>, vector<8x512xf32> -> vector<8x512xf32>
    %cst_31 = arith.constant dense<0.000000e+00> : vector<512xf32>
    %63 = vector.multi_reduction <add>, %62, %cst_31 [0] : vector<8x512xf32> to vector<512xf32>
    %64 = vector.shape_cast %63 : vector<512xf32> to vector<1x512xf32>
    %cst_32 = arith.constant 1.250000e-01 : f32
    %65 = vector.broadcast %cst_32 : f32 to vector<1x512xf32>
    %66 = arith.mulf %64, %65 : vector<1x512xf32>
    %67 = arith.mulf %62, %62 : vector<8x512xf32>
    %cst_33 = arith.constant dense<0.000000e+00> : vector<512xf32>
    %68 = vector.multi_reduction <add>, %67, %cst_33 [0] : vector<8x512xf32> to vector<512xf32>
    %69 = vector.shape_cast %68 : vector<512xf32> to vector<1x512xf32>
    %cst_34 = arith.constant 1.250000e-01 : f32
    %70 = vector.broadcast %cst_34 : f32 to vector<1x512xf32>
    %71 = arith.mulf %69, %70 : vector<1x512xf32>
    %72 = arith.mulf %66, %66 : vector<1x512xf32>
    %73 = arith.subf %71, %72 : vector<1x512xf32>
    %cst_35 = arith.constant 0.000000e+00 : f32
    %74 = vector.broadcast %cst_35 : f32 to vector<1x512xf32>
    %75 = arith.maximumf %73, %74 : vector<1x512xf32>
    %c0_36 = arith.constant 0 : index
    %c0_37 = arith.constant 0 : index
    %76 = vector.load %arg8[%c0_36, %c0_37] : memref<1x512xf32, #tpu.memory_space<vmem>>, vector<1x512xf32>
    %cst_38 = arith.constant 9.99999974E-6 : f32
    %77 = vector.broadcast %cst_38 : f32 to vector<1x512xf32>
    %78 = arith.addf %75, %77 : vector<1x512xf32>
    %79 = math.rsqrt %78 : vector<1x512xf32>
    %80 = arith.mulf %76, %79 : vector<1x512xf32>
    %c0_39 = arith.constant 0 : index
    %c0_40 = arith.constant 0 : index
    %81 = vector.load %arg9[%c0_39, %c0_40] : memref<1x512xf32, #tpu.memory_space<vmem>>, vector<1x512xf32>
    %82 = arith.mulf %66, %80 : vector<1x512xf32>
    %83 = arith.subf %81, %82 : vector<1x512xf32>
    %84 = vector.broadcast %80 : vector<1x512xf32> to vector<8x512xf32>
    %85 = arith.mulf %62, %84 : vector<8x512xf32>
    %86 = vector.broadcast %83 : vector<1x512xf32> to vector<8x512xf32>
    %87 = arith.addf %85, %86 : vector<8x512xf32>
    %cst_41 = arith.constant 0.000000e+00 : f32
    %88 = vector.broadcast %cst_41 : f32 to vector<8x512xf32>
    %89 = arith.maximumf %87, %88 : vector<8x512xf32>
    %90 = arith.truncf %89 : vector<8x512xf32> to vector<8x512xbf16>
    %c0_42 = arith.constant 0 : index
    %c0_43 = arith.constant 0 : index
    %91 = vector.load %arg10[%c0_42, %c0_43] : memref<512x128xbf16, #tpu.memory_space<vmem>>, vector<512x128xbf16>
    %cst_44 = arith.constant dense<0.000000e+00> : vector<8x128xf32>
    %92 = tpu.matmul %90, %91, %cst_44 {dimension_numbers = #tpu.dot_dimension_numbers<[1], [0], [0], [1], [0, 0, 1, 1], [], []>} : vector<8x512xbf16>, vector<512x128xbf16>, vector<8x128xf32> -> vector<8x128xf32>
    %cst_45 = arith.constant dense<0.000000e+00> : vector<128xf32>
    %93 = vector.multi_reduction <add>, %92, %cst_45 [0] : vector<8x128xf32> to vector<128xf32>
    %94 = vector.shape_cast %93 : vector<128xf32> to vector<1x128xf32>
    %cst_46 = arith.constant 1.250000e-01 : f32
    %95 = vector.broadcast %cst_46 : f32 to vector<1x128xf32>
    %96 = arith.mulf %94, %95 : vector<1x128xf32>
    %97 = arith.mulf %92, %92 : vector<8x128xf32>
    %cst_47 = arith.constant dense<0.000000e+00> : vector<128xf32>
    %98 = vector.multi_reduction <add>, %97, %cst_47 [0] : vector<8x128xf32> to vector<128xf32>
    %99 = vector.shape_cast %98 : vector<128xf32> to vector<1x128xf32>
    %cst_48 = arith.constant 1.250000e-01 : f32
    %100 = vector.broadcast %cst_48 : f32 to vector<1x128xf32>
    %101 = arith.mulf %99, %100 : vector<1x128xf32>
    %102 = arith.mulf %96, %96 : vector<1x128xf32>
    %103 = arith.subf %101, %102 : vector<1x128xf32>
    %cst_49 = arith.constant 0.000000e+00 : f32
    %104 = vector.broadcast %cst_49 : f32 to vector<1x128xf32>
    %105 = arith.maximumf %103, %104 : vector<1x128xf32>
    %c0_50 = arith.constant 0 : index
    %c0_51 = arith.constant 0 : index
    %106 = vector.load %arg11[%c0_50, %c0_51] : memref<1x128xf32, #tpu.memory_space<vmem>>, vector<1x128xf32>
    %cst_52 = arith.constant 9.99999974E-6 : f32
    %107 = vector.broadcast %cst_52 : f32 to vector<1x128xf32>
    %108 = arith.addf %105, %107 : vector<1x128xf32>
    %109 = math.rsqrt %108 : vector<1x128xf32>
    %110 = arith.mulf %106, %109 : vector<1x128xf32>
    %c0_53 = arith.constant 0 : index
    %c0_54 = arith.constant 0 : index
    %111 = vector.load %arg12[%c0_53, %c0_54] : memref<1x128xf32, #tpu.memory_space<vmem>>, vector<1x128xf32>
    %112 = arith.mulf %96, %110 : vector<1x128xf32>
    %113 = arith.subf %111, %112 : vector<1x128xf32>
    %114 = vector.broadcast %110 : vector<1x128xf32> to vector<8x128xf32>
    %115 = arith.mulf %92, %114 : vector<8x128xf32>
    %116 = vector.broadcast %113 : vector<1x128xf32> to vector<8x128xf32>
    %117 = arith.addf %115, %116 : vector<8x128xf32>
    %cst_55 = arith.constant 0.000000e+00 : f32
    %118 = vector.broadcast %cst_55 : f32 to vector<8x128xf32>
    %119 = arith.maximumf %117, %118 : vector<8x128xf32>
    %120 = arith.truncf %119 : vector<8x128xf32> to vector<8x128xbf16>
    %c0_56 = arith.constant 0 : index
    %c0_57 = arith.constant 0 : index
    %121 = vector.load %arg13[%c0_56, %c0_57] : memref<128x64xbf16, #tpu.memory_space<vmem>>, vector<128x64xbf16>
    %cst_58 = arith.constant dense<0.000000e+00> : vector<8x64xf32>
    %122 = tpu.matmul %120, %121, %cst_58 {dimension_numbers = #tpu.dot_dimension_numbers<[1], [0], [0], [1], [0, 0, 1, 1], [], []>} : vector<8x128xbf16>, vector<128x64xbf16>, vector<8x64xf32> -> vector<8x64xf32>
    %cst_59 = arith.constant dense<0.000000e+00> : vector<64xf32>
    %123 = vector.multi_reduction <add>, %122, %cst_59 [0] : vector<8x64xf32> to vector<64xf32>
    %124 = vector.shape_cast %123 : vector<64xf32> to vector<1x64xf32>
    %cst_60 = arith.constant 1.250000e-01 : f32
    %125 = vector.broadcast %cst_60 : f32 to vector<1x64xf32>
    %126 = arith.mulf %124, %125 : vector<1x64xf32>
    %127 = arith.mulf %122, %122 : vector<8x64xf32>
    %cst_61 = arith.constant dense<0.000000e+00> : vector<64xf32>
    %128 = vector.multi_reduction <add>, %127, %cst_61 [0] : vector<8x64xf32> to vector<64xf32>
    %129 = vector.shape_cast %128 : vector<64xf32> to vector<1x64xf32>
    %cst_62 = arith.constant 1.250000e-01 : f32
    %130 = vector.broadcast %cst_62 : f32 to vector<1x64xf32>
    %131 = arith.mulf %129, %130 : vector<1x64xf32>
    %132 = arith.mulf %126, %126 : vector<1x64xf32>
    %133 = arith.subf %131, %132 : vector<1x64xf32>
    %cst_63 = arith.constant 0.000000e+00 : f32
    %134 = vector.broadcast %cst_63 : f32 to vector<1x64xf32>
    %135 = arith.maximumf %133, %134 : vector<1x64xf32>
    %c0_64 = arith.constant 0 : index
    %c0_65 = arith.constant 0 : index
    %136 = vector.load %arg14[%c0_64, %c0_65] : memref<1x64xf32, #tpu.memory_space<vmem>>, vector<1x64xf32>
    %cst_66 = arith.constant 9.99999974E-6 : f32
    %137 = vector.broadcast %cst_66 : f32 to vector<1x64xf32>
    %138 = arith.addf %135, %137 : vector<1x64xf32>
    %139 = math.rsqrt %138 : vector<1x64xf32>
    %140 = arith.mulf %136, %139 : vector<1x64xf32>
    %c0_67 = arith.constant 0 : index
    %c0_68 = arith.constant 0 : index
    %141 = vector.load %arg15[%c0_67, %c0_68] : memref<1x64xf32, #tpu.memory_space<vmem>>, vector<1x64xf32>
    %142 = arith.mulf %126, %140 : vector<1x64xf32>
    %143 = arith.subf %141, %142 : vector<1x64xf32>
    %144 = vector.broadcast %140 : vector<1x64xf32> to vector<8x64xf32>
    %145 = arith.mulf %122, %144 : vector<8x64xf32>
    %146 = vector.broadcast %143 : vector<1x64xf32> to vector<8x64xf32>
    %147 = arith.addf %145, %146 : vector<8x64xf32>
    %cst_69 = arith.constant 0.000000e+00 : f32
    %148 = vector.broadcast %cst_69 : f32 to vector<8x64xf32>
    %149 = arith.maximumf %147, %148 : vector<8x64xf32>
    %150 = arith.truncf %149 : vector<8x64xf32> to vector<8x64xbf16>
    %c0_70 = arith.constant 0 : index
    %c0_71 = arith.constant 0 : index
    %151 = vector.load %arg16[%c0_70, %c0_71] : memref<64x128xbf16, #tpu.memory_space<vmem>>, vector<64x128xbf16>
    %cst_72 = arith.constant dense<0.000000e+00> : vector<8x128xf32>
    %152 = tpu.matmul %150, %151, %cst_72 {dimension_numbers = #tpu.dot_dimension_numbers<[1], [0], [0], [1], [0, 0, 1, 1], [], []>} : vector<8x64xbf16>, vector<64x128xbf16>, vector<8x128xf32> -> vector<8x128xf32>
    %c0_73 = arith.constant 0 : index
    %c0_74 = arith.constant 0 : index
    %153 = vector.load %arg17[%c0_73, %c0_74] : memref<1x128xf32, #tpu.memory_space<vmem>>, vector<1x128xf32>
    %154 = vector.broadcast %153 : vector<1x128xf32> to vector<8x128xf32>
    %155 = arith.addf %152, %154 : vector<8x128xf32>
    %156 = arith.truncf %155 : vector<8x128xf32> to vector<8x128xbf16>
    %c0_75 = arith.constant 0 : index
    %c0_76 = arith.constant 0 : index
    %157 = vector.load %arg18[%c0_75, %c0_76] : memref<8x128xbf16, #tpu.memory_space<vmem>>, vector<8x128xbf16>
    tpu.vector_store %arg18[%c0_75, %c0_76], %156 {strides = array<i32>} : memref<8x128xbf16, #tpu.memory_space<vmem>>, vector<8x128xbf16>,
    return
  }
}

</mosaic_0001>

<llo_original>
// kernel: model_forward.1
$region0: #{model_forward.1}
  #allocation0 [shape = 'u32[]', space=smem, size = 0x4, offset = 0x4, fixed_abs, tag = 'smem constant byte address 0x4 - core index']
  #allocation1 [shape = 'u32[72,128]{1,0:T(1,128)}', space=vmem, size = 0x9000, scoped, tag = 'internal scratch']
  %s0 = inlined_call_operand.vmem [shape: f32[8,8], index: 0, kind: input, shape index: {}]
  %s1 = inlined_call_operand.vmem [shape: f32[8,128], index: 1, kind: input, shape index: {}]
  %s2 = inlined_call_operand.vmem [shape: f32[1,128], index: 2, kind: input, shape index: {}]
  %s3 = inlined_call_operand.vmem [shape: f32[1,128], index: 3, kind: input, shape index: {}]
  %s4 = inlined_call_operand.hbm [shape: bf16[128,1024], index: 4, kind: input, shape index: {}]
  %s5 = inlined_call_operand.vmem [shape: f32[1,1024], index: 5, kind: input, shape index: {}]
  %s6 = inlined_call_operand.vmem [shape: f32[1,1024], index: 6, kind: input, shape index: {}]
  %s7 = inlined_call_operand.hbm [shape: bf16[1024,512], index: 7, kind: input, shape index: {}]
  %s8 = inlined_call_operand.vmem [shape: f32[1,512], index: 8, kind: input, shape index: {}]
  %s9 = inlined_call_operand.vmem [shape: f32[1,512], index: 9, kind: input, shape index: {}]
  %s10 = inlined_call_operand.hbm [shape: bf16[512,128], index: 10, kind: input, shape index: {}]
  %s11 = inlined_call_operand.vmem [shape: f32[1,128], index: 11, kind: input, shape index: {}]
  %s12 = inlined_call_operand.vmem [shape: f32[1,128], index: 12, kind: input, shape index: {}]
  %s13 = inlined_call_operand.vmem [shape: bf16[128,64], index: 13, kind: input, shape index: {}]
  %s14 = inlined_call_operand.vmem [shape: f32[1,64], index: 14, kind: input, shape index: {}]
  %s15 = inlined_call_operand.vmem [shape: f32[1,64], index: 15, kind: input, shape index: {}]
  %s16 = inlined_call_operand.vmem [shape: bf16[64,128], index: 16, kind: input, shape index: {}]
  %s17 = inlined_call_operand.vmem [shape: f32[1,128], index: 17, kind: input, shape index: {}]
  %s18 = inlined_call_operand.vmem [shape: bf16[8,128], index: 18, kind: output, shape index: {}]
  %s19 = sld [smem:[#allocation0]]
  $region94: #{model_forward.1} parent=0
    _
  %s21 = ssub.s32 1, %s19
  %s22 = scalar_select 0, %s21, %s19
  $region1: #{model_forward.1} parent=0
    #allocation2 [shape = 'u8[262144]{0}', space=vmem, size = 0x40000, scoped, tag = 'input window, operand 4, single buffered']
    #allocation3 [shape = 's32[1]{0}', space=sflag, size = 0x4, scoped, tag = 'scoped memory for model_forward.1']
    #allocation4 [shape = 'u8[1048576]{0}', space=vmem, size = 0x100000, scoped, tag = 'input window, operand 7, single buffered']
    #allocation5 [shape = 's32[1]{0}', space=sflag, size = 0x4, scoped, tag = 'scoped memory for model_forward.1']
    #allocation6 [shape = 'u8[131072]{0}', space=vmem, size = 0x20000, scoped, tag = 'input window, operand 10, single buffered']
    %23 = vsyncpa [#allocation3], 0
    %24 = vsyncpa [#allocation5], 0
    // Predicated region
    $region2: #{model_forward.1} parent=1 // pred_check
      _
    $region3: #{model_forward.1} parent=1 // pred_check_branch
      %26 = sbr.rel (0) target = $region5
    $region4: #{model_forward.1} parent=1 // pred_region
      _
    $region5: #{model_forward.1} parent=1 // pred_fallthru
      _
    // Predicated region
    $region6: #{model_forward.1} parent=1 // pred_check
      _
    $region7: #{model_forward.1} parent=1 // pred_check_branch
      %28 = sbr.rel (0) target = $region9
    $region8: #{model_forward.1} parent=1 // pred_region
      _
    $region9: #{model_forward.1} parent=1 // pred_fallthru
      _
    // Predicated region
    $region10: #{model_forward.1} parent=1 // pred_check
      _
    $region11: #{model_forward.1} parent=1 // pred_check_branch
      %30 = sbr.rel (0) target = $region13
    $region12: #{model_forward.1} parent=1 // pred_region
      _
    $region13: #{model_forward.1} parent=1 // pred_fallthru
      _
    // Predicated region
    $region14: #{model_forward.1} parent=1 // pred_check
      _
    $region15: #{model_forward.1} parent=1 // pred_check_branch
      %32 = sbr.rel (0) target = $region17
    $region16: #{model_forward.1} parent=1 // pred_region
      _
    $region17: #{model_forward.1} parent=1 // pred_fallthru
      _
    // Predicated region
    $region18: #{model_forward.1} parent=1 // pred_check
      _
    $region19: #{model_forward.1} parent=1 // pred_check_branch
      %34 = sbr.rel (0) target = $region21
    $region20: #{model_forward.1} parent=1 // pred_region
      %36 = vsyncadd [#allocation3], 0
      %s37 = sshll.u32 %s4, 4
      %s38 = int_to_ptr.hbm [resolvable:$true] %s37
      %s39 = sshll.u32 [#allocation2], 4
      %s40 = int_to_ptr.vmem [resolvable:$true] %s39
      %45 = dma.hbm_to_vmem [thread:$0]  %s38, 8192, %s40, [#allocation3], 512, 512, 32
    $region21: #{model_forward.1} parent=1 // pred_fallthru
      _
    // Predicated region
    $region22: #{model_forward.1} parent=1 // pred_check
      _
    $region23: #{model_forward.1} parent=1 // pred_check_branch
      %47 = sbr.rel (0) target = $region25
    $region24: #{model_forward.1} parent=1 // pred_region
      _
    $region25: #{model_forward.1} parent=1 // pred_fallthru
      _
    // Predicated region
    $region26: #{model_forward.1} parent=1 // pred_check
      _
    $region27: #{model_forward.1} parent=1 // pred_check_branch
      %49 = sbr.rel (0) target = $region29
    $region28: #{model_forward.1} parent=1 // pred_region
      _
    $region29: #{model_forward.1} parent=1 // pred_fallthru
      _
    // Predicated region
    $region30: #{model_forward.1} parent=1 // pred_check
      _
    $region31: #{model_forward.1} parent=1 // pred_check_branch
      %51 = sbr.rel (0) target = $region33
    $region32: #{model_forward.1} parent=1 // pred_region
      %53 = vsyncadd [#allocation5], 0
      %s54 = sshll.u32 %s7, 4
      %s55 = int_to_ptr.hbm [resolvable:$true] %s54
      %s56 = sshll.u32 [#allocation4], 4
      %s57 = int_to_ptr.vmem [resolvable:$true] %s56
      %62 = dma.hbm_to_vmem [thread:$0]  %s55, 32768, %s57, [#allocation5], 256, 256, 16
    $region33: #{model_forward.1} parent=1 // pred_fallthru
      _
    // Predicated region
    $region34: #{model_forward.1} parent=1 // pred_check
      _
    $region35: #{model_forward.1} parent=1 // pred_check_branch
      %64 = sbr.rel (0) target = $region37
    $region36: #{model_forward.1} parent=1 // pred_region
      _
    $region37: #{model_forward.1} parent=1 // pred_fallthru
      _
    // Predicated region
    $region38: #{model_forward.1} parent=1 // pred_check
      _
    $region39: #{model_forward.1} parent=1 // pred_check_branch
      %66 = sbr.rel (0) target = $region41
    $region40: #{model_forward.1} parent=1 // pred_region
      _
    $region41: #{model_forward.1} parent=1 // pred_fallthru
      _
    // Predicated region
    $region42: #{model_forward.1} parent=1 // pred_check
      _
    $region43: #{model_forward.1} parent=1 // pred_check_branch
      %68 = sbr.rel (0) target = $region45
    $region44: #{model_forward.1} parent=1 // pred_region
      %70 = vsyncadd [#allocation5], 0
      %s71 = sshll.u32 %s10, 4
      %s72 = int_to_ptr.hbm [resolvable:$true] %s71
      %s73 = sshll.u32 [#allocation6], 4
      %s74 = int_to_ptr.vmem [resolvable:$true] %s73
      %79 = dma.hbm_to_vmem [thread:$0]  %s72, 4096, %s74, [#allocation5], 64, 64, 4
    $region45: #{model_forward.1} parent=1 // pred_fallthru
      _
    // Predicated region
    $region46: #{model_forward.1} parent=1 // pred_check
      _
    $region47: #{model_forward.1} parent=1 // pred_check_branch
      %81 = sbr.rel (0) target = $region49
    $region48: #{model_forward.1} parent=1 // pred_region
      _
    $region49: #{model_forward.1} parent=1 // pred_fallthru
      _
    // Predicated region
    $region50: #{model_forward.1} parent=1 // pred_check
      _
    $region51: #{model_forward.1} parent=1 // pred_check_branch
      %83 = sbr.rel (0) target = $region53
    $region52: #{model_forward.1} parent=1 // pred_region
      _
    $region53: #{model_forward.1} parent=1 // pred_fallthru
      _
    // Predicated region
    $region54: #{model_forward.1} parent=1 // pred_check
      _
    $region55: #{model_forward.1} parent=1 // pred_check_branch
      %85 = sbr.rel (0) target = $region57
    $region56: #{model_forward.1} parent=1 // pred_region
      _
    $region57: #{model_forward.1} parent=1 // pred_fallthru
      _
    // Predicated region
    $region58: #{model_forward.1} parent=1 // pred_check
      _
    $region59: #{model_forward.1} parent=1 // pred_check_branch
      %87 = sbr.rel (0) target = $region61
    $region60: #{model_forward.1} parent=1 // pred_region
      _
    $region61: #{model_forward.1} parent=1 // pred_fallthru
      _
    // Predicated region
    $region62: #{model_forward.1} parent=1 // pred_check
      _
    $region63: #{model_forward.1} parent=1 // pred_check_branch
      %89 = sbr.rel (0) target = $region65
    $region64: #{model_forward.1} parent=1 // pred_region
      _
    $region65: #{model_forward.1} parent=1 // pred_fallthru
      _
    // Predicated region
    $region66: #{model_forward.1} parent=1 // pred_check
      _
    $region67: #{model_forward.1} parent=1 // pred_check_branch
      %91 = sbr.rel (0) target = $region69
    $region68: #{model_forward.1} parent=1 // pred_region
      _
    $region69: #{model_forward.1} parent=1 // pred_fallthru
      _
    // Predicated region
    $region70: #{model_forward.1} parent=1 // pred_check
      _
    $region71: #{model_forward.1} parent=1 // pred_check_branch
      %93 = sbr.rel (0) target = $region73
    $region72: #{model_forward.1} parent=1 // pred_region
      _
    $region73: #{model_forward.1} parent=1 // pred_fallthru
      _
    // Predicated region
    $region74: #{model_forward.1} parent=1 // pred_check
      _
    $region75: #{model_forward.1} parent=1 // pred_check_branch
      %95 = sbr.rel (0) target = $region77
    $region76: #{model_forward.1} parent=1 // pred_region
      %97 = dma.done [#allocation3], 8192
    $region77: #{model_forward.1} parent=1 // pred_fallthru
      _
    // Predicated region
    $region78: #{model_forward.1} parent=1 // pred_check
      _
    $region79: #{model_forward.1} parent=1 // pred_check_branch
      %99 = sbr.rel (0) target = $region81
    $region80: #{model_forward.1} parent=1 // pred_region
      %101 = dma.done [#allocation5], 32768
    $region81: #{model_forward.1} parent=1 // pred_fallthru
      _
    // Predicated region
    $region82: #{model_forward.1} parent=1 // pred_check
      _
    $region83: #{model_forward.1} parent=1 // pred_check_branch
      %103 = sbr.rel (0) target = $region85
    $region84: #{model_forward.1} parent=1 // pred_region
      %105 = dma.done [#allocation5], 4096
    $region85: #{model_forward.1} parent=1 // pred_fallthru
      _
    %v107 = vld [vmem:[%s0] sm:$0xff]
    %v108 = vld [vmem:[%s1] sm:$0xff]
    %vm109 = vcmask 64512
    %v111 = vsel %vm109, %v107, 0
    %113 = vmatpush.msra.mxu0 0.0
    %114 = vmatpush.msra.mxu0 0.0
    %115 = vmatpush.msra.mxu0 0.0
    %116 = vmatpush.msra.mxu0 0.0
    %117 = vmatpush.msra.mxu0 0.0
    %118 = vmatpush.msra.mxu0 0.0
    %119 = vmatpush.msra.mxu0 0.0
    %120 = vmatpush.msra.mxu0 0.0
    %121 = vmatpush.msra.mxu0 0.0
    %122 = vmatpush.msra.mxu0 0.0
    %123 = vmatpush.msra.mxu0 0.0
    %124 = vmatpush.msra.mxu0 0.0
    %125 = vmatpush.msra.mxu0 0.0
    %126 = vmatpush.msra.mxu0 0.0
    %127 = vmatpush.msra.mxu0 0.0
    %128 = vmatpush.msra.mxu0 %v108
    %129 = vmatmul.f32.gmra.mxu0 %v111
    %v130 = vpop.f32.mrf.mxu0
    %v131 = vadd.f32 0.0, %v130
    %132 = vdwg.mxu0
    %v133 = vrot.slane %v131, 4
    %v134 = vadd.f32 %v131, %v133
    %v135 = vrot.slane %v134, 2
    %v136 = vadd.f32 %v134, %v135
    %v137 = vrot.slane %v136, 1
    %v138 = vadd.f32 %v136, %v137
    %v139 = vmul.f32 %v138, 0.125
    %v140 = vmul.f32 %v131, %v131
    %v141 = vrot.slane %v140, 4
    %v142 = vadd.f32 %v140, %v141
    %v143 = vrot.slane %v142, 2
    %v144 = vadd.f32 %v142, %v143
    %v145 = vrot.slane %v144, 1
    %v146 = vadd.f32 %v144, %v145
    %v147 = vmul.f32 %v146, 0.125
    %v148 = vmul.f32 %v139, %v139
    %v149 = vsub.f32 %v147, %v148
    %v150 = vmax.f32 %v149, 0.0
    %v151 = vld [vmem:[%s2] sm:$0x1]
    %v152 = vadd.f32 %v150, 1e-05
    %v153 = vrsqrt.pop %v152
    %v154 = vmul.f32 %v153, %v152
    %v155 = vmul.f32 %v154, %v153
    %v156 = vmul.f32 0.5, %v155
    %v157 = vsub.f32 1.5, %v156
    %v158 = vmul.f32 %v153, %v157
    %vm159 = vweird.f32 %v152
    %vm160 = vweird.f32 %v153
    %vm161 = vmor %vm159, %vm160
    %v162 = vsel %vm161, %v153, %v158
    %v163 = vmul.f32 %v151, %v162
    %v164 = vld [vmem:[%s3] sm:$0x1]
    %v165 = vmul.f32 %v139, %v163
    %v166 = vsub.f32 %v164, %v165
    %v168 = vperm.slane %v163, 0
    %v170 = vmul.f32 %v131, %v168
    %v172 = vperm.slane %v166, 0
    %v174 = vadd.f32 %v170, %v172
    %v175 = vmax.f32 %v174, 0.0
    %v176 = vpack.c.bf16 %v175, %v175
    %v177 = vld [vmem:[#allocation2] sm:$0xff]
    %v178 = vld [vmem:[#allocation2 + $0x8] sm:$0xff]
    %v179 = vld [vmem:[#allocation2 + $0x10] sm:$0xff]
    %v180 = vld [vmem:[#allocation2 + $0x18] sm:$0xff]
    %v181 = vld [vmem:[#allocation2 + $0x20] sm:$0xff]
    %v182 = vld [vmem:[#allocation2 + $0x28] sm:$0xff]
    %v183 = vld [vmem:[#allocation2 + $0x30] sm:$0xff]
    %v184 = vld [vmem:[#allocation2 + $0x38] sm:$0xff]
    %v185 = vld [vmem:[#allocation2 + $0x40] sm:$0xff]
    %v186 = vld [vmem:[#allocation2 + $0x48] sm:$0xff]
    %v187 = vld [vmem:[#allocation2 + $0x50] sm:$0xff]
    %v188 = vld [vmem:[#allocation2 + $0x58] sm:$0xff]
    %v189 = vld [vmem:[#allocation2 + $0x60] sm:$0xff]
    %v190 = vld [vmem:[#allocation2 + $0x68] sm:$0xff]
    %v191 = vld [vmem:[#allocation2 + $0x70] sm:$0xff]
    %v192 = vld [vmem:[#allocation2 + $0x78] sm:$0xff]
    %v193 = vld [vmem:[#allocation2 + $0x80] sm:$0xff]
    %v194 = vld [vmem:[#allocation2 + $0x88] sm:$0xff]
    %v195 = vld [vmem:[#allocation2 + $0x90] sm:$0xff]
    %v196 = vld [vmem:[#allocation2 + $0x98] sm:$0xff]
    %v197 = vld [vmem:[#allocation2 + $0xa0] sm:$0xff]
    %v198 = vld [vmem:[#allocation2 + $0xa8] sm:$0xff]
    %v199 = vld [vmem:[#allocation2 + $0xb0] sm:$0xff]
    %v200 = vld [vmem:[#allocation2 + $0xb8] sm:$0xff]
    %v201 = vld [vmem:[#allocation2 + $0xc0] sm:$0xff]
    %v202 = vld [vmem:[#allocation2 + $0xc8] sm:$0xff]
    %v203 = vld [vmem:[#allocation2 + $0xd0] sm:$0xff]
    %v204 = vld [vmem:[#allocation2 + $0xd8] sm:$0xff]
    %v205 = vld [vmem:[#allocation2 + $0xe0] sm:$0xff]
    %v206 = vld [vmem:[#allocation2 + $0xe8] sm:$0xff]
    %v207 = vld [vmem:[#allocation2 + $0xf0] sm:$0xff]
    %v208 = vld [vmem:[#allocation2 + $0xf8] sm:$0xff]
    %v209 = vld [vmem:[#allocation2 + $0x100] sm:$0xff]
    %v210 = vld [vmem:[#allocation2 + $0x108] sm:$0xff]
    %v211 = vld [vmem:[#allocation2 + $0x110] sm:$0xff]
    %v212 = vld [vmem:[#allocation2 + $0x118] sm:$0xff]
    %v213 = vld [vmem:[#allocation2 + $0x120] sm:$0xff]
    %v214 = vld [vmem:[#allocation2 + $0x128] sm:$0xff]
    %v215 = vld [vmem:[#allocation2 + $0x130] sm:$0xff]
    %v216 = vld [vmem:[#allocation2 + $0x138] sm:$0xff]
    %v217 = vld [vmem:[#allocation2 + $0x140] sm:$0xff]
    %v218 = vld [vmem:[#allocation2 + $0x148] sm:$0xff]
    %v219 = vld [vmem:[#allocation2 + $0x150] sm:$0xff]
    %v220 = vld [vmem:[#allocation2 + $0x158] sm:$0xff]
    %v221 = vld [vmem:[#allocation2 + $0x160] sm:$0xff]
    %v222 = vld [vmem:[#allocation2 + $0x168] sm:$0xff]
    %v223 = vld [vmem:[#allocation2 + $0x170] sm:$0xff]
    %v224 = vld [vmem:[#allocation2 + $0x178] sm:$0xff]
    %v225 = vld [vmem:[#allocation2 + $0x180] sm:$0xff]
    %v226 = vld [vmem:[#allocation2 + $0x188] sm:$0xff]
    %v227 = vld [vmem:[#allocation2 + $0x190] sm:$0xff]
    %v228 = vld [vmem:[#allocation2 + $0x198] sm:$0xff]
    %v229 = vld [vmem:[#allocation2 + $0x1a0] sm:$0xff]
    %v230 = vld [vmem:[#allocation2 + $0x1a8] sm:$0xff]
    %v231 = vld [vmem:[#allocation2 + $0x1b0] sm:$0xff]
    %v232 = vld [vmem:[#allocation2 + $0x1b8] sm:$0xff]
    %v233 = vld [vmem:[#allocation2 + $0x1c0] sm:$0xff]
    %v234 = vld [vmem:[#allocation2 + $0x1c8] sm:$0xff]
    %v235 = vld [vmem:[#allocation2 + $0x1d0] sm:$0xff]
    %v236 = vld [vmem:[#allocation2 + $0x1d8] sm:$0xff]
    %v237 = vld [vmem:[#allocation2 + $0x1e0] sm:$0xff]
    %v238 = vld [vmem:[#allocation2 + $0x1e8] sm:$0xff]
    %v239 = vld [vmem:[#allocation2 + $0x1f0] sm:$0xff]
    %v240 = vld [vmem:[#allocation2 + $0x1f8] sm:$0xff]
    %v305 = vunpack.c.l.b16 %v177
    %v306 = vunpack.c.h.b16 %v177
    %v307 = vunpack.c.l.b16 %v178
    %v308 = vunpack.c.h.b16 %v178
    %v309 = vunpack.c.l.b16 %v179
    %v310 = vunpack.c.h.b16 %v179
    %v311 = vunpack.c.l.b16 %v180
    %v312 = vunpack.c.h.b16 %v180
    %v313 = vunpack.c.l.b16 %v181
    %v314 = vunpack.c.h.b16 %v181
    %v315 = vunpack.c.l.b16 %v182
    %v316 = vunpack.c.h.b16 %v182
    %v317 = vunpack.c.l.b16 %v183
    %v318 = vunpack.c.h.b16 %v183
    %v319 = vunpack.c.l.b16 %v184
    %v320 = vunpack.c.h.b16 %v184
    %v321 = vunpack.c.l.b16 %v185
    %v322 = vunpack.c.h.b16 %v185
    %v323 = vunpack.c.l.b16 %v186
    %v324 = vunpack.c.h.b16 %v186
    %v325 = vunpack.c.l.b16 %v187
    %v326 = vunpack.c.h.b16 %v187
    %v327 = vunpack.c.l.b16 %v188
    %v328 = vunpack.c.h.b16 %v188
    %v329 = vunpack.c.l.b16 %v189
    %v330 = vunpack.c.h.b16 %v189
    %v331 = vunpack.c.l.b16 %v190
    %v332 = vunpack.c.h.b16 %v190
    %v333 = vunpack.c.l.b16 %v191
    %v334 = vunpack.c.h.b16 %v191
    %v335 = vunpack.c.l.b16 %v192
    %v336 = vunpack.c.h.b16 %v192
    %v337 = vunpack.c.l.b16 %v193
    %v338 = vunpack.c.h.b16 %v193
    %v339 = vunpack.c.l.b16 %v194
    %v340 = vunpack.c.h.b16 %v194
    %v341 = vunpack.c.l.b16 %v195
    %v342 = vunpack.c.h.b16 %v195
    %v343 = vunpack.c.l.b16 %v196
    %v344 = vunpack.c.h.b16 %v196
    %v345 = vunpack.c.l.b16 %v197
    %v346 = vunpack.c.h.b16 %v197
    %v347 = vunpack.c.l.b16 %v198
    %v348 = vunpack.c.h.b16 %v198
    %v349 = vunpack.c.l.b16 %v199
    %v350 = vunpack.c.h.b16 %v199
    %v351 = vunpack.c.l.b16 %v200
    %v352 = vunpack.c.h.b16 %v200
    %v353 = vunpack.c.l.b16 %v201
    %v354 = vunpack.c.h.b16 %v201
    %v355 = vunpack.c.l.b16 %v202
    %v356 = vunpack.c.h.b16 %v202
    %v357 = vunpack.c.l.b16 %v203
    %v358 = vunpack.c.h.b16 %v203
    %v359 = vunpack.c.l.b16 %v204
    %v360 = vunpack.c.h.b16 %v204
    %v361 = vunpack.c.l.b16 %v205
    %v362 = vunpack.c.h.b16 %v205
    %v363 = vunpack.c.l.b16 %v206
    %v364 = vunpack.c.h.b16 %v206
    %v365 = vunpack.c.l.b16 %v207
    %v366 = vunpack.c.h.b16 %v207
    %v367 = vunpack.c.l.b16 %v208
    %v368 = vunpack.c.h.b16 %v208
    %v369 = vunpack.c.l.b16 %v209
    %v370 = vunpack.c.h.b16 %v209
    %v371 = vunpack.c.l.b16 %v210
    %v372 = vunpack.c.h.b16 %v210
    %v373 = vunpack.c.l.b16 %v211
    %v374 = vunpack.c.h.b16 %v211
    %v375 = vunpack.c.l.b16 %v212
    %v376 = vunpack.c.h.b16 %v212
    %v377 = vunpack.c.l.b16 %v213
    %v378 = vunpack.c.h.b16 %v213
    %v379 = vunpack.c.l.b16 %v214
    %v380 = vunpack.c.h.b16 %v214
    %v381 = vunpack.c.l.b16 %v215
    %v382 = vunpack.c.h.b16 %v215
    %v383 = vunpack.c.l.b16 %v216
    %v384 = vunpack.c.h.b16 %v216
    %v385 = vunpack.c.l.b16 %v217
    %v386 = vunpack.c.h.b16 %v217
    %v387 = vunpack.c.l.b16 %v218
    %v388 = vunpack.c.h.b16 %v218
    %v389 = vunpack.c.l.b16 %v219
    %v390 = vunpack.c.h.b16 %v219
    %v391 = vunpack.c.l.b16 %v220
    %v392 = vunpack.c.h.b16 %v220
    %v393 = vunpack.c.l.b16 %v221
    %v394 = vunpack.c.h.b16 %v221
    %v395 = vunpack.c.l.b16 %v222
    %v396 = vunpack.c.h.b16 %v222
    %v397 = vunpack.c.l.b16 %v223
    %v398 = vunpack.c.h.b16 %v223
    %v399 = vunpack.c.l.b16 %v224
    %v400 = vunpack.c.h.b16 %v224
    %v401 = vunpack.c.l.b16 %v225
    %v402 = vunpack.c.h.b16 %v225
    %v403 = vunpack.c.l.b16 %v226
    %v404 = vunpack.c.h.b16 %v226
    %v405 = vunpack.c.l.b16 %v227
    %v406 = vunpack.c.h.b16 %v227
    %v407 = vunpack.c.l.b16 %v228
    %v408 = vunpack.c.h.b16 %v228
    %v409 = vunpack.c.l.b16 %v229
    %v410 = vunpack.c.h.b16 %v229
    %v411 = vunpack.c.l.b16 %v230
    %v412 = vunpack.c.h.b16 %v230
    %v413 = vunpack.c.l.b16 %v231
    %v414 = vunpack.c.h.b16 %v231
    %v415 = vunpack.c.l.b16 %v232
    %v416 = vunpack.c.h.b16 %v232
    %v417 = vunpack.c.l.b16 %v233
    %v418 = vunpack.c.h.b16 %v233
    %v419 = vunpack.c.l.b16 %v234
    %v420 = vunpack.c.h.b16 %v234
    %v421 = vunpack.c.l.b16 %v235
    %v422 = vunpack.c.h.b16 %v235
    %v423 = vunpack.c.l.b16 %v236
    %v424 = vunpack.c.h.b16 %v236
    %v425 = vunpack.c.l.b16 %v237
    %v426 = vunpack.c.h.b16 %v237
    %v427 = vunpack.c.l.b16 %v238
    %v428 = vunpack.c.h.b16 %v238
    %v429 = vunpack.c.l.b16 %v239
    %v430 = vunpack.c.h.b16 %v239
    %v431 = vunpack.c.l.b16 %v240
    %v432 = vunpack.c.h.b16 %v240
    %v433 = vpack.c.b16 %v313, %v305
    %v434 = vpack.c.b16 %v314, %v306
    %v435 = vpack.c.b16 %v315, %v307
    %v436 = vpack.c.b16 %v316, %v308
    %v437 = vpack.c.b16 %v317, %v309
    %v438 = vpack.c.b16 %v318, %v310
    %v439 = vpack.c.b16 %v319, %v311
    %v440 = vpack.c.b16 %v320, %v312
    %v441 = vpack.c.b16 %v329, %v321
    %v442 = vpack.c.b16 %v330, %v322
    %v443 = vpack.c.b16 %v331, %v323
    %v444 = vpack.c.b16 %v332, %v324
    %v445 = vpack.c.b16 %v333, %v325
    %v446 = vpack.c.b16 %v334, %v326
    %v447 = vpack.c.b16 %v335, %v327
    %v448 = vpack.c.b16 %v336, %v328
    %v449 = vpack.c.b16 %v345, %v337
    %v450 = vpack.c.b16 %v346, %v338
    %v451 = vpack.c.b16 %v347, %v339
    %v452 = vpack.c.b16 %v348, %v340
    %v453 = vpack.c.b16 %v349, %v341
    %v454 = vpack.c.b16 %v350, %v342
    %v455 = vpack.c.b16 %v351, %v343
    %v456 = vpack.c.b16 %v352, %v344
    %v457 = vpack.c.b16 %v361, %v353
    %v458 = vpack.c.b16 %v362, %v354
    %v459 = vpack.c.b16 %v363, %v355
    %v460 = vpack.c.b16 %v364, %v356
    %v461 = vpack.c.b16 %v365, %v357
    %v462 = vpack.c.b16 %v366, %v358
    %v463 = vpack.c.b16 %v367, %v359
    %v464 = vpack.c.b16 %v368, %v360
    %v465 = vpack.c.b16 %v377, %v369
    %v466 = vpack.c.b16 %v378, %v370
    %v467 = vpack.c.b16 %v379, %v371
    %v468 = vpack.c.b16 %v380, %v372
    %v469 = vpack.c.b16 %v381, %v373
    %v470 = vpack.c.b16 %v382, %v374
    %v471 = vpack.c.b16 %v383, %v375
    %v472 = vpack.c.b16 %v384, %v376
    %v473 = vpack.c.b16 %v393, %v385
    %v474 = vpack.c.b16 %v394, %v386
    %v475 = vpack.c.b16 %v395, %v387
    %v476 = vpack.c.b16 %v396, %v388
    %v477 = vpack.c.b16 %v397, %v389
    %v478 = vpack.c.b16 %v398, %v390
    %v479 = vpack.c.b16 %v399, %v391
    %v480 = vpack.c.b16 %v400, %v392
    %v481 = vpack.c.b16 %v409, %v401
    %v482 = vpack.c.b16 %v410, %v402
    %v483 = vpack.c.b16 %v411, %v403
    %v484 = vpack.c.b16 %v412, %v404
    %v485 = vpack.c.b16 %v413, %v405
    %v486 = vpack.c.b16 %v414, %v406
    %v487 = vpack.c.b16 %v415, %v407
    %v488 = vpack.c.b16 %v416, %v408
    %v489 = vpack.c.b16 %v425, %v417
    %v490 = vpack.c.b16 %v426, %v418
    %v491 = vpack.c.b16 %v427, %v419
    %v492 = vpack.c.b16 %v428, %v420
    %v493 = vpack.c.b16 %v429, %v421
    %v494 = vpack.c.b16 %v430, %v422
    %v495 = vpack.c.b16 %v431, %v423
    %v496 = vpack.c.b16 %v432, %v424
    %561 = vmatpush.bf16.msra.mxu0 %v489
    %562 = vmatpush.bf16.msra.mxu0 %v481
    %563 = vmatpush.bf16.msra.mxu0 %v473
    %564 = vmatpush.bf16.msra.mxu0 %v465
    %565 = vmatpush.bf16.msra.mxu0 %v457
    %566 = vmatpush.bf16.msra.mxu0 %v449
    %567 = vmatpush.bf16.msra.mxu0 %v441
    %568 = vmatpush.bf16.msra.mxu0 %v433
    %569 = vmatmul.bf16.gmra.mxu0 %v176
    %v570 = vpop.f32.mrf.mxu0
    %v571 = vadd.f32 0.0, %v570
    %v572 = vpop.f32.mrf.mxu0
    %573 = vdwg.mxu0
    %574 = vmatpush.bf16.msra.mxu0 %v490
    %575 = vmatpush.bf16.msra.mxu0 %v482
    %576 = vmatpush.bf16.msra.mxu0 %v474
    %577 = vmatpush.bf16.msra.mxu0 %v466
    %578 = vmatpush.bf16.msra.mxu0 %v458
    %579 = vmatpush.bf16.msra.mxu0 %v450
    %580 = vmatpush.bf16.msra.mxu0 %v442
    %581 = vmatpush.bf16.msra.mxu0 %v434
    %582 = vmatmul.bf16.gmra.mxu0 %v176
    %v583 = vpop.f32.mrf.mxu0
    %v584 = vadd.f32 0.0, %v583
    %v585 = vpop.f32.mrf.mxu0
    %586 = vdwg.mxu0
    %587 = vmatpush.bf16.msra.mxu0 %v491
    %588 = vmatpush.bf16.msra.mxu0 %v483
    %589 = vmatpush.bf16.msra.mxu0 %v475
    %590 = vmatpush.bf16.msra.mxu0 %v467
    %591 = vmatpush.bf16.msra.mxu0 %v459
    %592 = vmatpush.bf16.msra.mxu0 %v451
    %593 = vmatpush.bf16.msra.mxu0 %v443
    %594 = vmatpush.bf16.msra.mxu0 %v435
    %595 = vmatmul.bf16.gmra.mxu0 %v176
    %v596 = vpop.f32.mrf.mxu0
    %v597 = vadd.f32 0.0, %v596
    %v598 = vpop.f32.mrf.mxu0
    %599 = vdwg.mxu0
    %600 = vmatpush.bf16.msra.mxu0 %v492
    %601 = vmatpush.bf16.msra.mxu0 %v484
    %602 = vmatpush.bf16.msra.mxu0 %v476
    %603 = vmatpush.bf16.msra.mxu0 %v468
    %604 = vmatpush.bf16.msra.mxu0 %v460
    %605 = vmatpush.bf16.msra.mxu0 %v452
    %606 = vmatpush.bf16.msra.mxu0 %v444
    %607 = vmatpush.bf16.msra.mxu0 %v436
    %608 = vmatmul.bf16.gmra.mxu0 %v176
    %v609 = vpop.f32.mrf.mxu0
    %v610 = vadd.f32 0.0, %v609
    %v611 = vpop.f32.mrf.mxu0
    %612 = vdwg.mxu0
    %613 = vmatpush.bf16.msra.mxu0 %v493
    %614 = vmatpush.bf16.msra.mxu0 %v485
    %615 = vmatpush.bf16.msra.mxu0 %v477
    %616 = vmatpush.bf16.msra.mxu0 %v469
    %617 = vmatpush.bf16.msra.mxu0 %v461
    %618 = vmatpush.bf16.msra.mxu0 %v453
    %619 = vmatpush.bf16.msra.mxu0 %v445
    %620 = vmatpush.bf16.msra.mxu0 %v437
    %621 = vmatmul.bf16.gmra.mxu0 %v176
    %v622 = vpop.f32.mrf.mxu0
    %v623 = vadd.f32 0.0, %v622
    %v624 = vpop.f32.mrf.mxu0
    %625 = vdwg.mxu0
    %626 = vmatpush.bf16.msra.mxu0 %v494
    %627 = vmatpush.bf16.msra.mxu0 %v486
    %628 = vmatpush.bf16.msra.mxu0 %v478
    %629 = vmatpush.bf16.msra.mxu0 %v470
    %630 = vmatpush.bf16.msra.mxu0 %v462
    %631 = vmatpush.bf16.msra.mxu0 %v454
    %632 = vmatpush.bf16.msra.mxu0 %v446
    %633 = vmatpush.bf16.msra.mxu0 %v438
    %634 = vmatmul.bf16.gmra.mxu0 %v176
    %v635 = vpop.f32.mrf.mxu0
    %v636 = vadd.f32 0.0, %v635
    %v637 = vpop.f32.mrf.mxu0
    %638 = vdwg.mxu0
    %639 = vmatpush.bf16.msra.mxu0 %v495
    %640 = vmatpush.bf16.msra.mxu0 %v487
    %641 = vmatpush.bf16.msra.mxu0 %v479
    %642 = vmatpush.bf16.msra.mxu0 %v471
    %643 = vmatpush.bf16.msra.mxu0 %v463
    %644 = vmatpush.bf16.msra.mxu0 %v455
    %645 = vmatpush.bf16.msra.mxu0 %v447
    %646 = vmatpush.bf16.msra.mxu0 %v439
    %647 = vmatmul.bf16.gmra.mxu0 %v176
    %v648 = vpop.f32.mrf.mxu0
    %v649 = vadd.f32 0.0, %v648
    %v650 = vpop.f32.mrf.mxu0
    %651 = vdwg.mxu0
    %652 = vmatpush.bf16.msra.mxu0 %v496
    %653 = vmatpush.bf16.msra.mxu0 %v488
    %654 = vmatpush.bf16.msra.mxu0 %v480
    %655 = vmatpush.bf16.msra.mxu0 %v472
    %656 = vmatpush.bf16.msra.mxu0 %v464
    %657 = vmatpush.bf16.msra.mxu0 %v456
    %658 = vmatpush.bf16.msra.mxu0 %v448
    %659 = vmatpush.bf16.msra.mxu0 %v440
    %660 = vmatmul.bf16.gmra.mxu0 %v176
    %v661 = vpop.f32.mrf.mxu0
    %v662 = vadd.f32 0.0, %v661
    %v663 = vpop.f32.mrf.mxu0
    %664 = vdwg.mxu0
    %v665 = vrot.slane %v571, 4
    %v666 = vadd.f32 %v571, %v665
    %v667 = vrot.slane %v666, 2
    %v668 = vadd.f32 %v666, %v667
    %v669 = vrot.slane %v668, 1
    %v670 = vadd.f32 %v668, %v669
    %v671 = vrot.slane %v584, 4
    %v672 = vadd.f32 %v584, %v671
    %v673 = vrot.slane %v672, 2
    %v674 = vadd.f32 %v672, %v673
    %v675 = vrot.slane %v674, 1
    %v676 = vadd.f32 %v674, %v675
    %v677 = vrot.slane %v597, 4
    %v678 = vadd.f32 %v597, %v677
    %v679 = vrot.slane %v678, 2
    %v680 = vadd.f32 %v678, %v679
    %v681 = vrot.slane %v680, 1
    %v682 = vadd.f32 %v680, %v681
    %v683 = vrot.slane %v610, 4
    %v684 = vadd.f32 %v610, %v683
    %v685 = vrot.slane %v684, 2
    %v686 = vadd.f32 %v684, %v685
    %v687 = vrot.slane %v686, 1
    %v688 = vadd.f32 %v686, %v687
    %v689 = vrot.slane %v623, 4
    %v690 = vadd.f32 %v623, %v689
    %v691 = vrot.slane %v690, 2
    %v692 = vadd.f32 %v690, %v691
    %v693 = vrot.slane %v692, 1
    %v694 = vadd.f32 %v692, %v693
    %v695 = vrot.slane %v636, 4
    %v696 = vadd.f32 %v636, %v695
    %v697 = vrot.slane %v696, 2
    %v698 = vadd.f32 %v696, %v697
    %v699 = vrot.slane %v698, 1
    %v700 = vadd.f32 %v698, %v699
    %v701 = vrot.slane %v649, 4
    %v702 = vadd.f32 %v649, %v701
    %v703 = vrot.slane %v702, 2
    %v704 = vadd.f32 %v702, %v703
    %v705 = vrot.slane %v704, 1
    %v706 = vadd.f32 %v704, %v705
    %v707 = vrot.slane %v662, 4
    %v708 = vadd.f32 %v662, %v707
    %v709 = vrot.slane %v708, 2
    %v710 = vadd.f32 %v708, %v709
    %v711 = vrot.slane %v710, 1
    %v712 = vadd.f32 %v710, %v711
    %v713 = vmul.f32 %v670, 0.125
    %v714 = vmul.f32 %v676, 0.125
    %v715 = vmul.f32 %v682, 0.125
    %v716 = vmul.f32 %v688, 0.125
    %v717 = vmul.f32 %v694, 0.125
    %v718 = vmul.f32 %v700, 0.125
    %v719 = vmul.f32 %v706, 0.125
    %v720 = vmul.f32 %v712, 0.125
    %v721 = vmul.f32 %v571, %v571
    %v722 = vmul.f32 %v584, %v584
    %v723 = vmul.f32 %v597, %v597
    %v724 = vmul.f32 %v610, %v610
    %v725 = vmul.f32 %v623, %v623
    %v726 = vmul.f32 %v636, %v636
    %v727 = vmul.f32 %v649, %v649
    %v728 = vmul.f32 %v662, %v662
    %v729 = vrot.slane %v721, 4
    %v730 = vadd.f32 %v721, %v729
    %v731 = vrot.slane %v730, 2
    %v732 = vadd.f32 %v730, %v731
    %v733 = vrot.slane %v732, 1
    %v734 = vadd.f32 %v732, %v733
    %v735 = vrot.slane %v722, 4
    %v736 = vadd.f32 %v722, %v735
    %v737 = vrot.slane %v736, 2
    %v738 = vadd.f32 %v736, %v737
    %v739 = vrot.slane %v738, 1
    %v740 = vadd.f32 %v738, %v739
    %v741 = vrot.slane %v723, 4
    %v742 = vadd.f32 %v723, %v741
    %v743 = vrot.slane %v742, 2
    %v744 = vadd.f32 %v742, %v743
    %v745 = vrot.slane %v744, 1
    %v746 = vadd.f32 %v744, %v745
    %v747 = vrot.slane %v724, 4
    %v748 = vadd.f32 %v724, %v747
    %v749 = vrot.slane %v748, 2
    %v750 = vadd.f32 %v748, %v749
    %v751 = vrot.slane %v750, 1
    %v752 = vadd.f32 %v750, %v751
    %v753 = vrot.slane %v725, 4
    %v754 = vadd.f32 %v725, %v753
    %v755 = vrot.slane %v754, 2
    %v756 = vadd.f32 %v754, %v755
    %v757 = vrot.slane %v756, 1
    %v758 = vadd.f32 %v756, %v757
    %v759 = vrot.slane %v726, 4
    %v760 = vadd.f32 %v726, %v759
    %v761 = vrot.slane %v760, 2
    %v762 = vadd.f32 %v760, %v761
    %v763 = vrot.slane %v762, 1
    %v764 = vadd.f32 %v762, %v763
    %v765 = vrot.slane %v727, 4
    %v766 = vadd.f32 %v727, %v765
    %v767 = vrot.slane %v766, 2
    %v768 = vadd.f32 %v766, %v767
    %v769 = vrot.slane %v768, 1
    %v770 = vadd.f32 %v768, %v769
    %v771 = vrot.slane %v728, 4
    %v772 = vadd.f32 %v728, %v771
    %v773 = vrot.slane %v772, 2
    %v774 = vadd.f32 %v772, %v773
    %v775 = vrot.slane %v774, 1
    %v776 = vadd.f32 %v774, %v775
    %v777 = vmul.f32 %v734, 0.125
    %v778 = vmul.f32 %v740, 0.125
    %v779 = vmul.f32 %v746, 0.125
    %v780 = vmul.f32 %v752, 0.125
    %v781 = vmul.f32 %v758, 0.125
    %v782 = vmul.f32 %v764, 0.125
    %v783 = vmul.f32 %v770, 0.125
    %v784 = vmul.f32 %v776, 0.125
    %v785 = vmul.f32 %v713, %v713
    %v786 = vmul.f32 %v714, %v714
    %v787 = vmul.f32 %v715, %v715
    %v788 = vmul.f32 %v716, %v716
    %v789 = vmul.f32 %v717, %v717
    %v790 = vmul.f32 %v718, %v718
    %v791 = vmul.f32 %v719, %v719
    %v792 = vmul.f32 %v720, %v720
    %v793 = vsub.f32 %v777, %v785
    %v794 = vsub.f32 %v778, %v786
    %v795 = vsub.f32 %v779, %v787
    %v796 = vsub.f32 %v780, %v788
    %v797 = vsub.f32 %v781, %v789
    %v798 = vsub.f32 %v782, %v790
    %v799 = vsub.f32 %v783, %v791
    %v800 = vsub.f32 %v784, %v792
    %v801 = vmax.f32 %v793, 0.0
    %v802 = vmax.f32 %v794, 0.0
    %v803 = vmax.f32 %v795, 0.0
    %v804 = vmax.f32 %v796, 0.0
    %v805 = vmax.f32 %v797, 0.0
    %v806 = vmax.f32 %v798, 0.0
    %v807 = vmax.f32 %v799, 0.0
    %v808 = vmax.f32 %v800, 0.0
    %v809 = vld [vmem:[%s5] sm:$0xff]
    %v810 = vadd.f32 %v801, 1e-05
    %v811 = vadd.f32 %v802, 1e-05
    %v812 = vadd.f32 %v803, 1e-05
    %v813 = vadd.f32 %v804, 1e-05
    %v814 = vadd.f32 %v805, 1e-05
    %v815 = vadd.f32 %v806, 1e-05
    %v816 = vadd.f32 %v807, 1e-05
    %v817 = vadd.f32 %v808, 1e-05
    %v818 = vrsqrt.pop %v810
    %v819 = vmul.f32 %v818, %v810
    %v820 = vmul.f32 %v819, %v818
    %v821 = vmul.f32 0.5, %v820
    %v822 = vsub.f32 1.5, %v821
    %v823 = vmul.f32 %v818, %v822
    %vm824 = vweird.f32 %v810
    %vm825 = vweird.f32 %v818
    %vm826 = vmor %vm824, %vm825
    %v827 = vsel %vm826, %v818, %v823
    %v828 = vrsqrt.pop %v811
    %v829 = vmul.f32 %v828, %v811
    %v830 = vmul.f32 %v829, %v828
    %v831 = vmul.f32 0.5, %v830
    %v832 = vsub.f32 1.5, %v831
    %v833 = vmul.f32 %v828, %v832
    %vm834 = vweird.f32 %v811
    %vm835 = vweird.f32 %v828
    %vm836 = vmor %vm834, %vm835
    %v837 = vsel %vm836, %v828, %v833
    %v838 = vrsqrt.pop %v812
    %v839 = vmul.f32 %v838, %v812
    %v840 = vmul.f32 %v839, %v838
    %v841 = vmul.f32 0.5, %v840
    %v842 = vsub.f32 1.5, %v841
    %v843 = vmul.f32 %v838, %v842
    %vm844 = vweird.f32 %v812
    %vm845 = vweird.f32 %v838
    %vm846 = vmor %vm844, %vm845
    %v847 = vsel %vm846, %v838, %v843
    %v848 = vrsqrt.pop %v813
    %v849 = vmul.f32 %v848, %v813
    %v850 = vmul.f32 %v849, %v848
    %v851 = vmul.f32 0.5, %v850
    %v852 = vsub.f32 1.5, %v851
    %v853 = vmul.f32 %v848, %v852
    %vm854 = vweird.f32 %v813
    %vm855 = vweird.f32 %v848
    %vm856 = vmor %vm854, %vm855
    %v857 = vsel %vm856, %v848, %v853
    %v858 = vrsqrt.pop %v814
    %v859 = vmul.f32 %v858, %v814
    %v860 = vmul.f32 %v859, %v858
    %v861 = vmul.f32 0.5, %v860
    %v862 = vsub.f32 1.5, %v861
    %v863 = vmul.f32 %v858, %v862
    %vm864 = vweird.f32 %v814
    %vm865 = vweird.f32 %v858
    %vm866 = vmor %vm864, %vm865
    %v867 = vsel %vm866, %v858, %v863
    %v868 = vrsqrt.pop %v815
    %v869 = vmul.f32 %v868, %v815
    %v870 = vmul.f32 %v869, %v868
    %v871 = vmul.f32 0.5, %v870
    %v872 = vsub.f32 1.5, %v871
    %v873 = vmul.f32 %v868, %v872
    %vm874 = vweird.f32 %v815
    %vm875 = vweird.f32 %v868
    %vm876 = vmor %vm874, %vm875
    %v877 = vsel %vm876, %v868, %v873
    %v878 = vrsqrt.pop %v816
    %v879 = vmul.f32 %v878, %v816
    %v880 = vmul.f32 %v879, %v878
    %v881 = vmul.f32 0.5, %v880
    %v882 = vsub.f32 1.5, %v881
    %v883 = vmul.f32 %v878, %v882
    %vm884 = vweird.f32 %v816
    %vm885 = vweird.f32 %v878
    %vm886 = vmor %vm884, %vm885
    %v887 = vsel %vm886, %v878, %v883
    %v888 = vrsqrt.pop %v817
    %v889 = vmul.f32 %v888, %v817
    %v890 = vmul.f32 %v889, %v888
    %v891 = vmul.f32 0.5, %v890
    %v892 = vsub.f32 1.5, %v891
    %v893 = vmul.f32 %v888, %v892
    %vm894 = vweird.f32 %v817
    %vm895 = vweird.f32 %v888
    %vm896 = vmor %vm894, %vm895
    %v897 = vsel %vm896, %v888, %v893
    %v906 = vrot.slane %v837, 7
    %v907 = vrot.slane %v847, 6
    %v908 = vrot.slane %v857, 5
    %v909 = vrot.slane %v867, 4
    %v910 = vrot.slane %v877, 3
    %v911 = vrot.slane %v887, 2
    %v912 = vrot.slane %v897, 1
    %vm913 = vcmask 1040384
    %v914 = vsel %vm913, %v827, %v906
    %vm915 = vcmask 1042434
    %v916 = vsel %vm915, %v907, %v908
    %vm917 = vcmask 1041408
    %v918 = vsel %vm917, %v914, %v916
    %vm919 = vcmask 1044484
    %v920 = vsel %vm919, %v909, %v910
    %vm921 = vcmask 1046534
    %v922 = vsel %vm921, %v911, %v912
    %vm923 = vcmask 1045508
    %v924 = vsel %vm923, %v920, %v922
    %vm925 = vcmask 1043456
    %v926 = vsel %vm925, %v918, %v924
    %v928 = vmul.f32 %v809, %v926
    %v929 = vld [vmem:[%s6] sm:$0xff]
    %v931 = vperm.slane %v928, 0
    %v932 = vperm.slane %v928, 1
    %v933 = vperm.slane %v928, 2
    %v934 = vperm.slane %v928, 3
    %v935 = vperm.slane %v928, 4
    %v936 = vperm.slane %v928, 5
    %v937 = vperm.slane %v928, 6
    %v938 = vperm.slane %v928, 7
    %v947 = vmul.f32 %v713, %v931
    %v948 = vmul.f32 %v714, %v932
    %v949 = vmul.f32 %v715, %v933
    %v950 = vmul.f32 %v716, %v934
    %v951 = vmul.f32 %v717, %v935
    %v952 = vmul.f32 %v718, %v936
    %v953 = vmul.f32 %v719, %v937
    %v954 = vmul.f32 %v720, %v938
    %v963 = vrot.slane %v948, 7
    %v964 = vrot.slane %v949, 6
    %v965 = vrot.slane %v950, 5
    %v966 = vrot.slane %v951, 4
    %v967 = vrot.slane %v952, 3
    %v968 = vrot.slane %v953, 2
    %v969 = vrot.slane %v954, 1
    %v970 = vsel %vm913, %v947, %v963
    %v971 = vsel %vm915, %v964, %v965
    %v972 = vsel %vm917, %v970, %v971
    %v973 = vsel %vm919, %v966, %v967
    %v974 = vsel %vm921, %v968, %v969
    %v975 = vsel %vm923, %v973, %v974
    %v976 = vsel %vm925, %v972, %v975
    %v978 = vsub.f32 %v929, %v976
    %v979 = vmul.f32 %v571, %v931
    %v980 = vmul.f32 %v584, %v932
    %v981 = vmul.f32 %v597, %v933
    %v982 = vmul.f32 %v610, %v934
    %v983 = vmul.f32 %v623, %v935
    %v984 = vmul.f32 %v636, %v936
    %v985 = vmul.f32 %v649, %v937
    %v986 = vmul.f32 %v662, %v938
    %v988 = vperm.slane %v978, 0
    %v989 = vperm.slane %v978, 1
    %v990 = vperm.slane %v978, 2
    %v991 = vperm.slane %v978, 3
    %v992 = vperm.slane %v978, 4
    %v993 = vperm.slane %v978, 5
    %v994 = vperm.slane %v978, 6
    %v995 = vperm.slane %v978, 7
    %v1004 = vadd.f32 %v979, %v988
    %v1005 = vadd.f32 %v980, %v989
    %v1006 = vadd.f32 %v981, %v990
    %v1007 = vadd.f32 %v982, %v991
    %v1008 = vadd.f32 %v983, %v992
    %v1009 = vadd.f32 %v984, %v993
    %v1010 = vadd.f32 %v985, %v994
    %v1011 = vadd.f32 %v986, %v995
    %v1012 = vmax.f32 %v1004, 0.0
    %v1013 = vmax.f32 %v1005, 0.0
    %v1014 = vmax.f32 %v1006, 0.0
    %v1015 = vmax.f32 %v1007, 0.0
    %v1016 = vmax.f32 %v1008, 0.0
    %v1017 = vmax.f32 %v1009, 0.0
    %v1018 = vmax.f32 %v1010, 0.0
    %v1019 = vmax.f32 %v1011, 0.0
    %v1020 = vpack.c.bf16 %v1012, %v1012
    %v1021 = vpack.c.bf16 %v1013, %v1013
    %v1022 = vpack.c.bf16 %v1014, %v1014
    %v1023 = vpack.c.bf16 %v1015, %v1015
    %v1024 = vpack.c.bf16 %v1016, %v1016
    %v1025 = vpack.c.bf16 %v1017, %v1017
    %v1026 = vpack.c.bf16 %v1018, %v1018
    %v1027 = vpack.c.bf16 %v1019, %v1019
    %v1028 = vld [vmem:[#allocation4] sm:$0xff]
    %v1029 = vld [vmem:[#allocation4 + $0x8] sm:$0xff]
    %v1030 = vld [vmem:[#allocation4 + $0x10] sm:$0xff]
    %v1031 = vld [vmem:[#allocation4 + $0x18] sm:$0xff]
    %v1032 = vld [vmem:[#allocation4 + $0x20] sm:$0xff]
    %v1033 = vld [vmem:[#allocation4 + $0x28] sm:$0xff]
    %v1034 = vld [vmem:[#allocation4 + $0x30] sm:$0xff]
    %v1035 = vld [vmem:[#allocation4 + $0x38] sm:$0xff]
    %v1036 = vld [vmem:[#allocation4 + $0x40] sm:$0xff]
    %v1037 = vld [vmem:[#allocation4 + $0x48] sm:$0xff]
    %v1038 = vld [vmem:[#allocation4 + $0x50] sm:$0xff]
    %v1039 = vld [vmem:[#allocation4 + $0x58] sm:$0xff]
    %v1040 = vld [vmem:[#allocation4 + $0x60] sm:$0xff]
    %v1041 = vld [vmem:[#allocation4 + $0x68] sm:$0xff]
    %v1042 = vld [vmem:[#allocation4 + $0x70] sm:$0xff]
    %v1043 = vld [vmem:[#allocation4 + $0x78] sm:$0xff]
    %v1044 = vld [vmem:[#allocation4 + $0x80] sm:$0xff]
    %v1045 = vld [vmem:[#allocation4 + $0x88] sm:$0xff]
    %v1046 = vld [vmem:[#allocation4 + $0x90] sm:$0xff]
    %v1047 = vld [vmem:[#allocation4 + $0x98] sm:$0xff]
    %v1048 = vld [vmem:[#allocation4 + $0xa0] sm:$0xff]
    %v1049 = vld [vmem:[#allocation4 + $0xa8] sm:$0xff]
    %v1050 = vld [vmem:[#allocation4 + $0xb0] sm:$0xff]
    %v1051 = vld [vmem:[#allocation4 + $0xb8] sm:$0xff]
    %v1052 = vld [vmem:[#allocation4 + $0xc0] sm:$0xff]
    %v1053 = vld [vmem:[#allocation4 + $0xc8] sm:$0xff]
    %v1054 = vld [vmem:[#allocation4 + $0xd0] sm:$0xff]
    %v1055 = vld [vmem:[#allocation4 + $0xd8] sm:$0xff]
    %v1056 = vld [vmem:[#allocation4 + $0xe0] sm:$0xff]
    %v1057 = vld [vmem:[#allocation4 + $0xe8] sm:$0xff]
    %v1058 = vld [vmem:[#allocation4 + $0xf0] sm:$0xff]
    %v1059 = vld [vmem:[#allocation4 + $0xf8] sm:$0xff]
    %v1060 = vld [vmem:[#allocation4 + $0x100] sm:$0xff]
    %v1061 = vld [vmem:[#allocation4 + $0x108] sm:$0xff]
    %v1062 = vld [vmem:[#allocation4 + $0x110] sm:$0xff]
    %v1063 = vld [vmem:[#allocation4 + $0x118] sm:$0xff]
    %v1064 = vld [vmem:[#allocation4 + $0x120] sm:$0xff]
    %v1065 = vld [vmem:[#allocation4 + $0x128] sm:$0xff]
    %v1066 = vld [vmem:[#allocation4 + $0x130] sm:$0xff]
    %v1067 = vld [vmem:[#allocation4 + $0x138] sm:$0xff]
    %v1068 = vld [vmem:[#allocation4 + $0x140] sm:$0xff]
    %v1069 = vld [vmem:[#allocation4 + $0x148] sm:$0xff]
    %v1070 = vld [vmem:[#allocation4 + $0x150] sm:$0xff]
    %v1071 = vld [vmem:[#allocation4 + $0x158] sm:$0xff]
    %v1072 = vld [vmem:[#allocation4 + $0x160] sm:$0xff]
    %v1073 = vld [vmem:[#allocation4 + $0x168] sm:$0xff]
    %v1074 = vld [vmem:[#allocation4 + $0x170] sm:$0xff]
    %v1075 = vld [vmem:[#allocation4 + $0x178] sm:$0xff]
    %v1076 = vld [vmem:[#allocation4 + $0x180] sm:$0xff]
    %v1077 = vld [vmem:[#allocation4 + $0x188] sm:$0xff]
    %v1078 = vld [vmem:[#allocation4 + $0x190] sm:$0xff]
    %v1079 = vld [vmem:[#allocation4 + $0x198] sm:$0xff]
    %v1080 = vld [vmem:[#allocation4 + $0x1a0] sm:$0xff]
    %v1081 = vld [vmem:[#allocation4 + $0x1a8] sm:$0xff]
    %v1082 = vld [vmem:[#allocation4 + $0x1b0] sm:$0xff]
    %v1083 = vld [vmem:[#allocation4 + $0x1b8] sm:$0xff]
    %v1084 = vld [vmem:[#allocation4 + $0x1c0] sm:$0xff]
    %v1085 = vld [vmem:[#allocation4 + $0x1c8] sm:$0xff]
    %v1086 = vld [vmem:[#allocation4 + $0x1d0] sm:$0xff]
    %v1087 = vld [vmem:[#allocation4 + $0x1d8] sm:$0xff]
    %v1088 = vld [vmem:[#allocation4 + $0x1e0] sm:$0xff]
    %v1089 = vld [vmem:[#allocation4 + $0x1e8] sm:$0xff]
    %v1090 = vld [vmem:[#allocation4 + $0x1f0] sm:$0xff]
    %v1091 = vld [vmem:[#allocation4 + $0x1f8] sm:$0xff]
    %v1092 = vld [vmem:[#allocation4 + $0x200] sm:$0xff]
    %v1093 = vld [vmem:[#allocation4 + $0x208] sm:$0xff]
    %v1094 = vld [vmem:[#allocation4 + $0x210] sm:$0xff]
    %v1095 = vld [vmem:[#allocation4 + $0x218] sm:$0xff]
    %v1096 = vld [vmem:[#allocation4 + $0x220] sm:$0xff]
    %v1097 = vld [vmem:[#allocation4 + $0x228] sm:$0xff]
    %v1098 = vld [vmem:[#allocation4 + $0x230] sm:$0xff]
    %v1099 = vld [vmem:[#allocation4 + $0x238] sm:$0xff]
    %v1100 = vld [vmem:[#allocation4 + $0x240] sm:$0xff]
    %v1101 = vld [vmem:[#allocation4 + $0x248] sm:$0xff]
    %v1102 = vld [vmem:[#allocation4 + $0x250] sm:$0xff]
    %v1103 = vld [vmem:[#allocation4 + $0x258] sm:$0xff]
    %v1104 = vld [vmem:[#allocation4 + $0x260] sm:$0xff]
    %v1105 = vld [vmem:[#allocation4 + $0x268] sm:$0xff]
    %v1106 = vld [vmem:[#allocation4 + $0x270] sm:$0xff]
    %v1107 = vld [vmem:[#allocation4 + $0x278] sm:$0xff]
    %v1108 = vld [vmem:[#allocation4 + $0x280] sm:$0xff]
    %v1109 = vld [vmem:[#allocation4 + $0x288] sm:$0xff]
    %v1110 = vld [vmem:[#allocation4 + $0x290] sm:$0xff]
    %v1111 = vld [vmem:[#allocation4 + $0x298] sm:$0xff]
    %v1112 = vld [vmem:[#allocation4 + $0x2a0] sm:$0xff]
    %v1113 = vld [vmem:[#allocation4 + $0x2a8] sm:$0xff]
    %v1114 = vld [vmem:[#allocation4 + $0x2b0] sm:$0xff]
    %v1115 = vld [vmem:[#allocation4 + $0x2b8] sm:$0xff]
    %v1116 = vld [vmem:[#allocation4 + $0x2c0] sm:$0xff]
    %v1117 = vld [vmem:[#allocation4 + $0x2c8] sm:$0xff]
    %v1118 = vld [vmem:[#allocation4 + $0x2d0] sm:$0xff]
    %v1119 = vld [vmem:[#allocation4 + $0x2d8] sm:$0xff]
    %v1120 = vld [vmem:[#allocation4 + $0x2e0] sm:$0xff]
    %v1121 = vld [vmem:[#allocation4 + $0x2e8] sm:$0xff]
    %v1122 = vld [vmem:[#allocation4 + $0x2f0] sm:$0xff]
    %v1123 = vld [vmem:[#allocation4 + $0x2f8] sm:$0xff]
    %v1124 = vld [vmem:[#allocation4 + $0x300] sm:$0xff]
    %v1125 = vld [vmem:[#allocation4 + $0x308] sm:$0xff]
    %v1126 = vld [vmem:[#allocation4 + $0x310] sm:$0xff]
    %v1127 = vld [vmem:[#allocation4 + $0x318] sm:$0xff]
    %v1128 = vld [vmem:[#allocation4 + $0x320] sm:$0xff]
    %v1129 = vld [vmem:[#allocation4 + $0x328] sm:$0xff]
    %v1130 = vld [vmem:[#allocation4 + $0x330] sm:$0xff]
    %v1131 = vld [vmem:[#allocation4 + $0x338] sm:$0xff]
    %v1132 = vld [vmem:[#allocation4 + $0x340] sm:$0xff]
    %v1133 = vld [vmem:[#allocation4 + $0x348] sm:$0xff]
    %v1134 = vld [vmem:[#allocation4 + $0x350] sm:$0xff]
    %v1135 = vld [vmem:[#allocation4 + $0x358] sm:$0xff]
    %v1136 = vld [vmem:[#allocation4 + $0x360] sm:$0xff]
    %v1137 = vld [vmem:[#allocation4 + $0x368] sm:$0xff]
    %v1138 = vld [vmem:[#allocation4 + $0x370] sm:$0xff]
    %v1139 = vld [vmem:[#allocation4 + $0x378] sm:$0xff]
    %v1140 = vld [vmem:[#allocation4 + $0x380] sm:$0xff]
    %v1141 = vld [vmem:[#allocation4 + $0x388] sm:$0xff]
    %v1142 = vld [vmem:[#allocation4 + $0x390] sm:$0xff]
    %v1143 = vld [vmem:[#allocation4 + $0x398] sm:$0xff]
    %v1144 = vld [vmem:[#allocation4 + $0x3a0] sm:$0xff]
    %v1145 = vld [vmem:[#allocation4 + $0x3a8] sm:$0xff]
    %v1146 = vld [vmem:[#allocation4 + $0x3b0] sm:$0xff]
    %v1147 = vld [vmem:[#allocation4 + $0x3b8] sm:$0xff]
    %v1148 = vld [vmem:[#allocation4 + $0x3c0] sm:$0xff]
    %v1149 = vld [vmem:[#allocation4 + $0x3c8] sm:$0xff]
    %v1150 = vld [vmem:[#allocation4 + $0x3d0] sm:$0xff]
    %v1151 = vld [vmem:[#allocation4 + $0x3d8] sm:$0xff]
    %v1152 = vld [vmem:[#allocation4 + $0x3e0] sm:$0xff]
    %v1153 = vld [vmem:[#allocation4 + $0x3e8] sm:$0xff]
    %v1154 = vld [vmem:[#allocation4 + $0x3f0] sm:$0xff]
    %v1155 = vld [vmem:[#allocation4 + $0x3f8] sm:$0xff]
    %v1156 = vld [vmem:[#allocation4 + $0x400] sm:$0xff]
    %v1157 = vld [vmem:[#allocation4 + $0x408] sm:$0xff]
    %v1158 = vld [vmem:[#allocation4 + $0x410] sm:$0xff]
    %v1159 = vld [vmem:[#allocation4 + $0x418] sm:$0xff]
    %v1160 = vld [vmem:[#allocation4 + $0x420] sm:$0xff]
    %v1161 = vld [vmem:[#allocation4 + $0x428] sm:$0xff]
    %v1162 = vld [vmem:[#allocation4 + $0x430] sm:$0xff]
    %v1163 = vld [vmem:[#allocation4 + $0x438] sm:$0xff]
    %v1164 = vld [vmem:[#allocation4 + $0x440] sm:$0xff]
    %v1165 = vld [vmem:[#allocation4 + $0x448] sm:$0xff]
    %v1166 = vld [vmem:[#allocation4 + $0x450] sm:$0xff]
    %v1167 = vld [vmem:[#allocation4 + $0x458] sm:$0xff]
    %v1168 = vld [vmem:[#allocation4 + $0x460] sm:$0xff]
    %v1169 = vld [vmem:[#allocation4 + $0x468] sm:$0xff]
    %v1170 = vld [vmem:[#allocation4 + $0x470] sm:$0xff]
    %v1171 = vld [vmem:[#allocation4 + $0x478] sm:$0xff]
    %v1172 = vld [vmem:[#allocation4 + $0x480] sm:$0xff]
    %v1173 = vld [vmem:[#allocation4 + $0x488] sm:$0xff]
    %v1174 = vld [vmem:[#allocation4 + $0x490] sm:$0xff]
    %v1175 = vld [vmem:[#allocation4 + $0x498] sm:$0xff]
    %v1176 = vld [vmem:[#allocation4 + $0x4a0] sm:$0xff]
    %v1177 = vld [vmem:[#allocation4 + $0x4a8] sm:$0xff]
    %v1178 = vld [vmem:[#allocation4 + $0x4b0] sm:$0xff]
    %v1179 = vld [vmem:[#allocation4 + $0x4b8] sm:$0xff]
    %v1180 = vld [vmem:[#allocation4 + $0x4c0] sm:$0xff]
    %v1181 = vld [vmem:[#allocation4 + $0x4c8] sm:$0xff]
    %v1182 = vld [vmem:[#allocation4 + $0x4d0] sm:$0xff]
    %v1183 = vld [vmem:[#allocation4 + $0x4d8] sm:$0xff]
    %v1184 = vld [vmem:[#allocation4 + $0x4e0] sm:$0xff]
    %v1185 = vld [vmem:[#allocation4 + $0x4e8] sm:$0xff]
    %v1186 = vld [vmem:[#allocation4 + $0x4f0] sm:$0xff]
    %v1187 = vld [vmem:[#allocation4 + $0x4f8] sm:$0xff]
    %v1188 = vld [vmem:[#allocation4 + $0x500] sm:$0xff]
    %v1189 = vld [vmem:[#allocation4 + $0x508] sm:$0xff]
    %v1190 = vld [vmem:[#allocation4 + $0x510] sm:$0xff]
    %v1191 = vld [vmem:[#allocation4 + $0x518] sm:$0xff]
    %v1192 = vld [vmem:[#allocation4 + $0x520] sm:$0xff]
    %v1193 = vld [vmem:[#allocation4 + $0x528] sm:$0xff]
    %v1194 = vld [vmem:[#allocation4 + $0x530] sm:$0xff]
    %v1195 = vld [vmem:[#allocation4 + $0x538] sm:$0xff]
    %v1196 = vld [vmem:[#allocation4 + $0x540] sm:$0xff]
    %v1197 = vld [vmem:[#allocation4 + $0x548] sm:$0xff]
    %v1198 = vld [vmem:[#allocation4 + $0x550] sm:$0xff]
    %v1199 = vld [vmem:[#allocation4 + $0x558] sm:$0xff]
    %v1200 = vld [vmem:[#allocation4 + $0x560] sm:$0xff]
    %v1201 = vld [vmem:[#allocation4 + $0x568] sm:$0xff]
    %v1202 = vld [vmem:[#allocation4 + $0x570] sm:$0xff]
    %v1203 = vld [vmem:[#allocation4 + $0x578] sm:$0xff]
    %v1204 = vld [vmem:[#allocation4 + $0x580] sm:$0xff]
    %v1205 = vld [vmem:[#allocation4 + $0x588] sm:$0xff]
    %v1206 = vld [vmem:[#allocation4 + $0x590] sm:$0xff]
    %v1207 = vld [vmem:[#allocation4 + $0x598] sm:$0xff]
    %v1208 = vld [vmem:[#allocation4 + $0x5a0] sm:$0xff]
    %v1209 = vld [vmem:[#allocation4 + $0x5a8] sm:$0xff]
    %v1210 = vld [vmem:[#allocation4 + $0x5b0] sm:$0xff]
    %v1211 = vld [vmem:[#allocation4 + $0x5b8] sm:$0xff]
    %v1212 = vld [vmem:[#allocation4 + $0x5c0] sm:$0xff]
    %v1213 = vld [vmem:[#allocation4 + $0x5c8] sm:$0xff]
    %v1214 = vld [vmem:[#allocation4 + $0x5d0] sm:$0xff]
    %v1215 = vld [vmem:[#allocation4 + $0x5d8] sm:$0xff]
    %v1216 = vld [vmem:[#allocation4 + $0x5e0] sm:$0xff]
    %v1217 = vld [vmem:[#allocation4 + $0x5e8] sm:$0xff]
    %v1218 = vld [vmem:[#allocation4 + $0x5f0] sm:$0xff]
    %v1219 = vld [vmem:[#allocation4 + $0x5f8] sm:$0xff]
    %v1220 = vld [vmem:[#allocation4 + $0x600] sm:$0xff]
    %v1221 = vld [vmem:[#allocation4 + $0x608] sm:$0xff]
    %v1222 = vld [vmem:[#allocation4 + $0x610] sm:$0xff]
    %v1223 = vld [vmem:[#allocation4 + $0x618] sm:$0xff]
    %v1224 = vld [vmem:[#allocation4 + $0x620] sm:$0xff]
    %v1225 = vld [vmem:[#allocation4 + $0x628] sm:$0xff]
    %v1226 = vld [vmem:[#allocation4 + $0x630] sm:$0xff]
    %v1227 = vld [vmem:[#allocation4 + $0x638] sm:$0xff]
    %v1228 = vld [vmem:[#allocation4 + $0x640] sm:$0xff]
    %v1229 = vld [vmem:[#allocation4 + $0x648] sm:$0xff]
    %v1230 = vld [vmem:[#allocation4 + $0x650] sm:$0xff]
    %v1231 = vld [vmem:[#allocation4 + $0x658] sm:$0xff]
    %v1232 = vld [vmem:[#allocation4 + $0x660] sm:$0xff]
    %v1233 = vld [vmem:[#allocation4 + $0x668] sm:$0xff]
    %v1234 = vld [vmem:[#allocation4 + $0x670] sm:$0xff]
    %v1235 = vld [vmem:[#allocation4 + $0x678] sm:$0xff]
    %v1236 = vld [vmem:[#allocation4 + $0x680] sm:$0xff]
    %v1237 = vld [vmem:[#allocation4 + $0x688] sm:$0xff]
    %v1238 = vld [vmem:[#allocation4 + $0x690] sm:$0xff]
    %v1239 = vld [vmem:[#allocation4 + $0x698] sm:$0xff]
    %v1240 = vld [vmem:[#allocation4 + $0x6a0] sm:$0xff]
    %v1241 = vld [vmem:[#allocation4 + $0x6a8] sm:$0xff]
    %v1242 = vld [vmem:[#allocation4 + $0x6b0] sm:$0xff]
    %v1243 = vld [vmem:[#allocation4 + $0x6b8] sm:$0xff]
    %v1244 = vld [vmem:[#allocation4 + $0x6c0] sm:$0xff]
    %v1245 = vld [vmem:[#allocation4 + $0x6c8] sm:$0xff]
    %v1246 = vld [vmem:[#allocation4 + $0x6d0] sm:$0xff]
    %v1247 = vld [vmem:[#allocation4 + $0x6d8] sm:$0xff]
    %v1248 = vld [vmem:[#allocation4 + $0x6e0] sm:$0xff]
    %v1249 = vld [vmem:[#allocation4 + $0x6e8] sm:$0xff]
    %v1250 = vld [vmem:[#allocation4 + $0x6f0] sm:$0xff]
    %v1251 = vld [vmem:[#allocation4 + $0x6f8] sm:$0xff]
    %v1252 = vld [vmem:[#allocation4 + $0x700] sm:$0xff]
    %v1253 = vld [vmem:[#allocation4 + $0x708] sm:$0xff]
    %v1254 = vld [vmem:[#allocation4 + $0x710] sm:$0xff]
    %v1255 = vld [vmem:[#allocation4 + $0x718] sm:$0xff]
    %v1256 = vld [vmem:[#allocation4 + $0x720] sm:$0xff]
    %v1257 = vld [vmem:[#allocation4 + $0x728] sm:$0xff]
    %v1258 = vld [vmem:[#allocation4 + $0x730] sm:$0xff]
    %v1259 = vld [vmem:[#allocation4 + $0x738] sm:$0xff]
    %v1260 = vld [vmem:[#allocation4 + $0x740] sm:$0xff]
    %v1261 = vld [vmem:[#allocation4 + $0x748] sm:$0xff]
    %v1262 = vld [vmem:[#allocation4 + $0x750] sm:$0xff]
    %v1263 = vld [vmem:[#allocation4 + $0x758] sm:$0xff]
    %v1264 = vld [vmem:[#allocation4 + $0x760] sm:$0xff]
    %v1265 = vld [vmem:[#allocation4 + $0x768] sm:$0xff]
    %v1266 = vld [vmem:[#allocation4 + $0x770] sm:$0xff]
    %v1267 = vld [vmem:[#allocation4 + $0x778] sm:$0xff]
    %v1268 = vld [vmem:[#allocation4 + $0x780] sm:$0xff]
    %v1269 = vld [vmem:[#allocation4 + $0x788] sm:$0xff]
    %v1270 = vld [vmem:[#allocation4 + $0x790] sm:$0xff]
    %v1271 = vld [vmem:[#allocation4 + $0x798] sm:$0xff]
    %v1272 = vld [vmem:[#allocation4 + $0x7a0] sm:$0xff]
    %v1273 = vld [vmem:[#allocation4 + $0x7a8] sm:$0xff]
    %v1274 = vld [vmem:[#allocation4 + $0x7b0] sm:$0xff]
    %v1275 = vld [vmem:[#allocation4 + $0x7b8] sm:$0xff]
    %v1276 = vld [vmem:[#allocation4 + $0x7c0] sm:$0xff]
    %v1277 = vld [vmem:[#allocation4 + $0x7c8] sm:$0xff]
    %v1278 = vld [vmem:[#allocation4 + $0x7d0] sm:$0xff]
    %v1279 = vld [vmem:[#allocation4 + $0x7d8] sm:$0xff]
    %v1280 = vld [vmem:[#allocation4 + $0x7e0] sm:$0xff]
    %v1281 = vld [vmem:[#allocation4 + $0x7e8] sm:$0xff]
    %v1282 = vld [vmem:[#allocation4 + $0x7f0] sm:$0xff]
    %v1283 = vld [vmem:[#allocation4 + $0x7f8] sm:$0xff]
    %v1540 = vunpack.c.l.b16 %v1028
    %v1541 = vunpack.c.h.b16 %v1028
    %v1542 = vunpack.c.l.b16 %v1029
    %v1543 = vunpack.c.h.b16 %v1029
    %v1544 = vunpack.c.l.b16 %v1030
    %v1545 = vunpack.c.h.b16 %v1030
    %v1546 = vunpack.c.l.b16 %v1031
    %v1547 = vunpack.c.h.b16 %v1031
    %v1548 = vunpack.c.l.b16 %v1032
    %v1549 = vunpack.c.h.b16 %v1032
    %v1550 = vunpack.c.l.b16 %v1033
    %v1551 = vunpack.c.h.b16 %v1033
    %v1552 = vunpack.c.l.b16 %v1034
    %v1553 = vunpack.c.h.b16 %v1034
    %v1554 = vunpack.c.l.b16 %v1035
    %v1555 = vunpack.c.h.b16 %v1035
    %v1556 = vunpack.c.l.b16 %v1036
    %v1557 = vunpack.c.h.b16 %v1036
    %v1558 = vunpack.c.l.b16 %v1037
    %v1559 = vunpack.c.h.b16 %v1037
    %v1560 = vunpack.c.l.b16 %v1038
    %v1561 = vunpack.c.h.b16 %v1038
    %v1562 = vunpack.c.l.b16 %v1039
    %v1563 = vunpack.c.h.b16 %v1039
    %v1564 = vunpack.c.l.b16 %v1040
    %v1565 = vunpack.c.h.b16 %v1040
    %v1566 = vunpack.c.l.b16 %v1041
    %v1567 = vunpack.c.h.b16 %v1041
    %v1568 = vunpack.c.l.b16 %v1042
    %v1569 = vunpack.c.h.b16 %v1042
    %v1570 = vunpack.c.l.b16 %v1043
    %v1571 = vunpack.c.h.b16 %v1043
    %v1572 = vunpack.c.l.b16 %v1044
    %v1573 = vunpack.c.h.b16 %v1044
    %v1574 = vunpack.c.l.b16 %v1045
    %v1575 = vunpack.c.h.b16 %v1045
    %v1576 = vunpack.c.l.b16 %v1046
    %v1577 = vunpack.c.h.b16 %v1046
    %v1578 = vunpack.c.l.b16 %v1047
    %v1579 = vunpack.c.h.b16 %v1047
    %v1580 = vunpack.c.l.b16 %v1048
    %v1581 = vunpack.c.h.b16 %v1048
    %v1582 = vunpack.c.l.b16 %v1049
    %v1583 = vunpack.c.h.b16 %v1049
    %v1584 = vunpack.c.l.b16 %v1050
    %v1585 = vunpack.c.h.b16 %v1050
    %v1586 = vunpack.c.l.b16 %v1051
    %v1587 = vunpack.c.h.b16 %v1051
    %v1588 = vunpack.c.l.b16 %v1052
    %v1589 = vunpack.c.h.b16 %v1052
    %v1590 = vunpack.c.l.b16 %v1053
    %v1591 = vunpack.c.h.b16 %v1053
    %v1592 = vunpack.c.l.b16 %v1054
    %v1593 = vunpack.c.h.b16 %v1054
    %v1594 = vunpack.c.l.b16 %v1055
    %v1595 = vunpack.c.h.b16 %v1055
    %v1596 = vunpack.c.l.b16 %v1056
    %v1597 = vunpack.c.h.b16 %v1056
    %v1598 = vunpack.c.l.b16 %v1057
    %v1599 = vunpack.c.h.b16 %v1057
    %v1600 = vunpack.c.l.b16 %v1058
    %v1601 = vunpack.c.h.b16 %v1058
    %v1602 = vunpack.c.l.b16 %v1059
    %v1603 = vunpack.c.h.b16 %v1059
    %v1604 = vunpack.c.l.b16 %v1060
    %v1605 = vunpack.c.h.b16 %v1060
    %v1606 = vunpack.c.l.b16 %v1061
    %v1607 = vunpack.c.h.b16 %v1061
    %v1608 = vunpack.c.l.b16 %v1062
    %v1609 = vunpack.c.h.b16 %v1062
    %v1610 = vunpack.c.l.b16 %v1063
    %v1611 = vunpack.c.h.b16 %v1063
    %v1612 = vunpack.c.l.b16 %v1064
    %v1613 = vunpack.c.h.b16 %v1064
    %v1614 = vunpack.c.l.b16 %v1065
    %v1615 = vunpack.c.h.b16 %v1065
    %v1616 = vunpack.c.l.b16 %v1066
    %v1617 = vunpack.c.h.b16 %v1066
    %v1618 = vunpack.c.l.b16 %v1067
    %v1619 = vunpack.c.h.b16 %v1067
    %v1620 = vunpack.c.l.b16 %v1068
    %v1621 = vunpack.c.h.b16 %v1068
    %v1622 = vunpack.c.l.b16 %v1069
    %v1623 = vunpack.c.h.b16 %v1069
    %v1624 = vunpack.c.l.b16 %v1070
    %v1625 = vunpack.c.h.b16 %v1070
    %v1626 = vunpack.c.l.b16 %v1071
    %v1627 = vunpack.c.h.b16 %v1071
    %v1628 = vunpack.c.l.b16 %v1072
    %v1629 = vunpack.c.h.b16 %v1072
    %v1630 = vunpack.c.l.b16 %v1073
    %v1631 = vunpack.c.h.b16 %v1073
    %v1632 = vunpack.c.l.b16 %v1074
    %v1633 = vunpack.c.h.b16 %v1074
    %v1634 = vunpack.c.l.b16 %v1075
    %v1635 = vunpack.c.h.b16 %v1075
    %v1636 = vunpack.c.l.b16 %v1076
    %v1637 = vunpack.c.h.b16 %v1076
    %v1638 = vunpack.c.l.b16 %v1077
    %v1639 = vunpack.c.h.b16 %v1077
    %v1640 = vunpack.c.l.b16 %v1078
    %v1641 = vunpack.c.h.b16 %v1078
    %v1642 = vunpack.c.l.b16 %v1079
    %v1643 = vunpack.c.h.b16 %v1079
    %v1644 = vunpack.c.l.b16 %v1080
    %v1645 = vunpack.c.h.b16 %v1080
    %v1646 = vunpack.c.l.b16 %v1081
    %v1647 = vunpack.c.h.b16 %v1081
    %v1648 = vunpack.c.l.b16 %v1082
    %v1649 = vunpack.c.h.b16 %v1082
    %v1650 = vunpack.c.l.b16 %v1083
    %v1651 = vunpack.c.h.b16 %v1083
    %v1652 = vunpack.c.l.b16 %v1084
    %v1653 = vunpack.c.h.b16 %v1084
    %v1654 = vunpack.c.l.b16 %v1085
    %v1655 = vunpack.c.h.b16 %v1085
    %v1656 = vunpack.c.l.b16 %v1086
    %v1657 = vunpack.c.h.b16 %v1086
    %v1658 = vunpack.c.l.b16 %v1087
    %v1659 = vunpack.c.h.b16 %v1087
    %v1660 = vunpack.c.l.b16 %v1088
    %v1661 = vunpack.c.h.b16 %v1088
    %v1662 = vunpack.c.l.b16 %v1089
    %v1663 = vunpack.c.h.b16 %v1089
    %v1664 = vunpack.c.l.b16 %v1090
    %v1665 = vunpack.c.h.b16 %v1090
    %v1666 = vunpack.c.l.b16 %v1091
    %v1667 = vunpack.c.h.b16 %v1091
    %v1668 = vunpack.c.l.b16 %v1092
    %v1669 = vunpack.c.h.b16 %v1092
    %v1670 = vunpack.c.l.b16 %v1093
    %v1671 = vunpack.c.h.b16 %v1093
    %v1672 = vunpack.c.l.b16 %v1094
    %v1673 = vunpack.c.h.b16 %v1094
    %v1674 = vunpack.c.l.b16 %v1095
    %v1675 = vunpack.c.h.b16 %v1095
    %v1676 = vunpack.c.l.b16 %v1096
    %v1677 = vunpack.c.h.b16 %v1096
    %v1678 = vunpack.c.l.b16 %v1097
    %v1679 = vunpack.c.h.b16 %v1097
    %v1680 = vunpack.c.l.b16 %v1098
    %v1681 = vunpack.c.h.b16 %v1098
    %v1682 = vunpack.c.l.b16 %v1099
    %v1683 = vunpack.c.h.b16 %v1099
    %v1684 = vunpack.c.l.b16 %v1100
    %v1685 = vunpack.c.h.b16 %v1100
    %v1686 = vunpack.c.l.b16 %v1101
    %v1687 = vunpack.c.h.b16 %v1101
    %v1688 = vunpack.c.l.b16 %v1102
    %v1689 = vunpack.c.h.b16 %v1102
    %v1690 = vunpack.c.l.b16 %v1103
    %v1691 = vunpack.c.h.b16 %v1103
    %v1692 = vunpack.c.l.b16 %v1104
    %v1693 = vunpack.c.h.b16 %v1104
    %v1694 = vunpack.c.l.b16 %v1105
    %v1695 = vunpack.c.h.b16 %v1105
    %v1696 = vunpack.c.l.b16 %v1106
    %v1697 = vunpack.c.h.b16 %v1106
    %v1698 = vunpack.c.l.b16 %v1107
    %v1699 = vunpack.c.h.b16 %v1107
    %v1700 = vunpack.c.l.b16 %v1108
    %v1701 = vunpack.c.h.b16 %v1108
    %v1702 = vunpack.c.l.b16 %v1109
    %v1703 = vunpack.c.h.b16 %v1109
    %v1704 = vunpack.c.l.b16 %v1110
    %v1705 = vunpack.c.h.b16 %v1110
    %v1706 = vunpack.c.l.b16 %v1111
    %v1707 = vunpack.c.h.b16 %v1111
    %v1708 = vunpack.c.l.b16 %v1112
    %v1709 = vunpack.c.h.b16 %v1112
    %v1710 = vunpack.c.l.b16 %v1113
    %v1711 = vunpack.c.h.b16 %v1113
    %v1712 = vunpack.c.l.b16 %v1114
    %v1713 = vunpack.c.h.b16 %v1114
    %v1714 = vunpack.c.l.b16 %v1115
    %v1715 = vunpack.c.h.b16 %v1115
    %v1716 = vunpack.c.l.b16 %v1116
    %v1717 = vunpack.c.h.b16 %v1116
    %v1718 = vunpack.c.l.b16 %v1117
    %v1719 = vunpack.c.h.b16 %v1117
    %v1720 = vunpack.c.l.b16 %v1118
    %v1721 = vunpack.c.h.b16 %v1118
    %v1722 = vunpack.c.l.b16 %v1119
    %v1723 = vunpack.c.h.b16 %v1119
    %v1724 = vunpack.c.l.b16 %v1120
    %v1725 = vunpack.c.h.b16 %v1120
    %v1726 = vunpack.c.l.b16 %v1121
    %v1727 = vunpack.c.h.b16 %v1121
    %v1728 = vunpack.c.l.b16 %v1122
    %v1729 = vunpack.c.h.b16 %v1122
    %v1730 = vunpack.c.l.b16 %v1123
    %v1731 = vunpack.c.h.b16 %v1123
    %v1732 = vunpack.c.l.b16 %v1124
    %v1733 = vunpack.c.h.b16 %v1124
    %v1734 = vunpack.c.l.b16 %v1125
    %v1735 = vunpack.c.h.b16 %v1125
    %v1736 = vunpack.c.l.b16 %v1126
    %v1737 = vunpack.c.h.b16 %v1126
    %v1738 = vunpack.c.l.b16 %v1127
    %v1739 = vunpack.c.h.b16 %v1127
    %v1740 = vunpack.c.l.b16 %v1128
    %v1741 = vunpack.c.h.b16 %v1128
    %v1742 = vunpack.c.l.b16 %v1129
    %v1743 = vunpack.c.h.b16 %v1129
    %v1744 = vunpack.c.l.b16 %v1130
    %v1745 = vunpack.c.h.b16 %v1130
    %v1746 = vunpack.c.l.b16 %v1131
    %v1747 = vunpack.c.h.b16 %v1131
    %v1748 = vunpack.c.l.b16 %v1132
    %v1749 = vunpack.c.h.b16 %v1132
    %v1750 = vunpack.c.l.b16 %v1133
    %v1751 = vunpack.c.h.b16 %v1133
    %v1752 = vunpack.c.l.b16 %v1134
    %v1753 = vunpack.c.h.b16 %v1134
    %v1754 = vunpack.c.l.b16 %v1135
    %v1755 = vunpack.c.h.b16 %v1135
    %v1756 = vunpack.c.l.b16 %v1136
    %v1757 = vunpack.c.h.b16 %v1136
    %v1758 = vunpack.c.l.b16 %v1137
    %v1759 = vunpack.c.h.b16 %v1137
    %v1760 = vunpack.c.l.b16 %v1138
    %v1761 = vunpack.c.h.b16 %v1138
    %v1762 = vunpack.c.l.b16 %v1139
    %v1763 = vunpack.c.h.b16 %v1139
    %v1764 = vunpack.c.l.b16 %v1140
    %v1765 = vunpack.c.h.b16 %v1140
    %v1766 = vunpack.c.l.b16 %v1141
    %v1767 = vunpack.c.h.b16 %v1141
    %v1768 = vunpack.c.l.b16 %v1142
    %v1769 = vunpack.c.h.b16 %v1142
    %v1770 = vunpack.c.l.b16 %v1143
    %v1771 = vunpack.c.h.b16 %v1143
    %v1772 = vunpack.c.l.b16 %v1144
    %v1773 = vunpack.c.h.b16 %v1144
    %v1774 = vunpack.c.l.b16 %v1145
    %v1775 = vunpack.c.h.b16 %v1145
    %v1776 = vunpack.c.l.b16 %v1146
    %v1777 = vunpack.c.h.b16 %v1146
    %v1778 = vunpack.c.l.b16 %v1147
    %v1779 = vunpack.c.h.b16 %v1147
    %v1780 = vunpack.c.l.b16 %v1148
    %v1781 = vunpack.c.h.b16 %v1148
    %v1782 = vunpack.c.l.b16 %v1149
    %v1783 = vunpack.c.h.b16 %v1149
    %v1784 = vunpack.c.l.b16 %v1150
    %v1785 = vunpack.c.h.b16 %v1150
    %v1786 = vunpack.c.l.b16 %v1151
    %v1787 = vunpack.c.h.b16 %v1151
    %v1788 = vunpack.c.l.b16 %v1152
    %v1789 = vunpack.c.h.b16 %v1152
    %v1790 = vunpack.c.l.b16 %v1153
    %v1791 = vunpack.c.h.b16 %v1153
    %v1792 = vunpack.c.l.b16 %v1154
    %v1793 = vunpack.c.h.b16 %v1154
    %v1794 = vunpack.c.l.b16 %v1155
    %v1795 = vunpack.c.h.b16 %v1155
    %v1796 = vunpack.c.l.b16 %v1156
    %v1797 = vunpack.c.h.b16 %v1156
    %v1798 = vunpack.c.l.b16 %v1157
    %v1799 = vunpack.c.h.b16 %v1157
    %v1800 = vunpack.c.l.b16 %v1158
    %v1801 = vunpack.c.h.b16 %v1158
    %v1802 = vunpack.c.l.b16 %v1159
    %v1803 = vunpack.c.h.b16 %v1159
    %v1804 = vunpack.c.l.b16 %v1160
    %v1805 = vunpack.c.h.b16 %v1160
    %v1806 = vunpack.c.l.b16 %v1161
    %v1807 = vunpack.c.h.b16 %v1161
    %v1808 = vunpack.c.l.b16 %v1162
    %v1809 = vunpack.c.h.b16 %v1162
    %v1810 = vunpack.c.l.b16 %v1163
    %v1811 = vunpack.c.h.b16 %v1163
    %v1812 = vunpack.c.l.b16 %v1164
    %v1813 = vunpack.c.h.b16 %v1164
    %v1814 = vunpack.c.l.b16 %v1165
    %v1815 = vunpack.c.h.b16 %v1165
    %v1816 = vunpack.c.l.b16 %v1166
    %v1817 = vunpack.c.h.b16 %v1166
    %v1818 = vunpack.c.l.b16 %v1167
    %v1819 = vunpack.c.h.b16 %v1167
    %v1820 = vunpack.c.l.b16 %v1168
    %v1821 = vunpack.c.h.b16 %v1168
    %v1822 = vunpack.c.l.b16 %v1169
    %v1823 = vunpack.c.h.b16 %v1169
    %v1824 = vunpack.c.l.b16 %v1170
    %v1825 = vunpack.c.h.b16 %v1170
    %v1826 = vunpack.c.l.b16 %v1171
    %v1827 = vunpack.c.h.b16 %v1171
    %v1828 = vunpack.c.l.b16 %v1172
    %v1829 = vunpack.c.h.b16 %v1172
    %v1830 = vunpack.c.l.b16 %v1173
    %v1831 = vunpack.c.h.b16 %v1173
    %v1832 = vunpack.c.l.b16 %v1174
    %v1833 = vunpack.c.h.b16 %v1174
    %v1834 = vunpack.c.l.b16 %v1175
    %v1835 = vunpack.c.h.b16 %v1175
    %v1836 = vunpack.c.l.b16 %v1176
    %v1837 = vunpack.c.h.b16 %v1176
    %v1838 = vunpack.c.l.b16 %v1177
    %v1839 = vunpack.c.h.b16 %v1177
    %v1840 = vunpack.c.l.b16 %v1178
    %v1841 = vunpack.c.h.b16 %v1178
    %v1842 = vunpack.c.l.b16 %v1179
    %v1843 = vunpack.c.h.b16 %v1179
    %v1844 = vunpack.c.l.b16 %v1180
    %v1845 = vunpack.c.h.b16 %v1180
    %v1846 = vunpack.c.l.b16 %v1181
    %v1847 = vunpack.c.h.b16 %v1181
    %v1848 = vunpack.c.l.b16 %v1182
    %v1849 = vunpack.c.h.b16 %v1182
    %v1850 = vunpack.c.l.b16 %v1183
    %v1851 = vunpack.c.h.b16 %v1183
    %v1852 = vunpack.c.l.b16 %v1184
    %v1853 = vunpack.c.h.b16 %v1184
    %v1854 = vunpack.c.l.b16 %v1185
    %v1855 = vunpack.c.h.b16 %v1185
    %v1856 = vunpack.c.l.b16 %v1186
    %v1857 = vunpack.c.h.b16 %v1186
    %v1858 = vunpack.c.l.b16 %v1187
    %v1859 = vunpack.c.h.b16 %v1187
    %v1860 = vunpack.c.l.b16 %v1188
    %v1861 = vunpack.c.h.b16 %v1188
    %v1862 = vunpack.c.l.b16 %v1189
    %v1863 = vunpack.c.h.b16 %v1189
    %v1864 = vunpack.c.l.b16 %v1190
    %v1865 = vunpack.c.h.b16 %v1190
    %v1866 = vunpack.c.l.b16 %v1191
    %v1867 = vunpack.c.h.b16 %v1191
    %v1868 = vunpack.c.l.b16 %v1192
    %v1869 = vunpack.c.h.b16 %v1192
    %v1870 = vunpack.c.l.b16 %v1193
    %v1871 = vunpack.c.h.b16 %v1193
    %v1872 = vunpack.c.l.b16 %v1194
    %v1873 = vunpack.c.h.b16 %v1194
    %v1874 = vunpack.c.l.b16 %v1195
    %v1875 = vunpack.c.h.b16 %v1195
    %v1876 = vunpack.c.l.b16 %v1196
    %v1877 = vunpack.c.h.b16 %v1196
    %v1878 = vunpack.c.l.b16 %v1197
    %v1879 = vunpack.c.h.b16 %v1197
    %v1880 = vunpack.c.l.b16 %v1198
    %v1881 = vunpack.c.h.b16 %v1198
    %v1882 = vunpack.c.l.b16 %v1199
    %v1883 = vunpack.c.h.b16 %v1199
    %v1884 = vunpack.c.l.b16 %v1200
    %v1885 = vunpack.c.h.b16 %v1200
    %v1886 = vunpack.c.l.b16 %v1201
    %v1887 = vunpack.c.h.b16 %v1201
    %v1888 = vunpack.c.l.b16 %v1202
    %v1889 = vunpack.c.h.b16 %v1202
    %v1890 = vunpack.c.l.b16 %v1203
    %v1891 = vunpack.c.h.b16 %v1203
    %v1892 = vunpack.c.l.b16 %v1204
    %v1893 = vunpack.c.h.b16 %v1204
    %v1894 = vunpack.c.l.b16 %v1205
    %v1895 = vunpack.c.h.b16 %v1205
    %v1896 = vunpack.c.l.b16 %v1206
    %v1897 = vunpack.c.h.b16 %v1206
    %v1898 = vunpack.c.l.b16 %v1207
    %v1899 = vunpack.c.h.b16 %v1207
    %v1900 = vunpack.c.l.b16 %v1208
    %v1901 = vunpack.c.h.b16 %v1208
    %v1902 = vunpack.c.l.b16 %v1209
    %v1903 = vunpack.c.h.b16 %v1209
    %v1904 = vunpack.c.l.b16 %v1210
    %v1905 = vunpack.c.h.b16 %v1210
    %v1906 = vunpack.c.l.b16 %v1211
    %v1907 = vunpack.c.h.b16 %v1211
    %v1908 = vunpack.c.l.b16 %v1212
    %v1909 = vunpack.c.h.b16 %v1212
    %v1910 = vunpack.c.l.b16 %v1213
    %v1911 = vunpack.c.h.b16 %v1213
    %v1912 = vunpack.c.l.b16 %v1214
    %v1913 = vunpack.c.h.b16 %v1214
    %v1914 = vunpack.c.l.b16 %v1215
    %v1915 = vunpack.c.h.b16 %v1215
    %v1916 = vunpack.c.l.b16 %v1216
    %v1917 = vunpack.c.h.b16 %v1216
    %v1918 = vunpack.c.l.b16 %v1217
    %v1919 = vunpack.c.h.b16 %v1217
    %v1920 = vunpack.c.l.b16 %v1218
    %v1921 = vunpack.c.h.b16 %v1218
    %v1922 = vunpack.c.l.b16 %v1219
    %v1923 = vunpack.c.h.b16 %v1219
    %v1924 = vunpack.c.l.b16 %v1220
    %v1925 = vunpack.c.h.b16 %v1220
    %v1926 = vunpack.c.l.b16 %v1221
    %v1927 = vunpack.c.h.b16 %v1221
    %v1928 = vunpack.c.l.b16 %v1222
    %v1929 = vunpack.c.h.b16 %v1222
    %v1930 = vunpack.c.l.b16 %v1223
    %v1931 = vunpack.c.h.b16 %v1223
    %v1932 = vunpack.c.l.b16 %v1224
    %v1933 = vunpack.c.h.b16 %v1224
    %v1934 = vunpack.c.l.b16 %v1225
    %v1935 = vunpack.c.h.b16 %v1225
    %v1936 = vunpack.c.l.b16 %v1226
    %v1937 = vunpack.c.h.b16 %v1226
    %v1938 = vunpack.c.l.b16 %v1227
    %v1939 = vunpack.c.h.b16 %v1227
    %v1940 = vunpack.c.l.b16 %v1228
    %v1941 = vunpack.c.h.b16 %v1228
    %v1942 = vunpack.c.l.b16 %v1229
    %v1943 = vunpack.c.h.b16 %v1229
    %v1944 = vunpack.c.l.b16 %v1230
    %v1945 = vunpack.c.h.b16 %v1230
    %v1946 = vunpack.c.l.b16 %v1231
    %v1947 = vunpack.c.h.b16 %v1231
    %v1948 = vunpack.c.l.b16 %v1232
    %v1949 = vunpack.c.h.b16 %v1232
    %v1950 = vunpack.c.l.b16 %v1233
    %v1951 = vunpack.c.h.b16 %v1233
    %v1952 = vunpack.c.l.b16 %v1234
    %v1953 = vunpack.c.h.b16 %v1234
    %v1954 = vunpack.c.l.b16 %v1235
    %v1955 = vunpack.c.h.b16 %v1235
    %v1956 = vunpack.c.l.b16 %v1236
    %v1957 = vunpack.c.h.b16 %v1236
    %v1958 = vunpack.c.l.b16 %v1237
    %v1959 = vunpack.c.h.b16 %v1237
    %v1960 = vunpack.c.l.b16 %v1238
    %v1961 = vunpack.c.h.b16 %v1238
    %v1962 = vunpack.c.l.b16 %v1239
    %v1963 = vunpack.c.h.b16 %v1239
    %v1964 = vunpack.c.l.b16 %v1240
    %v1965 = vunpack.c.h.b16 %v1240
    %v1966 = vunpack.c.l.b16 %v1241
    %v1967 = vunpack.c.h.b16 %v1241
    %v1968 = vunpack.c.l.b16 %v1242
    %v1969 = vunpack.c.h.b16 %v1242
    %v1970 = vunpack.c.l.b16 %v1243
    %v1971 = vunpack.c.h.b16 %v1243
    %v1972 = vunpack.c.l.b16 %v1244
    %v1973 = vunpack.c.h.b16 %v1244
    %v1974 = vunpack.c.l.b16 %v1245
    %v1975 = vunpack.c.h.b16 %v1245
    %v1976 = vunpack.c.l.b16 %v1246
    %v1977 = vunpack.c.h.b16 %v1246
    %v1978 = vunpack.c.l.b16 %v1247
    %v1979 = vunpack.c.h.b16 %v1247
    %v1980 = vunpack.c.l.b16 %v1248
    %v1981 = vunpack.c.h.b16 %v1248
    %v1982 = vunpack.c.l.b16 %v1249
    %v1983 = vunpack.c.h.b16 %v1249
    %v1984 = vunpack.c.l.b16 %v1250
    %v1985 = vunpack.c.h.b16 %v1250
    %v1986 = vunpack.c.l.b16 %v1251
    %v1987 = vunpack.c.h.b16 %v1251
    %v1988 = vunpack.c.l.b16 %v1252
    %v1989 = vunpack.c.h.b16 %v1252
    %v1990 = vunpack.c.l.b16 %v1253
    %v1991 = vunpack.c.h.b16 %v1253
    %v1992 = vunpack.c.l.b16 %v1254
    %v1993 = vunpack.c.h.b16 %v1254
    %v1994 = vunpack.c.l.b16 %v1255
    %v1995 = vunpack.c.h.b16 %v1255
    %v1996 = vunpack.c.l.b16 %v1256
    %v1997 = vunpack.c.h.b16 %v1256
    %v1998 = vunpack.c.l.b16 %v1257
    %v1999 = vunpack.c.h.b16 %v1257
    %v2000 = vunpack.c.l.b16 %v1258
    %v2001 = vunpack.c.h.b16 %v1258
    %v2002 = vunpack.c.l.b16 %v1259
    %v2003 = vunpack.c.h.b16 %v1259
    %v2004 = vunpack.c.l.b16 %v1260
    %v2005 = vunpack.c.h.b16 %v1260
    %v2006 = vunpack.c.l.b16 %v1261
    %v2007 = vunpack.c.h.b16 %v1261
    %v2008 = vunpack.c.l.b16 %v1262
    %v2009 = vunpack.c.h.b16 %v1262
    %v2010 = vunpack.c.l.b16 %v1263
    %v2011 = vunpack.c.h.b16 %v1263
    %v2012 = vunpack.c.l.b16 %v1264
    %v2013 = vunpack.c.h.b16 %v1264
    %v2014 = vunpack.c.l.b16 %v1265
    %v2015 = vunpack.c.h.b16 %v1265
    %v2016 = vunpack.c.l.b16 %v1266
    %v2017 = vunpack.c.h.b16 %v1266
    %v2018 = vunpack.c.l.b16 %v1267
    %v2019 = vunpack.c.h.b16 %v1267
    %v2020 = vunpack.c.l.b16 %v1268
    %v2021 = vunpack.c.h.b16 %v1268
    %v2022 = vunpack.c.l.b16 %v1269
    %v2023 = vunpack.c.h.b16 %v1269
    %v2024 = vunpack.c.l.b16 %v1270
    %v2025 = vunpack.c.h.b16 %v1270
    %v2026 = vunpack.c.l.b16 %v1271
    %v2027 = vunpack.c.h.b16 %v1271
    %v2028 = vunpack.c.l.b16 %v1272
    %v2029 = vunpack.c.h.b16 %v1272
    %v2030 = vunpack.c.l.b16 %v1273
    %v2031 = vunpack.c.h.b16 %v1273
    %v2032 = vunpack.c.l.b16 %v1274
    %v2033 = vunpack.c.h.b16 %v1274
    %v2034 = vunpack.c.l.b16 %v1275
    %v2035 = vunpack.c.h.b16 %v1275
    %v2036 = vunpack.c.l.b16 %v1276
    %v2037 = vunpack.c.h.b16 %v1276
    %v2038 = vunpack.c.l.b16 %v1277
    %v2039 = vunpack.c.h.b16 %v1277
    %v2040 = vunpack.c.l.b16 %v1278
    %v2041 = vunpack.c.h.b16 %v1278
    %v2042 = vunpack.c.l.b16 %v1279
    %v2043 = vunpack.c.h.b16 %v1279
    %v2044 = vunpack.c.l.b16 %v1280
    %v2045 = vunpack.c.h.b16 %v1280
    %v2046 = vunpack.c.l.b16 %v1281
    %v2047 = vunpack.c.h.b16 %v1281
    %v2048 = vunpack.c.l.b16 %v1282
    %v2049 = vunpack.c.h.b16 %v1282
    %v2050 = vunpack.c.l.b16 %v1283
    %v2051 = vunpack.c.h.b16 %v1283
    %v2052 = vpack.c.b16 %v1544, %v1540
    %v2053 = vpack.c.b16 %v1545, %v1541
    %v2054 = vpack.c.b16 %v1546, %v1542
    %v2055 = vpack.c.b16 %v1547, %v1543
    %v2056 = vpack.c.b16 %v1552, %v1548
    %v2057 = vpack.c.b16 %v1553, %v1549
    %v2058 = vpack.c.b16 %v1554, %v1550
    %v2059 = vpack.c.b16 %v1555, %v1551
    %v2060 = vpack.c.b16 %v1560, %v1556
    %v2061 = vpack.c.b16 %v1561, %v1557
    %v2062 = vpack.c.b16 %v1562, %v1558
    %v2063 = vpack.c.b16 %v1563, %v1559
    %v2064 = vpack.c.b16 %v1568, %v1564
    %v2065 = vpack.c.b16 %v1569, %v1565
    %v2066 = vpack.c.b16 %v1570, %v1566
    %v2067 = vpack.c.b16 %v1571, %v1567
    %v2068 = vpack.c.b16 %v1576, %v1572
    %v2069 = vpack.c.b16 %v1577, %v1573
    %v2070 = vpack.c.b16 %v1578, %v1574
    %v2071 = vpack.c.b16 %v1579, %v1575
    %v2072 = vpack.c.b16 %v1584, %v1580
    %v2073 = vpack.c.b16 %v1585, %v1581
    %v2074 = vpack.c.b16 %v1586, %v1582
    %v2075 = vpack.c.b16 %v1587, %v1583
    %v2076 = vpack.c.b16 %v1592, %v1588
    %v2077 = vpack.c.b16 %v1593, %v1589
    %v2078 = vpack.c.b16 %v1594, %v1590
    %v2079 = vpack.c.b16 %v1595, %v1591
    %v2080 = vpack.c.b16 %v1600, %v1596
    %v2081 = vpack.c.b16 %v1601, %v1597
    %v2082 = vpack.c.b16 %v1602, %v1598
    %v2083 = vpack.c.b16 %v1603, %v1599
    %v2084 = vpack.c.b16 %v1608, %v1604
    %v2085 = vpack.c.b16 %v1609, %v1605
    %v2086 = vpack.c.b16 %v1610, %v1606
    %v2087 = vpack.c.b16 %v1611, %v1607
    %v2088 = vpack.c.b16 %v1616, %v1612
    %v2089 = vpack.c.b16 %v1617, %v1613
    %v2090 = vpack.c.b16 %v1618, %v1614
    %v2091 = vpack.c.b16 %v1619, %v1615
    %v2092 = vpack.c.b16 %v1624, %v1620
    %v2093 = vpack.c.b16 %v1625, %v1621
    %v2094 = vpack.c.b16 %v1626, %v1622
    %v2095 = vpack.c.b16 %v1627, %v1623
    %v2096 = vpack.c.b16 %v1632, %v1628
    %v2097 = vpack.c.b16 %v1633, %v1629
    %v2098 = vpack.c.b16 %v1634, %v1630
    %v2099 = vpack.c.b16 %v1635, %v1631
    %v2100 = vpack.c.b16 %v1640, %v1636
    %v2101 = vpack.c.b16 %v1641, %v1637
    %v2102 = vpack.c.b16 %v1642, %v1638
    %v2103 = vpack.c.b16 %v1643, %v1639
    %v2104 = vpack.c.b16 %v1648, %v1644
    %v2105 = vpack.c.b16 %v1649, %v1645
    %v2106 = vpack.c.b16 %v1650, %v1646
    %v2107 = vpack.c.b16 %v1651, %v1647
    %v2108 = vpack.c.b16 %v1656, %v1652
    %v2109 = vpack.c.b16 %v1657, %v1653
    %v2110 = vpack.c.b16 %v1658, %v1654
    %v2111 = vpack.c.b16 %v1659, %v1655
    %v2112 = vpack.c.b16 %v1664, %v1660
    %v2113 = vpack.c.b16 %v1665, %v1661
    %v2114 = vpack.c.b16 %v1666, %v1662
    %v2115 = vpack.c.b16 %v1667, %v1663
    %v2116 = vpack.c.b16 %v1672, %v1668
    %v2117 = vpack.c.b16 %v1673, %v1669
    %v2118 = vpack.c.b16 %v1674, %v1670
    %v2119 = vpack.c.b16 %v1675, %v1671
    %v2120 = vpack.c.b16 %v1680, %v1676
    %v2121 = vpack.c.b16 %v1681, %v1677
    %v2122 = vpack.c.b16 %v1682, %v1678
    %v2123 = vpack.c.b16 %v1683, %v1679
    %v2124 = vpack.c.b16 %v1688, %v1684
    %v2125 = vpack.c.b16 %v1689, %v1685
    %v2126 = vpack.c.b16 %v1690, %v1686
    %v2127 = vpack.c.b16 %v1691, %v1687
    %v2128 = vpack.c.b16 %v1696, %v1692
    %v2129 = vpack.c.b16 %v1697, %v1693
    %v2130 = vpack.c.b16 %v1698, %v1694
    %v2131 = vpack.c.b16 %v1699, %v1695
    %v2132 = vpack.c.b16 %v1704, %v1700
    %v2133 = vpack.c.b16 %v1705, %v1701
    %v2134 = vpack.c.b16 %v1706, %v1702
    %v2135 = vpack.c.b16 %v1707, %v1703
    %v2136 = vpack.c.b16 %v1712, %v1708
    %v2137 = vpack.c.b16 %v1713, %v1709
    %v2138 = vpack.c.b16 %v1714, %v1710
    %v2139 = vpack.c.b16 %v1715, %v1711
    %v2140 = vpack.c.b16 %v1720, %v1716
    %v2141 = vpack.c.b16 %v1721, %v1717
    %v2142 = vpack.c.b16 %v1722, %v1718
    %v2143 = vpack.c.b16 %v1723, %v1719
    %v2144 = vpack.c.b16 %v1728, %v1724
    %v2145 = vpack.c.b16 %v1729, %v1725
    %v2146 = vpack.c.b16 %v1730, %v1726
    %v2147 = vpack.c.b16 %v1731, %v1727
    %v2148 = vpack.c.b16 %v1736, %v1732
    %v2149 = vpack.c.b16 %v1737, %v1733
    %v2150 = vpack.c.b16 %v1738, %v1734
    %v2151 = vpack.c.b16 %v1739, %v1735
    %v2152 = vpack.c.b16 %v1744, %v1740
    %v2153 = vpack.c.b16 %v1745, %v1741
    %v2154 = vpack.c.b16 %v1746, %v1742
    %v2155 = vpack.c.b16 %v1747, %v1743
    %v2156 = vpack.c.b16 %v1752, %v1748
    %v2157 = vpack.c.b16 %v1753, %v1749
    %v2158 = vpack.c.b16 %v1754, %v1750
    %v2159 = vpack.c.b16 %v1755, %v1751
    %v2160 = vpack.c.b16 %v1760, %v1756
    %v2161 = vpack.c.b16 %v1761, %v1757
    %v2162 = vpack.c.b16 %v1762, %v1758
    %v2163 = vpack.c.b16 %v1763, %v1759
    %v2164 = vpack.c.b16 %v1768, %v1764
    %v2165 = vpack.c.b16 %v1769, %v1765
    %v2166 = vpack.c.b16 %v1770, %v1766
    %v2167 = vpack.c.b16 %v1771, %v1767
    %v2168 = vpack.c.b16 %v1776, %v1772
    %v2169 = vpack.c.b16 %v1777, %v1773
    %v2170 = vpack.c.b16 %v1778, %v1774
    %v2171 = vpack.c.b16 %v1779, %v1775
    %v2172 = vpack.c.b16 %v1784, %v1780
    %v2173 = vpack.c.b16 %v1785, %v1781
    %v2174 = vpack.c.b16 %v1786, %v1782
    %v2175 = vpack.c.b16 %v1787, %v1783
    %v2176 = vpack.c.b16 %v1792, %v1788
    %v2177 = vpack.c.b16 %v1793, %v1789
    %v2178 = vpack.c.b16 %v1794, %v1790
    %v2179 = vpack.c.b16 %v1795, %v1791
    %v2180 = vpack.c.b16 %v1800, %v1796
    %v2181 = vpack.c.b16 %v1801, %v1797
    %v2182 = vpack.c.b16 %v1802, %v1798
    %v2183 = vpack.c.b16 %v1803, %v1799
    %v2184 = vpack.c.b16 %v1808, %v1804
    %v2185 = vpack.c.b16 %v1809, %v1805
    %v2186 = vpack.c.b16 %v1810, %v1806
    %v2187 = vpack.c.b16 %v1811, %v1807
    %v2188 = vpack.c.b16 %v1816, %v1812
    %v2189 = vpack.c.b16 %v1817, %v1813
    %v2190 = vpack.c.b16 %v1818, %v1814
    %v2191 = vpack.c.b16 %v1819, %v1815
    %v2192 = vpack.c.b16 %v1824, %v1820
    %v2193 = vpack.c.b16 %v1825, %v1821
    %v2194 = vpack.c.b16 %v1826, %v1822
    %v2195 = vpack.c.b16 %v1827, %v1823
    %v2196 = vpack.c.b16 %v1832, %v1828
    %v2197 = vpack.c.b16 %v1833, %v1829
    %v2198 = vpack.c.b16 %v1834, %v1830
    %v2199 = vpack.c.b16 %v1835, %v1831
    %v2200 = vpack.c.b16 %v1840, %v1836
    %v2201 = vpack.c.b16 %v1841, %v1837
    %v2202 = vpack.c.b16 %v1842, %v1838
    %v2203 = vpack.c.b16 %v1843, %v1839
    %v2204 = vpack.c.b16 %v1848, %v1844
    %v2205 = vpack.c.b16 %v1849, %v1845
    %v2206 = vpack.c.b16 %v1850, %v1846
    %v2207 = vpack.c.b16 %v1851, %v1847
    %v2208 = vpack.c.b16 %v1856, %v1852
    %v2209 = vpack.c.b16 %v1857, %v1853
    %v2210 = vpack.c.b16 %v1858, %v1854
    %v2211 = vpack.c.b16 %v1859, %v1855
    %v2212 = vpack.c.b16 %v1864, %v1860
    %v2213 = vpack.c.b16 %v1865, %v1861
    %v2214 = vpack.c.b16 %v1866, %v1862
    %v2215 = vpack.c.b16 %v1867, %v1863
    %v2216 = vpack.c.b16 %v1872, %v1868
    %v2217 = vpack.c.b16 %v1873, %v1869
    %v2218 = vpack.c.b16 %v1874, %v1870
    %v2219 = vpack.c.b16 %v1875, %v1871
    %v2220 = vpack.c.b16 %v1880, %v1876
    %v2221 = vpack.c.b16 %v1881, %v1877
    %v2222 = vpack.c.b16 %v1882, %v1878
    %v2223 = vpack.c.b16 %v1883, %v1879
    %v2224 = vpack.c.b16 %v1888, %v1884
    %v2225 = vpack.c.b16 %v1889, %v1885
    %v2226 = vpack.c.b16 %v1890, %v1886
    %v2227 = vpack.c.b16 %v1891, %v1887
    %v2228 = vpack.c.b16 %v1896, %v1892
    %v2229 = vpack.c.b16 %v1897, %v1893
    %v2230 = vpack.c.b16 %v1898, %v1894
    %v2231 = vpack.c.b16 %v1899, %v1895
    %v2232 = vpack.c.b16 %v1904, %v1900
    %v2233 = vpack.c.b16 %v1905, %v1901
    %v2234 = vpack.c.b16 %v1906, %v1902
    %v2235 = vpack.c.b16 %v1907, %v1903
    %v2236 = vpack.c.b16 %v1912, %v1908
    %v2237 = vpack.c.b16 %v1913, %v1909
    %v2238 = vpack.c.b16 %v1914, %v1910
    %v2239 = vpack.c.b16 %v1915, %v1911
    %v2240 = vpack.c.b16 %v1920, %v1916
    %v2241 = vpack.c.b16 %v1921, %v1917
    %v2242 = vpack.c.b16 %v1922, %v1918
    %v2243 = vpack.c.b16 %v1923, %v1919
    %v2244 = vpack.c.b16 %v1928, %v1924
    %v2245 = vpack.c.b16 %v1929, %v1925
    %v2246 = vpack.c.b16 %v1930, %v1926
    %v2247 = vpack.c.b16 %v1931, %v1927
    %v2248 = vpack.c.b16 %v1936, %v1932
    %v2249 = vpack.c.b16 %v1937, %v1933
    %v2250 = vpack.c.b16 %v1938, %v1934
    %v2251 = vpack.c.b16 %v1939, %v1935
    %v2252 = vpack.c.b16 %v1944, %v1940
    %v2253 = vpack.c.b16 %v1945, %v1941
    %v2254 = vpack.c.b16 %v1946, %v1942
    %v2255 = vpack.c.b16 %v1947, %v1943
    %v2256 = vpack.c.b16 %v1952, %v1948
    %v2257 = vpack.c.b16 %v1953, %v1949
    %v2258 = vpack.c.b16 %v1954, %v1950
    %v2259 = vpack.c.b16 %v1955, %v1951
    %v2260 = vpack.c.b16 %v1960, %v1956
    %v2261 = vpack.c.b16 %v1961, %v1957
    %v2262 = vpack.c.b16 %v1962, %v1958
    %v2263 = vpack.c.b16 %v1963, %v1959
    %v2264 = vpack.c.b16 %v1968, %v1964
    %v2265 = vpack.c.b16 %v1969, %v1965
    %v2266 = vpack.c.b16 %v1970, %v1966
    %v2267 = vpack.c.b16 %v1971, %v1967
    %v2268 = vpack.c.b16 %v1976, %v1972
    %v2269 = vpack.c.b16 %v1977, %v1973
    %v2270 = vpack.c.b16 %v1978, %v1974
    %v2271 = vpack.c.b16 %v1979, %v1975
    %v2272 = vpack.c.b16 %v1984, %v1980
    %v2273 = vpack.c.b16 %v1985, %v1981
    %v2274 = vpack.c.b16 %v1986, %v1982
    %v2275 = vpack.c.b16 %v1987, %v1983
    %v2276 = vpack.c.b16 %v1992, %v1988
    %v2277 = vpack.c.b16 %v1993, %v1989
    %v2278 = vpack.c.b16 %v1994, %v1990
    %v2279 = vpack.c.b16 %v1995, %v1991
    %v2280 = vpack.c.b16 %v2000, %v1996
    %v2281 = vpack.c.b16 %v2001, %v1997
    %v2282 = vpack.c.b16 %v2002, %v1998
    %v2283 = vpack.c.b16 %v2003, %v1999
    %v2284 = vpack.c.b16 %v2008, %v2004
    %v2285 = vpack.c.b16 %v2009, %v2005
    %v2286 = vpack.c.b16 %v2010, %v2006
    %v2287 = vpack.c.b16 %v2011, %v2007
    %v2288 = vpack.c.b16 %v2016, %v2012
    %v2289 = vpack.c.b16 %v2017, %v2013
    %v2290 = vpack.c.b16 %v2018, %v2014
    %v2291 = vpack.c.b16 %v2019, %v2015
    %v2292 = vpack.c.b16 %v2024, %v2020
    %v2293 = vpack.c.b16 %v2025, %v2021
    %v2294 = vpack.c.b16 %v2026, %v2022
    %v2295 = vpack.c.b16 %v2027, %v2023
    %v2296 = vpack.c.b16 %v2032, %v2028
    %v2297 = vpack.c.b16 %v2033, %v2029
    %v2298 = vpack.c.b16 %v2034, %v2030
    %v2299 = vpack.c.b16 %v2035, %v2031
    %v2300 = vpack.c.b16 %v2040, %v2036
    %v2301 = vpack.c.b16 %v2041, %v2037
    %v2302 = vpack.c.b16 %v2042, %v2038
    %v2303 = vpack.c.b16 %v2043, %v2039
    %v2304 = vpack.c.b16 %v2048, %v2044
    %v2305 = vpack.c.b16 %v2049, %v2045
    %v2306 = vpack.c.b16 %v2050, %v2046
    %v2307 = vpack.c.b16 %v2051, %v2047
    %2564 = vmatpush.bf16.msra.mxu0 %v2080
    %2565 = vmatpush.bf16.msra.mxu0 %v2076
    %2566 = vmatpush.bf16.msra.mxu0 %v2072
    %2567 = vmatpush.bf16.msra.mxu0 %v2068
    %2568 = vmatpush.bf16.msra.mxu0 %v2064
    %2569 = vmatpush.bf16.msra.mxu0 %v2060
    %2570 = vmatpush.bf16.msra.mxu0 %v2056
    %2571 = vmatpush.bf16.msra.mxu0 %v2052
    %2572 = vmatmul.bf16.gmra.mxu0 %v1020
    %v2573 = vpop.f32.mrf.mxu0
    %v2574 = vadd.f32 0.0, %v2573
    %v2575 = vpop.f32.mrf.mxu0
    %2576 = vdwg.mxu0
    %2577 = vmatpush.bf16.msra.mxu0 %v2112
    %2578 = vmatpush.bf16.msra.mxu0 %v2108
    %2579 = vmatpush.bf16.msra.mxu0 %v2104
    %2580 = vmatpush.bf16.msra.mxu0 %v2100
    %2581 = vmatpush.bf16.msra.mxu0 %v2096
    %2582 = vmatpush.bf16.msra.mxu0 %v2092
    %2583 = vmatpush.bf16.msra.mxu0 %v2088
    %2584 = vmatpush.bf16.msra.mxu0 %v2084
    %2585 = vmatmul.bf16.gmra.mxu0 %v1021
    %v2586 = vpop.f32.mrf.mxu0
    %v2587 = vadd.f32 %v2574, %v2586
    %v2588 = vpop.f32.mrf.mxu0
    %2589 = vdwg.mxu0
    %2590 = vmatpush.bf16.msra.mxu0 %v2144
    %2591 = vmatpush.bf16.msra.mxu0 %v2140
    %2592 = vmatpush.bf16.msra.mxu0 %v2136
    %2593 = vmatpush.bf16.msra.mxu0 %v2132
    %2594 = vmatpush.bf16.msra.mxu0 %v2128
    %2595 = vmatpush.bf16.msra.mxu0 %v2124
    %2596 = vmatpush.bf16.msra.mxu0 %v2120
    %2597 = vmatpush.bf16.msra.mxu0 %v2116
    %2598 = vmatmul.bf16.gmra.mxu0 %v1022
    %v2599 = vpop.f32.mrf.mxu0
    %v2600 = vadd.f32 %v2587, %v2599
    %v2601 = vpop.f32.mrf.mxu0
    %2602 = vdwg.mxu0
    %2603 = vmatpush.bf16.msra.mxu0 %v2176
    %2604 = vmatpush.bf16.msra.mxu0 %v2172
    %2605 = vmatpush.bf16.msra.mxu0 %v2168
    %2606 = vmatpush.bf16.msra.mxu0 %v2164
    %2607 = vmatpush.bf16.msra.mxu0 %v2160
    %2608 = vmatpush.bf16.msra.mxu0 %v2156
    %2609 = vmatpush.bf16.msra.mxu0 %v2152
    %2610 = vmatpush.bf16.msra.mxu0 %v2148
    %2611 = vmatmul.bf16.gmra.mxu0 %v1023
    %v2612 = vpop.f32.mrf.mxu0
    %v2613 = vadd.f32 %v2600, %v2612
    %v2614 = vpop.f32.mrf.mxu0
    %2615 = vdwg.mxu0
    %2616 = vmatpush.bf16.msra.mxu0 %v2208
    %2617 = vmatpush.bf16.msra.mxu0 %v2204
    %2618 = vmatpush.bf16.msra.mxu0 %v2200
    %2619 = vmatpush.bf16.msra.mxu0 %v2196
    %2620 = vmatpush.bf16.msra.mxu0 %v2192
    %2621 = vmatpush.bf16.msra.mxu0 %v2188
    %2622 = vmatpush.bf16.msra.mxu0 %v2184
    %2623 = vmatpush.bf16.msra.mxu0 %v2180
    %2624 = vmatmul.bf16.gmra.mxu0 %v1024
    %v2625 = vpop.f32.mrf.mxu0
    %v2626 = vadd.f32 %v2613, %v2625
    %v2627 = vpop.f32.mrf.mxu0
    %2628 = vdwg.mxu0
    %2629 = vmatpush.bf16.msra.mxu0 %v2240
    %2630 = vmatpush.bf16.msra.mxu0 %v2236
    %2631 = vmatpush.bf16.msra.mxu0 %v2232
    %2632 = vmatpush.bf16.msra.mxu0 %v2228
    %2633 = vmatpush.bf16.msra.mxu0 %v2224
    %2634 = vmatpush.bf16.msra.mxu0 %v2220
    %2635 = vmatpush.bf16.msra.mxu0 %v2216
    %2636 = vmatpush.bf16.msra.mxu0 %v2212
    %2637 = vmatmul.bf16.gmra.mxu0 %v1025
    %v2638 = vpop.f32.mrf.mxu0
    %v2639 = vadd.f32 %v2626, %v2638
    %v2640 = vpop.f32.mrf.mxu0
    %2641 = vdwg.mxu0
    %2642 = vmatpush.bf16.msra.mxu0 %v2272
    %2643 = vmatpush.bf16.msra.mxu0 %v2268
    %2644 = vmatpush.bf16.msra.mxu0 %v2264
    %2645 = vmatpush.bf16.msra.mxu0 %v2260
    %2646 = vmatpush.bf16.msra.mxu0 %v2256
    %2647 = vmatpush.bf16.msra.mxu0 %v2252
    %2648 = vmatpush.bf16.msra.mxu0 %v2248
    %2649 = vmatpush.bf16.msra.mxu0 %v2244
    %2650 = vmatmul.bf16.gmra.mxu0 %v1026
    %v2651 = vpop.f32.mrf.mxu0
    %v2652 = vadd.f32 %v2639, %v2651
    %v2653 = vpop.f32.mrf.mxu0
    %2654 = vdwg.mxu0
    %2655 = vmatpush.bf16.msra.mxu0 %v2304
    %2656 = vmatpush.bf16.msra.mxu0 %v2300
    %2657 = vmatpush.bf16.msra.mxu0 %v2296
    %2658 = vmatpush.bf16.msra.mxu0 %v2292
    %2659 = vmatpush.bf16.msra.mxu0 %v2288
    %2660 = vmatpush.bf16.msra.mxu0 %v2284
    %2661 = vmatpush.bf16.msra.mxu0 %v2280
    %2662 = vmatpush.bf16.msra.mxu0 %v2276
    %2663 = vmatmul.bf16.gmra.mxu0 %v1027
    %v2664 = vpop.f32.mrf.mxu0
    %v2665 = vadd.f32 %v2652, %v2664
    %v2666 = vpop.f32.mrf.mxu0
    %2667 = vdwg.mxu0
    %2668 = vmatpush.bf16.msra.mxu0 %v2081
    %2669 = vmatpush.bf16.msra.mxu0 %v2077
    %2670 = vmatpush.bf16.msra.mxu0 %v2073
    %2671 = vmatpush.bf16.msra.mxu0 %v2069
    %2672 = vmatpush.bf16.msra.mxu0 %v2065
    %2673 = vmatpush.bf16.msra.mxu0 %v2061
    %2674 = vmatpush.bf16.msra.mxu0 %v2057
    %2675 = vmatpush.bf16.msra.mxu0 %v2053
    %2676 = vmatmul.bf16.gmra.mxu0 %v1020
    %v2677 = vpop.f32.mrf.mxu0
    %v2678 = vadd.f32 0.0, %v2677
    %v2679 = vpop.f32.mrf.mxu0
    %2680 = vdwg.mxu0
    %2681 = vmatpush.bf16.msra.mxu0 %v2113
    %2682 = vmatpush.bf16.msra.mxu0 %v2109
    %2683 = vmatpush.bf16.msra.mxu0 %v2105
    %2684 = vmatpush.bf16.msra.mxu0 %v2101
    %2685 = vmatpush.bf16.msra.mxu0 %v2097
    %2686 = vmatpush.bf16.msra.mxu0 %v2093
    %2687 = vmatpush.bf16.msra.mxu0 %v2089
    %2688 = vmatpush.bf16.msra.mxu0 %v2085
    %2689 = vmatmul.bf16.gmra.mxu0 %v1021
    %v2690 = vpop.f32.mrf.mxu0
    %v2691 = vadd.f32 %v2678, %v2690
    %v2692 = vpop.f32.mrf.mxu0
    %2693 = vdwg.mxu0
    %2694 = vmatpush.bf16.msra.mxu0 %v2145
    %2695 = vmatpush.bf16.msra.mxu0 %v2141
    %2696 = vmatpush.bf16.msra.mxu0 %v2137
    %2697 = vmatpush.bf16.msra.mxu0 %v2133
    %2698 = vmatpush.bf16.msra.mxu0 %v2129
    %2699 = vmatpush.bf16.msra.mxu0 %v2125
    %2700 = vmatpush.bf16.msra.mxu0 %v2121
    %2701 = vmatpush.bf16.msra.mxu0 %v2117
    %2702 = vmatmul.bf16.gmra.mxu0 %v1022
    %v2703 = vpop.f32.mrf.mxu0
    %v2704 = vadd.f32 %v2691, %v2703
    %v2705 = vpop.f32.mrf.mxu0
    %2706 = vdwg.mxu0
    %2707 = vmatpush.bf16.msra.mxu0 %v2177
    %2708 = vmatpush.bf16.msra.mxu0 %v2173
    %2709 = vmatpush.bf16.msra.mxu0 %v2169
    %2710 = vmatpush.bf16.msra.mxu0 %v2165
    %2711 = vmatpush.bf16.msra.mxu0 %v2161
    %2712 = vmatpush.bf16.msra.mxu0 %v2157
    %2713 = vmatpush.bf16.msra.mxu0 %v2153
    %2714 = vmatpush.bf16.msra.mxu0 %v2149
    %2715 = vmatmul.bf16.gmra.mxu0 %v1023
    %v2716 = vpop.f32.mrf.mxu0
    %v2717 = vadd.f32 %v2704, %v2716
    %v2718 = vpop.f32.mrf.mxu0
    %2719 = vdwg.mxu0
    %2720 = vmatpush.bf16.msra.mxu0 %v2209
    %2721 = vmatpush.bf16.msra.mxu0 %v2205
    %2722 = vmatpush.bf16.msra.mxu0 %v2201
    %2723 = vmatpush.bf16.msra.mxu0 %v2197
    %2724 = vmatpush.bf16.msra.mxu0 %v2193
    %2725 = vmatpush.bf16.msra.mxu0 %v2189
    %2726 = vmatpush.bf16.msra.mxu0 %v2185
    %2727 = vmatpush.bf16.msra.mxu0 %v2181
    %2728 = vmatmul.bf16.gmra.mxu0 %v1024
    %v2729 = vpop.f32.mrf.mxu0
    %v2730 = vadd.f32 %v2717, %v2729
    %v2731 = vpop.f32.mrf.mxu0
    %2732 = vdwg.mxu0
    %2733 = vmatpush.bf16.msra.mxu0 %v2241
    %2734 = vmatpush.bf16.msra.mxu0 %v2237
    %2735 = vmatpush.bf16.msra.mxu0 %v2233
    %2736 = vmatpush.bf16.msra.mxu0 %v2229
    %2737 = vmatpush.bf16.msra.mxu0 %v2225
    %2738 = vmatpush.bf16.msra.mxu0 %v2221
    %2739 = vmatpush.bf16.msra.mxu0 %v2217
    %2740 = vmatpush.bf16.msra.mxu0 %v2213
    %2741 = vmatmul.bf16.gmra.mxu0 %v1025
    %v2742 = vpop.f32.mrf.mxu0
    %v2743 = vadd.f32 %v2730, %v2742
    %v2744 = vpop.f32.mrf.mxu0
    %2745 = vdwg.mxu0
    %2746 = vmatpush.bf16.msra.mxu0 %v2273
    %2747 = vmatpush.bf16.msra.mxu0 %v2269
    %2748 = vmatpush.bf16.msra.mxu0 %v2265
    %2749 = vmatpush.bf16.msra.mxu0 %v2261
    %2750 = vmatpush.bf16.msra.mxu0 %v2257
    %2751 = vmatpush.bf16.msra.mxu0 %v2253
    %2752 = vmatpush.bf16.msra.mxu0 %v2249
    %2753 = vmatpush.bf16.msra.mxu0 %v2245
    %2754 = vmatmul.bf16.gmra.mxu0 %v1026
    %v2755 = vpop.f32.mrf.mxu0
    %v2756 = vadd.f32 %v2743, %v2755
    %v2757 = vpop.f32.mrf.mxu0
    %2758 = vdwg.mxu0
    %2759 = vmatpush.bf16.msra.mxu0 %v2305
    %2760 = vmatpush.bf16.msra.mxu0 %v2301
    %2761 = vmatpush.bf16.msra.mxu0 %v2297
    %2762 = vmatpush.bf16.msra.mxu0 %v2293
    %2763 = vmatpush.bf16.msra.mxu0 %v2289
    %2764 = vmatpush.bf16.msra.mxu0 %v2285
    %2765 = vmatpush.bf16.msra.mxu0 %v2281
    %2766 = vmatpush.bf16.msra.mxu0 %v2277
    %2767 = vmatmul.bf16.gmra.mxu0 %v1027
    %v2768 = vpop.f32.mrf.mxu0
    %v2769 = vadd.f32 %v2756, %v2768
    %v2770 = vpop.f32.mrf.mxu0
    %2771 = vdwg.mxu0
    %2772 = vmatpush.bf16.msra.mxu0 %v2082
    %2773 = vmatpush.bf16.msra.mxu0 %v2078
    %2774 = vmatpush.bf16.msra.mxu0 %v2074
    %2775 = vmatpush.bf16.msra.mxu0 %v2070
    %2776 = vmatpush.bf16.msra.mxu0 %v2066
    %2777 = vmatpush.bf16.msra.mxu0 %v2062
    %2778 = vmatpush.bf16.msra.mxu0 %v2058
    %2779 = vmatpush.bf16.msra.mxu0 %v2054
    %2780 = vmatmul.bf16.gmra.mxu0 %v1020
    %v2781 = vpop.f32.mrf.mxu0
    %v2782 = vadd.f32 0.0, %v2781
    %v2783 = vpop.f32.mrf.mxu0
    %2784 = vdwg.mxu0
    %2785 = vmatpush.bf16.msra.mxu0 %v2114
    %2786 = vmatpush.bf16.msra.mxu0 %v2110
    %2787 = vmatpush.bf16.msra.mxu0 %v2106
    %2788 = vmatpush.bf16.msra.mxu0 %v2102
    %2789 = vmatpush.bf16.msra.mxu0 %v2098
    %2790 = vmatpush.bf16.msra.mxu0 %v2094
    %2791 = vmatpush.bf16.msra.mxu0 %v2090
    %2792 = vmatpush.bf16.msra.mxu0 %v2086
    %2793 = vmatmul.bf16.gmra.mxu0 %v1021
    %v2794 = vpop.f32.mrf.mxu0
    %v2795 = vadd.f32 %v2782, %v2794
    %v2796 = vpop.f32.mrf.mxu0
    %2797 = vdwg.mxu0
    %2798 = vmatpush.bf16.msra.mxu0 %v2146
    %2799 = vmatpush.bf16.msra.mxu0 %v2142
    %2800 = vmatpush.bf16.msra.mxu0 %v2138
    %2801 = vmatpush.bf16.msra.mxu0 %v2134
    %2802 = vmatpush.bf16.msra.mxu0 %v2130
    %2803 = vmatpush.bf16.msra.mxu0 %v2126
    %2804 = vmatpush.bf16.msra.mxu0 %v2122
    %2805 = vmatpush.bf16.msra.mxu0 %v2118
    %2806 = vmatmul.bf16.gmra.mxu0 %v1022
    %v2807 = vpop.f32.mrf.mxu0
    %v2808 = vadd.f32 %v2795, %v2807
    %v2809 = vpop.f32.mrf.mxu0
    %2810 = vdwg.mxu0
    %2811 = vmatpush.bf16.msra.mxu0 %v2178
    %2812 = vmatpush.bf16.msra.mxu0 %v2174
    %2813 = vmatpush.bf16.msra.mxu0 %v2170
    %2814 = vmatpush.bf16.msra.mxu0 %v2166
    %2815 = vmatpush.bf16.msra.mxu0 %v2162
    %2816 = vmatpush.bf16.msra.mxu0 %v2158
    %2817 = vmatpush.bf16.msra.mxu0 %v2154
    %2818 = vmatpush.bf16.msra.mxu0 %v2150
    %2819 = vmatmul.bf16.gmra.mxu0 %v1023
    %v2820 = vpop.f32.mrf.mxu0
    %v2821 = vadd.f32 %v2808, %v2820
    %v2822 = vpop.f32.mrf.mxu0
    %2823 = vdwg.mxu0
    %2824 = vmatpush.bf16.msra.mxu0 %v2210
    %2825 = vmatpush.bf16.msra.mxu0 %v2206
    %2826 = vmatpush.bf16.msra.mxu0 %v2202
    %2827 = vmatpush.bf16.msra.mxu0 %v2198
    %2828 = vmatpush.bf16.msra.mxu0 %v2194
    %2829 = vmatpush.bf16.msra.mxu0 %v2190
    %2830 = vmatpush.bf16.msra.mxu0 %v2186
    %2831 = vmatpush.bf16.msra.mxu0 %v2182
    %2832 = vmatmul.bf16.gmra.mxu0 %v1024
    %v2833 = vpop.f32.mrf.mxu0
    %v2834 = vadd.f32 %v2821, %v2833
    %v2835 = vpop.f32.mrf.mxu0
    %2836 = vdwg.mxu0
    %2837 = vmatpush.bf16.msra.mxu0 %v2242
    %2838 = vmatpush.bf16.msra.mxu0 %v2238
    %2839 = vmatpush.bf16.msra.mxu0 %v2234
    %2840 = vmatpush.bf16.msra.mxu0 %v2230
    %2841 = vmatpush.bf16.msra.mxu0 %v2226
    %2842 = vmatpush.bf16.msra.mxu0 %v2222
    %2843 = vmatpush.bf16.msra.mxu0 %v2218
    %2844 = vmatpush.bf16.msra.mxu0 %v2214
    %2845 = vmatmul.bf16.gmra.mxu0 %v1025
    %v2846 = vpop.f32.mrf.mxu0
    %v2847 = vadd.f32 %v2834, %v2846
    %v2848 = vpop.f32.mrf.mxu0
    %2849 = vdwg.mxu0
    %2850 = vmatpush.bf16.msra.mxu0 %v2274
    %2851 = vmatpush.bf16.msra.mxu0 %v2270
    %2852 = vmatpush.bf16.msra.mxu0 %v2266
    %2853 = vmatpush.bf16.msra.mxu0 %v2262
    %2854 = vmatpush.bf16.msra.mxu0 %v2258
    %2855 = vmatpush.bf16.msra.mxu0 %v2254
    %2856 = vmatpush.bf16.msra.mxu0 %v2250
    %2857 = vmatpush.bf16.msra.mxu0 %v2246
    %2858 = vmatmul.bf16.gmra.mxu0 %v1026
    %v2859 = vpop.f32.mrf.mxu0
    %v2860 = vadd.f32 %v2847, %v2859
    %v2861 = vpop.f32.mrf.mxu0
    %2862 = vdwg.mxu0
    %2863 = vmatpush.bf16.msra.mxu0 %v2306
    %2864 = vmatpush.bf16.msra.mxu0 %v2302
    %2865 = vmatpush.bf16.msra.mxu0 %v2298
    %2866 = vmatpush.bf16.msra.mxu0 %v2294
    %2867 = vmatpush.bf16.msra.mxu0 %v2290
    %2868 = vmatpush.bf16.msra.mxu0 %v2286
    %2869 = vmatpush.bf16.msra.mxu0 %v2282
    %2870 = vmatpush.bf16.msra.mxu0 %v2278
    %2871 = vmatmul.bf16.gmra.mxu0 %v1027
    %v2872 = vpop.f32.mrf.mxu0
    %v2873 = vadd.f32 %v2860, %v2872
    %v2874 = vpop.f32.mrf.mxu0
    %2875 = vdwg.mxu0
    %2876 = vmatpush.bf16.msra.mxu0 %v2083
    %2877 = vmatpush.bf16.msra.mxu0 %v2079
    %2878 = vmatpush.bf16.msra.mxu0 %v2075
    %2879 = vmatpush.bf16.msra.mxu0 %v2071
    %2880 = vmatpush.bf16.msra.mxu0 %v2067
    %2881 = vmatpush.bf16.msra.mxu0 %v2063
    %2882 = vmatpush.bf16.msra.mxu0 %v2059
    %2883 = vmatpush.bf16.msra.mxu0 %v2055
    %2884 = vmatmul.bf16.gmra.mxu0 %v1020
    %v2885 = vpop.f32.mrf.mxu0
    %v2886 = vadd.f32 0.0, %v2885
    %v2887 = vpop.f32.mrf.mxu0
    %2888 = vdwg.mxu0
    %2889 = vmatpush.bf16.msra.mxu0 %v2115
    %2890 = vmatpush.bf16.msra.mxu0 %v2111
    %2891 = vmatpush.bf16.msra.mxu0 %v2107
    %2892 = vmatpush.bf16.msra.mxu0 %v2103
    %2893 = vmatpush.bf16.msra.mxu0 %v2099
    %2894 = vmatpush.bf16.msra.mxu0 %v2095
    %2895 = vmatpush.bf16.msra.mxu0 %v2091
    %2896 = vmatpush.bf16.msra.mxu0 %v2087
    %2897 = vmatmul.bf16.gmra.mxu0 %v1021
    %v2898 = vpop.f32.mrf.mxu0
    %v2899 = vadd.f32 %v2886, %v2898
    %v2900 = vpop.f32.mrf.mxu0
    %2901 = vdwg.mxu0
    %2902 = vmatpush.bf16.msra.mxu0 %v2147
    %2903 = vmatpush.bf16.msra.mxu0 %v2143
    %2904 = vmatpush.bf16.msra.mxu0 %v2139
    %2905 = vmatpush.bf16.msra.mxu0 %v2135
    %2906 = vmatpush.bf16.msra.mxu0 %v2131
    %2907 = vmatpush.bf16.msra.mxu0 %v2127
    %2908 = vmatpush.bf16.msra.mxu0 %v2123
    %2909 = vmatpush.bf16.msra.mxu0 %v2119
    %2910 = vmatmul.bf16.gmra.mxu0 %v1022
    %v2911 = vpop.f32.mrf.mxu0
    %v2912 = vadd.f32 %v2899, %v2911
    %v2913 = vpop.f32.mrf.mxu0
    %2914 = vdwg.mxu0
    %2915 = vmatpush.bf16.msra.mxu0 %v2179
    %2916 = vmatpush.bf16.msra.mxu0 %v2175
    %2917 = vmatpush.bf16.msra.mxu0 %v2171
    %2918 = vmatpush.bf16.msra.mxu0 %v2167
    %2919 = vmatpush.bf16.msra.mxu0 %v2163
    %2920 = vmatpush.bf16.msra.mxu0 %v2159
    %2921 = vmatpush.bf16.msra.mxu0 %v2155
    %2922 = vmatpush.bf16.msra.mxu0 %v2151
    %2923 = vmatmul.bf16.gmra.mxu0 %v1023
    %v2924 = vpop.f32.mrf.mxu0
    %v2925 = vadd.f32 %v2912, %v2924
    %v2926 = vpop.f32.mrf.mxu0
    %2927 = vdwg.mxu0
    %2928 = vmatpush.bf16.msra.mxu0 %v2211
    %2929 = vmatpush.bf16.msra.mxu0 %v2207
    %2930 = vmatpush.bf16.msra.mxu0 %v2203
    %2931 = vmatpush.bf16.msra.mxu0 %v2199
    %2932 = vmatpush.bf16.msra.mxu0 %v2195
    %2933 = vmatpush.bf16.msra.mxu0 %v2191
    %2934 = vmatpush.bf16.msra.mxu0 %v2187
    %2935 = vmatpush.bf16.msra.mxu0 %v2183
    %2936 = vmatmul.bf16.gmra.mxu0 %v1024
    %v2937 = vpop.f32.mrf.mxu0
    %v2938 = vadd.f32 %v2925, %v2937
    %v2939 = vpop.f32.mrf.mxu0
    %2940 = vdwg.mxu0
    %2941 = vmatpush.bf16.msra.mxu0 %v2243
    %2942 = vmatpush.bf16.msra.mxu0 %v2239
    %2943 = vmatpush.bf16.msra.mxu0 %v2235
    %2944 = vmatpush.bf16.msra.mxu0 %v2231
    %2945 = vmatpush.bf16.msra.mxu0 %v2227
    %2946 = vmatpush.bf16.msra.mxu0 %v2223
    %2947 = vmatpush.bf16.msra.mxu0 %v2219
    %2948 = vmatpush.bf16.msra.mxu0 %v2215
    %2949 = vmatmul.bf16.gmra.mxu0 %v1025
    %v2950 = vpop.f32.mrf.mxu0
    %v2951 = vadd.f32 %v2938, %v2950
    %v2952 = vpop.f32.mrf.mxu0
    %2953 = vdwg.mxu0
    %2954 = vmatpush.bf16.msra.mxu0 %v2275
    %2955 = vmatpush.bf16.msra.mxu0 %v2271
    %2956 = vmatpush.bf16.msra.mxu0 %v2267
    %2957 = vmatpush.bf16.msra.mxu0 %v2263
    %2958 = vmatpush.bf16.msra.mxu0 %v2259
    %2959 = vmatpush.bf16.msra.mxu0 %v2255
    %2960 = vmatpush.bf16.msra.mxu0 %v2251
    %2961 = vmatpush.bf16.msra.mxu0 %v2247
    %2962 = vmatmul.bf16.gmra.mxu0 %v1026
    %v2963 = vpop.f32.mrf.mxu0
    %v2964 = vadd.f32 %v2951, %v2963
    %v2965 = vpop.f32.mrf.mxu0
    %2966 = vdwg.mxu0
    %2967 = vmatpush.bf16.msra.mxu0 %v2307
    %2968 = vmatpush.bf16.msra.mxu0 %v2303
    %2969 = vmatpush.bf16.msra.mxu0 %v2299
    %2970 = vmatpush.bf16.msra.mxu0 %v2295
    %2971 = vmatpush.bf16.msra.mxu0 %v2291
    %2972 = vmatpush.bf16.msra.mxu0 %v2287
    %2973 = vmatpush.bf16.msra.mxu0 %v2283
    %2974 = vmatpush.bf16.msra.mxu0 %v2279
    %2975 = vmatmul.bf16.gmra.mxu0 %v1027
    %v2976 = vpop.f32.mrf.mxu0
    %v2977 = vadd.f32 %v2964, %v2976
    %v2978 = vpop.f32.mrf.mxu0
    %2979 = vdwg.mxu0
    %v2980 = vrot.slane %v2665, 4
    %v2981 = vadd.f32 %v2665, %v2980
    %v2982 = vrot.slane %v2981, 2
    %v2983 = vadd.f32 %v2981, %v2982
    %v2984 = vrot.slane %v2983, 1
    %v2985 = vadd.f32 %v2983, %v2984
    %v2986 = vrot.slane %v2769, 4
    %v2987 = vadd.f32 %v2769, %v2986
    %v2988 = vrot.slane %v2987, 2
    %v2989 = vadd.f32 %v2987, %v2988
    %v2990 = vrot.slane %v2989, 1
    %v2991 = vadd.f32 %v2989, %v2990
    %v2992 = vrot.slane %v2873, 4
    %v2993 = vadd.f32 %v2873, %v2992
    %v2994 = vrot.slane %v2993, 2
    %v2995 = vadd.f32 %v2993, %v2994
    %v2996 = vrot.slane %v2995, 1
    %v2997 = vadd.f32 %v2995, %v2996
    %v2998 = vrot.slane %v2977, 4
    %v2999 = vadd.f32 %v2977, %v2998
    %v3000 = vrot.slane %v2999, 2
    %v3001 = vadd.f32 %v2999, %v3000
    %v3002 = vrot.slane %v3001, 1
    %v3003 = vadd.f32 %v3001, %v3002
    %v3004 = vmul.f32 %v2985, 0.125
    %v3005 = vmul.f32 %v2991, 0.125
    %v3006 = vmul.f32 %v2997, 0.125
    %v3007 = vmul.f32 %v3003, 0.125
    %v3008 = vmul.f32 %v2665, %v2665
    %v3009 = vmul.f32 %v2769, %v2769
    %v3010 = vmul.f32 %v2873, %v2873
    %v3011 = vmul.f32 %v2977, %v2977
    %v3012 = vrot.slane %v3008, 4
    %v3013 = vadd.f32 %v3008, %v3012
    %v3014 = vrot.slane %v3013, 2
    %v3015 = vadd.f32 %v3013, %v3014
    %v3016 = vrot.slane %v3015, 1
    %v3017 = vadd.f32 %v3015, %v3016
    %v3018 = vrot.slane %v3009, 4
    %v3019 = vadd.f32 %v3009, %v3018
    %v3020 = vrot.slane %v3019, 2
    %v3021 = vadd.f32 %v3019, %v3020
    %v3022 = vrot.slane %v3021, 1
    %v3023 = vadd.f32 %v3021, %v3022
    %v3024 = vrot.slane %v3010, 4
    %v3025 = vadd.f32 %v3010, %v3024
    %v3026 = vrot.slane %v3025, 2
    %v3027 = vadd.f32 %v3025, %v3026
    %v3028 = vrot.slane %v3027, 1
    %v3029 = vadd.f32 %v3027, %v3028
    %v3030 = vrot.slane %v3011, 4
    %v3031 = vadd.f32 %v3011, %v3030
    %v3032 = vrot.slane %v3031, 2
    %v3033 = vadd.f32 %v3031, %v3032
    %v3034 = vrot.slane %v3033, 1
    %v3035 = vadd.f32 %v3033, %v3034
    %v3036 = vmul.f32 %v3017, 0.125
    %v3037 = vmul.f32 %v3023, 0.125
    %v3038 = vmul.f32 %v3029, 0.125
    %v3039 = vmul.f32 %v3035, 0.125
    %v3040 = vmul.f32 %v3004, %v3004
    %v3041 = vmul.f32 %v3005, %v3005
    %v3042 = vmul.f32 %v3006, %v3006
    %v3043 = vmul.f32 %v3007, %v3007
    %v3044 = vsub.f32 %v3036, %v3040
    %v3045 = vsub.f32 %v3037, %v3041
    %v3046 = vsub.f32 %v3038, %v3042
    %v3047 = vsub.f32 %v3039, %v3043
    %v3048 = vmax.f32 %v3044, 0.0
    %v3049 = vmax.f32 %v3045, 0.0
    %v3050 = vmax.f32 %v3046, 0.0
    %v3051 = vmax.f32 %v3047, 0.0
    %v3052 = vld [vmem:[%s8] sm:$0xf]
    %v3053 = vadd.f32 %v3048, 1e-05
    %v3054 = vadd.f32 %v3049, 1e-05
    %v3055 = vadd.f32 %v3050, 1e-05
    %v3056 = vadd.f32 %v3051, 1e-05
    %v3057 = vrsqrt.pop %v3053
    %v3058 = vmul.f32 %v3057, %v3053
    %v3059 = vmul.f32 %v3058, %v3057
    %v3060 = vmul.f32 0.5, %v3059
    %v3061 = vsub.f32 1.5, %v3060
    %v3062 = vmul.f32 %v3057, %v3061
    %vm3063 = vweird.f32 %v3053
    %vm3064 = vweird.f32 %v3057
    %vm3065 = vmor %vm3063, %vm3064
    %v3066 = vsel %vm3065, %v3057, %v3062
    %v3067 = vrsqrt.pop %v3054
    %v3068 = vmul.f32 %v3067, %v3054
    %v3069 = vmul.f32 %v3068, %v3067
    %v3070 = vmul.f32 0.5, %v3069
    %v3071 = vsub.f32 1.5, %v3070
    %v3072 = vmul.f32 %v3067, %v3071
    %vm3073 = vweird.f32 %v3054
    %vm3074 = vweird.f32 %v3067
    %vm3075 = vmor %vm3073, %vm3074
    %v3076 = vsel %vm3075, %v3067, %v3072
    %v3077 = vrsqrt.pop %v3055
    %v3078 = vmul.f32 %v3077, %v3055
    %v3079 = vmul.f32 %v3078, %v3077
    %v3080 = vmul.f32 0.5, %v3079
    %v3081 = vsub.f32 1.5, %v3080
    %v3082 = vmul.f32 %v3077, %v3081
    %vm3083 = vweird.f32 %v3055
    %vm3084 = vweird.f32 %v3077
    %vm3085 = vmor %vm3083, %vm3084
    %v3086 = vsel %vm3085, %v3077, %v3082
    %v3087 = vrsqrt.pop %v3056
    %v3088 = vmul.f32 %v3087, %v3056
    %v3089 = vmul.f32 %v3088, %v3087
    %v3090 = vmul.f32 0.5, %v3089
    %v3091 = vsub.f32 1.5, %v3090
    %v3092 = vmul.f32 %v3087, %v3091
    %vm3093 = vweird.f32 %v3056
    %vm3094 = vweird.f32 %v3087
    %vm3095 = vmor %vm3093, %vm3094
    %v3096 = vsel %vm3095, %v3087, %v3092
    %v3101 = vrot.slane %v3076, 7
    %v3102 = vrot.slane %v3086, 6
    %v3103 = vrot.slane %v3096, 5
    %v3104 = vsel %vm913, %v3066, %v3101
    %v3105 = vsel %vm915, %v3102, %v3103
    %v3106 = vsel %vm917, %v3104, %v3105
    %v3108 = vmul.f32 %v3052, %v3106
    %v3109 = vld [vmem:[%s9] sm:$0xf]
    %v3111 = vperm.slane %v3108, 0
    %v3112 = vperm.slane %v3108, 1
    %v3113 = vperm.slane %v3108, 2
    %v3114 = vperm.slane %v3108, 3
    %v3119 = vmul.f32 %v3004, %v3111
    %v3120 = vmul.f32 %v3005, %v3112
    %v3121 = vmul.f32 %v3006, %v3113
    %v3122 = vmul.f32 %v3007, %v3114
    %v3127 = vrot.slane %v3120, 7
    %v3128 = vrot.slane %v3121, 6
    %v3129 = vrot.slane %v3122, 5
    %v3130 = vsel %vm913, %v3119, %v3127
    %v3131 = vsel %vm915, %v3128, %v3129
    %v3132 = vsel %vm917, %v3130, %v3131
    %v3134 = vsub.f32 %v3109, %v3132
    %v3135 = vmul.f32 %v2665, %v3111
    %v3136 = vmul.f32 %v2769, %v3112
    %v3137 = vmul.f32 %v2873, %v3113
    %v3138 = vmul.f32 %v2977, %v3114
    %v3140 = vperm.slane %v3134, 0
    %v3141 = vperm.slane %v3134, 1
    %v3142 = vperm.slane %v3134, 2
    %v3143 = vperm.slane %v3134, 3
    %v3148 = vadd.f32 %v3135, %v3140
    %v3149 = vadd.f32 %v3136, %v3141
    %v3150 = vadd.f32 %v3137, %v3142
    %v3151 = vadd.f32 %v3138, %v3143
    %v3152 = vmax.f32 %v3148, 0.0
    %v3153 = vmax.f32 %v3149, 0.0
    %v3154 = vmax.f32 %v3150, 0.0
    %v3155 = vmax.f32 %v3151, 0.0
    %v3156 = vpack.c.bf16 %v3152, %v3152
    %v3157 = vpack.c.bf16 %v3153, %v3153
    %v3158 = vpack.c.bf16 %v3154, %v3154
    %v3159 = vpack.c.bf16 %v3155, %v3155
    %v3160 = vld [vmem:[#allocation6] sm:$0xf]
    %v3161 = vld [vmem:[#allocation6 + $0x4] sm:$0xf]
    %v3162 = vld [vmem:[#allocation6 + $0x8] sm:$0xf]
    %v3163 = vld [vmem:[#allocation6 + $0xc] sm:$0xf]
    %v3164 = vld [vmem:[#allocation6 + $0x10] sm:$0xf]
    %v3165 = vld [vmem:[#allocation6 + $0x14] sm:$0xf]
    %v3166 = vld [vmem:[#allocation6 + $0x18] sm:$0xf]
    %v3167 = vld [vmem:[#allocation6 + $0x1c] sm:$0xf]
    %v3168 = vld [vmem:[#allocation6 + $0x20] sm:$0xf]
    %v3169 = vld [vmem:[#allocation6 + $0x24] sm:$0xf]
    %v3170 = vld [vmem:[#allocation6 + $0x28] sm:$0xf]
    %v3171 = vld [vmem:[#allocation6 + $0x2c] sm:$0xf]
    %v3172 = vld [vmem:[#allocation6 + $0x30] sm:$0xf]
    %v3173 = vld [vmem:[#allocation6 + $0x34] sm:$0xf]
    %v3174 = vld [vmem:[#allocation6 + $0x38] sm:$0xf]
    %v3175 = vld [vmem:[#allocation6 + $0x3c] sm:$0xf]
    %v3176 = vld [vmem:[#allocation6 + $0x40] sm:$0xf]
    %v3177 = vld [vmem:[#allocation6 + $0x44] sm:$0xf]
    %v3178 = vld [vmem:[#allocation6 + $0x48] sm:$0xf]
    %v3179 = vld [vmem:[#allocation6 + $0x4c] sm:$0xf]
    %v3180 = vld [vmem:[#allocation6 + $0x50] sm:$0xf]
    %v3181 = vld [vmem:[#allocation6 + $0x54] sm:$0xf]
    %v3182 = vld [vmem:[#allocation6 + $0x58] sm:$0xf]
    %v3183 = vld [vmem:[#allocation6 + $0x5c] sm:$0xf]
    %v3184 = vld [vmem:[#allocation6 + $0x60] sm:$0xf]
    %v3185 = vld [vmem:[#allocation6 + $0x64] sm:$0xf]
    %v3186 = vld [vmem:[#allocation6 + $0x68] sm:$0xf]
    %v3187 = vld [vmem:[#allocation6 + $0x6c] sm:$0xf]
    %v3188 = vld [vmem:[#allocation6 + $0x70] sm:$0xf]
    %v3189 = vld [vmem:[#allocation6 + $0x74] sm:$0xf]
    %v3190 = vld [vmem:[#allocation6 + $0x78] sm:$0xf]
    %v3191 = vld [vmem:[#allocation6 + $0x7c] sm:$0xf]
    %v3192 = vld [vmem:[#allocation6 + $0x80] sm:$0xf]
    %v3193 = vld [vmem:[#allocation6 + $0x84] sm:$0xf]
    %v3194 = vld [vmem:[#allocation6 + $0x88] sm:$0xf]
    %v3195 = vld [vmem:[#allocation6 + $0x8c] sm:$0xf]
    %v3196 = vld [vmem:[#allocation6 + $0x90] sm:$0xf]
    %v3197 = vld [vmem:[#allocation6 + $0x94] sm:$0xf]
    %v3198 = vld [vmem:[#allocation6 + $0x98] sm:$0xf]
    %v3199 = vld [vmem:[#allocation6 + $0x9c] sm:$0xf]
    %v3200 = vld [vmem:[#allocation6 + $0xa0] sm:$0xf]
    %v3201 = vld [vmem:[#allocation6 + $0xa4] sm:$0xf]
    %v3202 = vld [vmem:[#allocation6 + $0xa8] sm:$0xf]
    %v3203 = vld [vmem:[#allocation6 + $0xac] sm:$0xf]
    %v3204 = vld [vmem:[#allocation6 + $0xb0] sm:$0xf]
    %v3205 = vld [vmem:[#allocation6 + $0xb4] sm:$0xf]
    %v3206 = vld [vmem:[#allocation6 + $0xb8] sm:$0xf]
    %v3207 = vld [vmem:[#allocation6 + $0xbc] sm:$0xf]
    %v3208 = vld [vmem:[#allocation6 + $0xc0] sm:$0xf]
    %v3209 = vld [vmem:[#allocation6 + $0xc4] sm:$0xf]
    %v3210 = vld [vmem:[#allocation6 + $0xc8] sm:$0xf]
    %v3211 = vld [vmem:[#allocation6 + $0xcc] sm:$0xf]
    %v3212 = vld [vmem:[#allocation6 + $0xd0] sm:$0xf]
    %v3213 = vld [vmem:[#allocation6 + $0xd4] sm:$0xf]
    %v3214 = vld [vmem:[#allocation6 + $0xd8] sm:$0xf]
    %v3215 = vld [vmem:[#allocation6 + $0xdc] sm:$0xf]
    %v3216 = vld [vmem:[#allocation6 + $0xe0] sm:$0xf]
    %v3217 = vld [vmem:[#allocation6 + $0xe4] sm:$0xf]
    %v3218 = vld [vmem:[#allocation6 + $0xe8] sm:$0xf]
    %v3219 = vld [vmem:[#allocation6 + $0xec] sm:$0xf]
    %v3220 = vld [vmem:[#allocation6 + $0xf0] sm:$0xf]
    %v3221 = vld [vmem:[#allocation6 + $0xf4] sm:$0xf]
    %v3222 = vld [vmem:[#allocation6 + $0xf8] sm:$0xf]
    %v3223 = vld [vmem:[#allocation6 + $0xfc] sm:$0xf]
    %v3288 = vunpack.c.l.b16 %v3160
    %v3289 = vunpack.c.l.b16 %v3161
    %v3290 = vunpack.c.l.b16 %v3162
    %v3291 = vunpack.c.l.b16 %v3163
    %v3292 = vunpack.c.l.b16 %v3164
    %v3293 = vunpack.c.l.b16 %v3165
    %v3294 = vunpack.c.l.b16 %v3166
    %v3295 = vunpack.c.l.b16 %v3167
    %v3296 = vunpack.c.l.b16 %v3168
    %v3297 = vunpack.c.l.b16 %v3169
    %v3298 = vunpack.c.l.b16 %v3170
    %v3299 = vunpack.c.l.b16 %v3171
    %v3300 = vunpack.c.l.b16 %v3172
    %v3301 = vunpack.c.l.b16 %v3173
    %v3302 = vunpack.c.l.b16 %v3174
    %v3303 = vunpack.c.l.b16 %v3175
    %v3304 = vunpack.c.l.b16 %v3176
    %v3305 = vunpack.c.l.b16 %v3177
    %v3306 = vunpack.c.l.b16 %v3178
    %v3307 = vunpack.c.l.b16 %v3179
    %v3308 = vunpack.c.l.b16 %v3180
    %v3309 = vunpack.c.l.b16 %v3181
    %v3310 = vunpack.c.l.b16 %v3182
    %v3311 = vunpack.c.l.b16 %v3183
    %v3312 = vunpack.c.l.b16 %v3184
    %v3313 = vunpack.c.l.b16 %v3185
    %v3314 = vunpack.c.l.b16 %v3186
    %v3315 = vunpack.c.l.b16 %v3187
    %v3316 = vunpack.c.l.b16 %v3188
    %v3317 = vunpack.c.l.b16 %v3189
    %v3318 = vunpack.c.l.b16 %v3190
    %v3319 = vunpack.c.l.b16 %v3191
    %v3320 = vunpack.c.l.b16 %v3192
    %v3321 = vunpack.c.l.b16 %v3193
    %v3322 = vunpack.c.l.b16 %v3194
    %v3323 = vunpack.c.l.b16 %v3195
    %v3324 = vunpack.c.l.b16 %v3196
    %v3325 = vunpack.c.l.b16 %v3197
    %v3326 = vunpack.c.l.b16 %v3198
    %v3327 = vunpack.c.l.b16 %v3199
    %v3328 = vunpack.c.l.b16 %v3200
    %v3329 = vunpack.c.l.b16 %v3201
    %v3330 = vunpack.c.l.b16 %v3202
    %v3331 = vunpack.c.l.b16 %v3203
    %v3332 = vunpack.c.l.b16 %v3204
    %v3333 = vunpack.c.l.b16 %v3205
    %v3334 = vunpack.c.l.b16 %v3206
    %v3335 = vunpack.c.l.b16 %v3207
    %v3336 = vunpack.c.l.b16 %v3208
    %v3337 = vunpack.c.l.b16 %v3209
    %v3338 = vunpack.c.l.b16 %v3210
    %v3339 = vunpack.c.l.b16 %v3211
    %v3340 = vunpack.c.l.b16 %v3212
    %v3341 = vunpack.c.l.b16 %v3213
    %v3342 = vunpack.c.l.b16 %v3214
    %v3343 = vunpack.c.l.b16 %v3215
    %v3344 = vunpack.c.l.b16 %v3216
    %v3345 = vunpack.c.l.b16 %v3217
    %v3346 = vunpack.c.l.b16 %v3218
    %v3347 = vunpack.c.l.b16 %v3219
    %v3348 = vunpack.c.l.b16 %v3220
    %v3349 = vunpack.c.l.b16 %v3221
    %v3350 = vunpack.c.l.b16 %v3222
    %v3351 = vunpack.c.l.b16 %v3223
    %v3352 = vpack.c.b16 %v3289, %v3288
    %v3353 = vpack.c.b16 %v3291, %v3290
    %v3354 = vpack.c.b16 %v3293, %v3292
    %v3355 = vpack.c.b16 %v3295, %v3294
    %v3356 = vpack.c.b16 %v3297, %v3296
    %v3357 = vpack.c.b16 %v3299, %v3298
    %v3358 = vpack.c.b16 %v3301, %v3300
    %v3359 = vpack.c.b16 %v3303, %v3302
    %v3360 = vpack.c.b16 %v3305, %v3304
    %v3361 = vpack.c.b16 %v3307, %v3306
    %v3362 = vpack.c.b16 %v3309, %v3308
    %v3363 = vpack.c.b16 %v3311, %v3310
    %v3364 = vpack.c.b16 %v3313, %v3312
    %v3365 = vpack.c.b16 %v3315, %v3314
    %v3366 = vpack.c.b16 %v3317, %v3316
    %v3367 = vpack.c.b16 %v3319, %v3318
    %v3368 = vpack.c.b16 %v3321, %v3320
    %v3369 = vpack.c.b16 %v3323, %v3322
    %v3370 = vpack.c.b16 %v3325, %v3324
    %v3371 = vpack.c.b16 %v3327, %v3326
    %v3372 = vpack.c.b16 %v3329, %v3328
    %v3373 = vpack.c.b16 %v3331, %v3330
    %v3374 = vpack.c.b16 %v3333, %v3332
    %v3375 = vpack.c.b16 %v3335, %v3334
    %v3376 = vpack.c.b16 %v3337, %v3336
    %v3377 = vpack.c.b16 %v3339, %v3338
    %v3378 = vpack.c.b16 %v3341, %v3340
    %v3379 = vpack.c.b16 %v3343, %v3342
    %v3380 = vpack.c.b16 %v3345, %v3344
    %v3381 = vpack.c.b16 %v3347, %v3346
    %v3382 = vpack.c.b16 %v3349, %v3348
    %v3383 = vpack.c.b16 %v3351, %v3350
    %3416 = vmatpush.bf16.msra.mxu0 %v3359
    %3417 = vmatpush.bf16.msra.mxu0 %v3358
    %3418 = vmatpush.bf16.msra.mxu0 %v3357
    %3419 = vmatpush.bf16.msra.mxu0 %v3356
    %3420 = vmatpush.bf16.msra.mxu0 %v3355
    %3421 = vmatpush.bf16.msra.mxu0 %v3354
    %3422 = vmatpush.bf16.msra.mxu0 %v3353
    %3423 = vmatpush.bf16.msra.mxu0 %v3352
    %3424 = vmatmul.bf16.gmra.mxu0 %v3156
    %v3425 = vpop.f32.mrf.mxu0
    %v3426 = vadd.f32 0.0, %v3425
    %v3427 = vpop.f32.mrf.mxu0
    %3428 = vdwg.mxu0
    %3429 = vmatpush.bf16.msra.mxu0 %v3367
    %3430 = vmatpush.bf16.msra.mxu0 %v3366
    %3431 = vmatpush.bf16.msra.mxu0 %v3365
    %3432 = vmatpush.bf16.msra.mxu0 %v3364
    %3433 = vmatpush.bf16.msra.mxu0 %v3363
    %3434 = vmatpush.bf16.msra.mxu0 %v3362
    %3435 = vmatpush.bf16.msra.mxu0 %v3361
    %3436 = vmatpush.bf16.msra.mxu0 %v3360
    %3437 = vmatmul.bf16.gmra.mxu0 %v3157
    %v3438 = vpop.f32.mrf.mxu0
    %v3439 = vadd.f32 %v3426, %v3438
    %v3440 = vpop.f32.mrf.mxu0
    %3441 = vdwg.mxu0
    %3442 = vmatpush.bf16.msra.mxu0 %v3375
    %3443 = vmatpush.bf16.msra.mxu0 %v3374
    %3444 = vmatpush.bf16.msra.mxu0 %v3373
    %3445 = vmatpush.bf16.msra.mxu0 %v3372
    %3446 = vmatpush.bf16.msra.mxu0 %v3371
    %3447 = vmatpush.bf16.msra.mxu0 %v3370
    %3448 = vmatpush.bf16.msra.mxu0 %v3369
    %3449 = vmatpush.bf16.msra.mxu0 %v3368
    %3450 = vmatmul.bf16.gmra.mxu0 %v3158
    %v3451 = vpop.f32.mrf.mxu0
    %v3452 = vadd.f32 %v3439, %v3451
    %v3453 = vpop.f32.mrf.mxu0
    %3454 = vdwg.mxu0
    %3455 = vmatpush.bf16.msra.mxu0 %v3383
    %3456 = vmatpush.bf16.msra.mxu0 %v3382
    %3457 = vmatpush.bf16.msra.mxu0 %v3381
    %3458 = vmatpush.bf16.msra.mxu0 %v3380
    %3459 = vmatpush.bf16.msra.mxu0 %v3379
    %3460 = vmatpush.bf16.msra.mxu0 %v3378
    %3461 = vmatpush.bf16.msra.mxu0 %v3377
    %3462 = vmatpush.bf16.msra.mxu0 %v3376
    %3463 = vmatmul.bf16.gmra.mxu0 %v3159
    %v3464 = vpop.f32.mrf.mxu0
    %v3465 = vadd.f32 %v3452, %v3464
    %v3466 = vpop.f32.mrf.mxu0
    %3467 = vdwg.mxu0
    %v3468 = vrot.slane %v3465, 4
    %v3469 = vadd.f32 %v3465, %v3468
    %v3470 = vrot.slane %v3469, 2
    %v3471 = vadd.f32 %v3469, %v3470
    %v3472 = vrot.slane %v3471, 1
    %v3473 = vadd.f32 %v3471, %v3472
    %v3474 = vmul.f32 %v3473, 0.125
    %v3475 = vmul.f32 %v3465, %v3465
    %v3476 = vrot.slane %v3475, 4
    %v3477 = vadd.f32 %v3475, %v3476
    %v3478 = vrot.slane %v3477, 2
    %v3479 = vadd.f32 %v3477, %v3478
    %v3480 = vrot.slane %v3479, 1
    %v3481 = vadd.f32 %v3479, %v3480
    %v3482 = vmul.f32 %v3481, 0.125
    %v3483 = vmul.f32 %v3474, %v3474
    %v3484 = vsub.f32 %v3482, %v3483
    %v3485 = vmax.f32 %v3484, 0.0
    %v3486 = vld [vmem:[%s11] sm:$0x1]
    %v3487 = vadd.f32 %v3485, 1e-05
    %v3488 = vrsqrt.pop %v3487
    %v3489 = vmul.f32 %v3488, %v3487
    %v3490 = vmul.f32 %v3489, %v3488
    %v3491 = vmul.f32 0.5, %v3490
    %v3492 = vsub.f32 1.5, %v3491
    %v3493 = vmul.f32 %v3488, %v3492
    %vm3494 = vweird.f32 %v3487
    %vm3495 = vweird.f32 %v3488
    %vm3496 = vmor %vm3494, %vm3495
    %v3497 = vsel %vm3496, %v3488, %v3493
    %v3498 = vmul.f32 %v3486, %v3497
    %v3499 = vld [vmem:[%s12] sm:$0x1]
    %v3500 = vmul.f32 %v3474, %v3498
    %v3501 = vsub.f32 %v3499, %v3500
    %v3503 = vperm.slane %v3498, 0
    %v3505 = vmul.f32 %v3465, %v3503
    %v3507 = vperm.slane %v3501, 0
    %v3509 = vadd.f32 %v3505, %v3507
    %v3510 = vmax.f32 %v3509, 0.0
    %v3511 = vpack.c.bf16 %v3510, %v3510
    %v3512 = vld [vmem:[%s13] sm:$0xf]
    %v3513 = vld [vmem:[%s13 + $0x4] sm:$0xf]
    %v3514 = vld [vmem:[%s13 + $0x8] sm:$0xf]
    %v3515 = vld [vmem:[%s13 + $0xc] sm:$0xf]
    %v3516 = vld [vmem:[%s13 + $0x10] sm:$0xf]
    %v3517 = vld [vmem:[%s13 + $0x14] sm:$0xf]
    %v3518 = vld [vmem:[%s13 + $0x18] sm:$0xf]
    %v3519 = vld [vmem:[%s13 + $0x1c] sm:$0xf]
    %v3520 = vld [vmem:[%s13 + $0x20] sm:$0xf]
    %v3521 = vld [vmem:[%s13 + $0x24] sm:$0xf]
    %v3522 = vld [vmem:[%s13 + $0x28] sm:$0xf]
    %v3523 = vld [vmem:[%s13 + $0x2c] sm:$0xf]
    %v3524 = vld [vmem:[%s13 + $0x30] sm:$0xf]
    %v3525 = vld [vmem:[%s13 + $0x34] sm:$0xf]
    %v3526 = vld [vmem:[%s13 + $0x38] sm:$0xf]
    %v3527 = vld [vmem:[%s13 + $0x3c] sm:$0xf]
    %v3544 = vunpack.c.l.b16 %v3512
    %v3545 = vunpack.c.l.b16 %v3513
    %v3546 = vunpack.c.l.b16 %v3514
    %v3547 = vunpack.c.l.b16 %v3515
    %v3548 = vunpack.c.l.b16 %v3516
    %v3549 = vunpack.c.l.b16 %v3517
    %v3550 = vunpack.c.l.b16 %v3518
    %v3551 = vunpack.c.l.b16 %v3519
    %v3552 = vunpack.c.l.b16 %v3520
    %v3553 = vunpack.c.l.b16 %v3521
    %v3554 = vunpack.c.l.b16 %v3522
    %v3555 = vunpack.c.l.b16 %v3523
    %v3556 = vunpack.c.l.b16 %v3524
    %v3557 = vunpack.c.l.b16 %v3525
    %v3558 = vunpack.c.l.b16 %v3526
    %v3559 = vunpack.c.l.b16 %v3527
    %v3560 = vpack.c.b16 %v3545, %v3544
    %v3561 = vpack.c.b16 %v3547, %v3546
    %v3562 = vpack.c.b16 %v3549, %v3548
    %v3563 = vpack.c.b16 %v3551, %v3550
    %v3564 = vpack.c.b16 %v3553, %v3552
    %v3565 = vpack.c.b16 %v3555, %v3554
    %v3566 = vpack.c.b16 %v3557, %v3556
    %v3567 = vpack.c.b16 %v3559, %v3558
    %3576 = vmatpush.bf16.msra.mxu0 %v3567
    %3577 = vmatpush.bf16.msra.mxu0 %v3566
    %3578 = vmatpush.bf16.msra.mxu0 %v3565
    %3579 = vmatpush.bf16.msra.mxu0 %v3564
    %3580 = vmatpush.bf16.msra.mxu0 %v3563
    %3581 = vmatpush.bf16.msra.mxu0 %v3562
    %3582 = vmatpush.bf16.msra.mxu0 %v3561
    %3583 = vmatpush.bf16.msra.mxu0 %v3560
    %3584 = vmatmul.bf16.gmra.mxu0 %v3511
    %v3585 = vpop.f32.mrf.mxu0
    %v3586 = vadd.f32 0.0, %v3585
    %v3587 = vpop.f32.mrf.mxu0
    %3588 = vdwg.mxu0
    %vm3589 = vcmask 523264
    %v3590 = vsel %vm3589, %v3586, 0.0
    %v3591 = vrot.slane %v3590, 4
    %v3592 = vadd.f32 %v3590, %v3591
    %v3593 = vrot.slane %v3592, 2
    %v3594 = vadd.f32 %v3592, %v3593
    %v3595 = vrot.slane %v3594, 1
    %v3596 = vadd.f32 %v3594, %v3595
    %v3597 = vmul.f32 %v3596, 0.125
    %v3598 = vmul.f32 %v3586, %v3586
    %v3599 = vsel %vm3589, %v3598, 0.0
    %v3600 = vrot.slane %v3599, 4
    %v3601 = vadd.f32 %v3599, %v3600
    %v3602 = vrot.slane %v3601, 2
    %v3603 = vadd.f32 %v3601, %v3602
    %v3604 = vrot.slane %v3603, 1
    %v3605 = vadd.f32 %v3603, %v3604
    %v3606 = vmul.f32 %v3605, 0.125
    %v3607 = vmul.f32 %v3597, %v3597
    %v3608 = vsub.f32 %v3606, %v3607
    %v3609 = vmax.f32 %v3608, 0.0
    %v3610 = vld [vmem:[%s14] sm:$0x1]
    %v3611 = vadd.f32 %v3609, 1e-05
    %v3612 = vrsqrt.pop %v3611
    %v3613 = vmul.f32 %v3612, %v3611
    %v3614 = vmul.f32 %v3613, %v3612
    %v3615 = vmul.f32 0.5, %v3614
    %v3616 = vsub.f32 1.5, %v3615
    %v3617 = vmul.f32 %v3612, %v3616
    %vm3618 = vweird.f32 %v3611
    %vm3619 = vweird.f32 %v3612
    %vm3620 = vmor %vm3618, %vm3619
    %v3621 = vsel %vm3620, %v3612, %v3617
    %v3622 = vmul.f32 %v3610, %v3621
    %v3623 = vld [vmem:[%s15] sm:$0x1]
    %v3624 = vmul.f32 %v3597, %v3622
    %v3625 = vsub.f32 %v3623, %v3624
    %v3627 = vperm.slane %v3622, 0
    %v3629 = vmul.f32 %v3586, %v3627
    %v3631 = vperm.slane %v3625, 0
    %v3633 = vadd.f32 %v3629, %v3631
    %v3634 = vmax.f32 %v3633, 0.0
    %v3635 = vpack.c.bf16 %v3634, %v3634
    %v3636 = vld [vmem:[%s16] sm:$0xf]
    %v3637 = vld [vmem:[%s16 + $0x4] sm:$0xf]
    %v3638 = vld [vmem:[%s16 + $0x8] sm:$0xf]
    %v3639 = vld [vmem:[%s16 + $0xc] sm:$0xf]
    %v3640 = vld [vmem:[%s16 + $0x10] sm:$0xf]
    %v3641 = vld [vmem:[%s16 + $0x14] sm:$0xf]
    %v3642 = vld [vmem:[%s16 + $0x18] sm:$0xf]
    %v3643 = vld [vmem:[%s16 + $0x1c] sm:$0xf]
    %v3644 = vld [vmem:[%s17] sm:$0x1]
    %v3646 = vperm.slane %v3644, 0
    %v3656 = vunpack.c.l.b16 %v3636
    %v3657 = vunpack.c.l.b16 %v3637
    %v3658 = vunpack.c.l.b16 %v3638
    %v3659 = vunpack.c.l.b16 %v3639
    %v3660 = vunpack.c.l.b16 %v3640
    %v3661 = vunpack.c.l.b16 %v3641
    %v3662 = vunpack.c.l.b16 %v3642
    %v3663 = vunpack.c.l.b16 %v3643
    %v3664 = vpack.c.b16 %v3657, %v3656
    %v3665 = vpack.c.b16 %v3659, %v3658
    %v3666 = vpack.c.b16 %v3661, %v3660
    %v3667 = vpack.c.b16 %v3663, %v3662
    %v3673 = vsel %vm3589, %v3635, 0
    %3675 = vmatpush.bf16.msra.mxu0 0
    %3676 = vmatpush.bf16.msra.mxu0 0
    %3677 = vmatpush.bf16.msra.mxu0 0
    %3678 = vmatpush.bf16.msra.mxu0 0
    %3679 = vmatpush.bf16.msra.mxu0 %v3667
    %3680 = vmatpush.bf16.msra.mxu0 %v3666
    %3681 = vmatpush.bf16.msra.mxu0 %v3665
    %3682 = vmatpush.bf16.msra.mxu0 %v3664
    %3683 = vmatmul.bf16.gmra.mxu0 %v3673
    %v3684 = vpop.f32.mrf.mxu0
    %v3685 = vadd.f32 %v3646, %v3684
    %v3686 = vpop.f32.mrf.mxu0
    %3687 = vdwg.mxu0
    %v3688 = vpack.c.bf16 %v3685, %v3685
    %3689 = vst [vmem:[%s18] sm:$0xf] %v3688
    // Predicated region
    $region86: #{model_forward.1} parent=1 // pred_check
      _
    $region87: #{model_forward.1} parent=1 // pred_check_branch
      %3691 = sbr.rel (0) target = $region89
    $region88: #{model_forward.1} parent=1 // pred_region
      _
    $region89: #{model_forward.1} parent=1 // pred_fallthru
      _
    // Predicated region
    $region90: #{model_forward.1} parent=1 // pred_check
      _
    $region91: #{model_forward.1} parent=1 // pred_check_branch
      %3693 = sbr.rel (0) target = $region93
    $region92: #{model_forward.1} parent=1 // pred_region
      _
    $region93: #{model_forward.1} parent=1 // pred_fallthru
      _
    %3694 = vsyncpa [#allocation3], 1
    %3695 = vsyncpa [#allocation5], 1

</llo_original>
